<compile_context>
chip_gen: v7x
topology: tpu7x:2x2x1
jax: 0.10.0
libtpu: 0.0.40
codegen_flags: <defaults>
</compile_context>

<pallas_src>
import math

import jax
import jax.numpy as jnp
import numpy as np
from jax.experimental import pallas as pl
from jax.experimental.pallas import tpu as pltpu

C_IN = 16                     # pair-rep channel dim
C_HIDDEN = 8                  # per-head hidden dim (OpenFold Attention convention)
NO_HEADS = 4
HC = C_HIDDEN * NO_HEADS      # 32
QKVG = 4 * HC                 # 128 packed projection lanes (fully lane-dense)
EPS = 1e-5
INF = 1e9
PREC_HI = jax.lax.Precision.HIGHEST   # tiny C=16 / HC=32 projections
PREC_MM = jax.lax.Precision.DEFAULT   # O(N^3) QK^T / PV einsums (validated @1e-3)


def _layer_norm(x, gamma, beta):
    mean = jnp.mean(x, axis=-1, keepdims=True)
    var = jnp.mean((x - mean) ** 2, axis=-1, keepdims=True)
    return (x - mean) / jnp.sqrt(var + EPS) * gamma + beta


# --------------------- Kernel A: LayerNorm + triangle bias (tb only) ---------------------
def tri_bias_kernel(x_ref, gamma_ref, beta_ref, wtri_ref, tb_ref):
    _, TI, J, C = x_ref.shape
    xn = _layer_norm(x_ref[0].reshape(TI * J, C), gamma_ref[0], beta_ref[0])
    # One [M,C]@[C,H] MXU matmul, then a single narrow relayout straight into the
    # lane-dense [H, TI, J] output block (HBM layout is already [B, H, I, J]).
    tbm = jnp.dot(xn, wtri_ref[...], precision=PREC_HI,
                  preferred_element_type=jnp.float32)                 # [M, H]
    tb_ref[0] = tbm.T.reshape(NO_HEADS, TI, J)


# --------------- Kernel B: gated multi-head attention over the J axis ---------------
def attn_kernel(x_ref, tb_ref, mask_ref, gamma_ref, beta_ref, wqkvg_ref,
                bg_ref, wo_ref, bo_ref, out_ref):
    _, TI, J, C = x_ref.shape
    M = TI * J
    ch = C_HIDDEN

    # LayerNorm recomputed inline from raw x (no xn HBM round trip).
    xn = _layer_norm(x_ref[0].reshape(M, C), gamma_ref[0], beta_ref[0])

    # One packed projection: [M,16] @ [16,128] -> Q|K|V|G (lane-dense N=128).
    # The 1/sqrt(ch) query scale is already folded into the Wq columns.
    qkvg = jnp.dot(xn, wqkvg_ref[...], precision=PREC_HI,
                   preferred_element_type=jnp.float32)
    q = qkvg[:, 0 * HC:1 * HC]
    k = qkvg[:, 1 * HC:2 * HC]
    v = qkvg[:, 2 * HC:3 * HC]
    g = jax.nn.sigmoid(qkvg[:, 3 * HC:4 * HC] + bg_ref[0])

    # Key-wise mask bias on the VPU (no precomputed HBM array).
    mb = (INF * (mask_ref[0] - 1.0))[:, None, :]                      # [TI, 1, J]
    wo = wo_ref[...]                                                  # [HC, C]

    # TODO(synk): measure a (TI,H)-batched dot_general against this 4-head loop.
    out_acc = jnp.zeros((M, C), jnp.float32)
    for h in range(NO_HEADS):
        sl = slice(h * ch, (h + 1) * ch)
        qh = q[:, sl].reshape(TI, J, ch)
        kh = k[:, sl].reshape(TI, J, ch)
        vh = v[:, sl].reshape(TI, J, ch)
        s = jnp.einsum("tqc,tkc->tqk", qh, kh, precision=PREC_MM,
                       preferred_element_type=jnp.float32)            # [TI, Jq, Jk]
        s = s + mb + tb_ref[0, h][None, :, :]                         # tb[h] is [I, J] == [Jq, Jk]
        s = s - jnp.max(s, axis=-1, keepdims=True)
        p = jnp.exp(s)
        p = p * pl.reciprocal(jnp.sum(p, axis=-1, keepdims=True), approx=True)
        oh = jnp.einsum("tqk,tkc->tqc", p, vh, precision=PREC_MM,
                        preferred_element_type=jnp.float32)           # [TI, J, ch]
        # Gate + project this head straight into the [M, C] accumulator
        # (no lane-offset scratch stores, no final [M,32]@[32,16] matmul).
        ohg = oh.reshape(M, ch) * g[:, sl]
        out_acc = out_acc + jnp.dot(ohg, wo[sl, :], precision=PREC_HI,
                                    preferred_element_type=jnp.float32)
    out_ref[0] = (out_acc + bo_ref[0]).reshape(TI, J, C)


# ------------------------------------ VMEM budgeting ------------------------------------
def _pad_tile_bytes(shape, itemsize=4):
    """Physical VMEM bytes of an f32 block after (8,128) padding of the last two dims."""
    s = list(shape)
    s[-1] = -(-s[-1] // 128) * 128
    if len(s) >= 2:
        s[-2] = -(-s[-2] // 8) * 8
    n = 1
    for d in s:
        n *= d
    return n * itemsize


def _vmem_capacity_bytes():
    try:
        return int(pltpu.get_tpu_info().vmem_capacity_bytes)   # 128 MiB v5e/v6e, 64 MiB v7x
    except Exception:                                           # pragma: no cover
        return 64 << 20                                         # conservative fallback


def _bias_step_bytes(TI, J, I):
    M = TI * J
    blocks = (2 * _pad_tile_bytes((1, TI, J, C_IN))             # x in (2 buffers)
              + 2 * _pad_tile_bytes((1, NO_HEADS, TI, J))       # tb out (2 buffers)
              + 2 * (2 * _pad_tile_bytes((1, C_IN)) + _pad_tile_bytes((C_IN, NO_HEADS))))
    temps = (3 * _pad_tile_bytes((M, C_IN))                     # x copy / xn / tbm (lane-padded)
             + _pad_tile_bytes((NO_HEADS, M))                   # transposed tbm
             + _pad_tile_bytes((NO_HEADS, TI, J)))
    return blocks + temps


def _attn_step_bytes(TI, J, I, tb_bufs=2):
    M = TI * J
    blocks = (2 * _pad_tile_bytes((1, TI, J, C_IN))             # x
              + 2 * _pad_tile_bytes((1, TI, J, C_IN))           # out
              + 2 * _pad_tile_bytes((1, TI, J))                 # mask
              + tb_bufs * _pad_tile_bytes((1, NO_HEADS, I, J))  # tb (resident per batch)
              + 2 * (_pad_tile_bytes((C_IN, QKVG)) + _pad_tile_bytes((HC, C_IN))
                     + 3 * _pad_tile_bytes((1, C_IN)) + _pad_tile_bytes((1, HC))))
    temps = (6 * _pad_tile_bytes((M, QKVG))                     # xn/qkvg/q/k/v/g (128-lane padded)
             + 3 * _pad_tile_bytes((TI, J, J))                  # s, p, max/sum temporaries
             + 2 * _pad_tile_bytes((TI, J, C_HIDDEN))           # oh, gated oh
             + 2 * _pad_tile_bytes((M, C_IN)))                  # out_acc + head contribution
    return blocks + temps


def _vmem_limit(step_bytes, cap):
    # Headroom for compiler temporaries, clamped below physical capacity.
    return int(min(max(2 * step_bytes, 32 << 20), cap - (4 << 20)))


def _pick_row_block(I, J, budget_bytes):
    # Last-two dims (TI, J) of the mask / tb-out blocks obey the (8,128) rule:
    # TI % 8 == 0 or TI == I. Pick the largest legal TI that fits the budget.
    cands = sorted({I} | {t for t in range(8, I + 1, 8) if I % t == 0}, reverse=True)
    for ti in cands:
        if max(_attn_step_bytes(ti, J, I), _bias_step_bytes(ti, J, I)) <= budget_bytes:
            return ti
    return cands[-1]      # TODO(synk): pad/mask rows when even this busts the budget


def _grid_and_maps(B, nblk):
    # Batch-major 2-D grid when B is even so a 2-TensorCore "parallel" split never
    # lands mid-batch (tb fetched exactly once per owned batch element); flattened
    # 1-D grid otherwise so both cores still split the row blocks of a single batch.
    if B % 2 == 0:
        grid = (B, nblk)
        sem = ("parallel", "arbitrary")
        wrap = lambda f: (lambda b, n: f(b, n))
    else:
        grid = (B * nblk,)
        sem = ("parallel",)
        wrap = lambda f: (lambda s: f(s // nblk, s % nblk))
    return grid, sem, wrap


# --------------------------------------- wrapper ---------------------------------------
def triangle_attention_pallas(x, mask, params, starting=True):
    if mask is None:
        mask = jnp.ones(x.shape[:-1], dtype=x.dtype)
    if not starting:
        x = jnp.swapaxes(x, -2, -3)
        mask = jnp.swapaxes(mask, -1, -2)
    x = x.astype(jnp.float32)
    mask = mask.astype(jnp.float32)
    B, I, J, C = x.shape
    assert I == J, "triangle-bias reuse across rows requires a square pair rep (I == J)"
    assert C == C_IN
    H = NO_HEADS

    cap = _vmem_capacity_bytes()
    TI = _pick_row_block(I, J, cap - (16 << 20))
    nblk = I // TI
    grid, sem, wrap = _grid_and_maps(B, nblk)

    gamma = params["gamma"].reshape(1, C)
    beta = params["beta"].reshape(1, C)
    wtri = params["wtri"]                                                  # [C, H]
    # Packed Q|K|V|G projection; 1/sqrt(c_hidden) folded into the Wq columns.
    wqkvg = jnp.concatenate(
        [params["wq"] * (1.0 / math.sqrt(C_HIDDEN)),
         params["wk"], params["wv"], params["wg"]], axis=1)                # [C, 128]
    bg = params["bg"].reshape(1, HC)
    bo = params["bo"].reshape(1, C)

    row4 = wrap(lambda b, n: (b, n, 0, 0))
    row3 = wrap(lambda b, n: (b, n, 0))
    tb_out = wrap(lambda b, n: (b, 0, n, 0))
    tb_in = wrap(lambda b, n: (b, 0, 0, 0))
    const2 = wrap(lambda b, n: (0, 0))
    f32 = jnp.float32

    tb = pl.pallas_call(
        tri_bias_kernel,
        out_shape=jax.ShapeDtypeStruct((B, H, I, J), f32),
        grid_spec=pltpu.PrefetchScalarGridSpec(
            num_scalar_prefetch=0,
            grid=grid,
            in_specs=[
                pl.BlockSpec((1, TI, J, C), row4),              # x rows
                pl.BlockSpec((1, C), const2),                   # gamma
                pl.BlockSpec((1, C), const2),                   # beta
                pl.BlockSpec((C, H), const2),                   # wtri
            ],
            out_specs=pl.BlockSpec((1, H, TI, J), tb_out),
        ),
        compiler_params=pltpu.CompilerParams(
            dimension_semantics=sem,
            vmem_limit_bytes=_vmem_limit(_bias_step_bytes(TI, J, I), cap)),
    )(x, gamma, beta, wtri)

    # tb's block index changes only once per batch element; single-buffer it once
    # the saved buffer is big enough to matter (most relevant on v7x's 64 MiB VMEM).
    tb_bufs = 1 if H * I * J * 4 >= (4 << 20) else 2
    tb_kwargs = {} if tb_bufs == 2 else {"pipeline_mode": pl.Buffered(1)}

    out = pl.pallas_call(
        attn_kernel,
        out_shape=jax.ShapeDtypeStruct((B, I, J, C), f32),
        grid_spec=pltpu.PrefetchScalarGridSpec(
            num_scalar_prefetch=0,
            grid=grid,
            in_specs=[
                pl.BlockSpec((1, TI, J, C), row4),                  # x rows
                pl.BlockSpec((1, H, I, J), tb_in, **tb_kwargs),     # tb (held per batch)
                pl.BlockSpec((1, TI, J), row3),                     # mask rows
                pl.BlockSpec((1, C), const2),                       # gamma
                pl.BlockSpec((1, C), const2),                       # beta
                pl.BlockSpec((C, QKVG), const2),                    # packed Wq|Wk|Wv|Wg
                pl.BlockSpec((1, HC), const2),                      # bg
                pl.BlockSpec((HC, C), const2),                      # wo
                pl.BlockSpec((1, C), const2),                       # bo
            ],
            out_specs=pl.BlockSpec((1, TI, J, C), row4),
        ),
        compiler_params=pltpu.CompilerParams(
            dimension_semantics=sem,
            vmem_limit_bytes=_vmem_limit(_attn_step_bytes(TI, J, I, tb_bufs), cap)),
    )(x, tb, mask, gamma, beta, wqkvg, bg, params["wo"], bo)

    if not starting:
        out = jnp.swapaxes(out, -2, -3)
    return out


# ---------------------------- pure-JAX reference (torch semantics) ----------------------------
def triangle_attention_ref(x, mask, p, starting=True):
    if not starting:
        x = jnp.swapaxes(x, -2, -3)
        mask = jnp.swapaxes(mask, -1, -2)
    mean = jnp.mean(x, -1, keepdims=True)
    var = jnp.mean((x - mean) ** 2, -1, keepdims=True)
    xn = (x - mean) / jnp.sqrt(var + EPS) * p["gamma"] + p["beta"]
    B, I, J, C = xn.shape
    H, ch = NO_HEADS, C_HIDDEN
    hi = jax.lax.Precision.HIGHEST

    mask_bias = (INF * (mask - 1.0))[..., :, None, None, :]                       # [B, I, 1, 1, J]
    tb = jnp.einsum("bijh->bhij", jnp.dot(xn, p["wtri"], precision=hi))[:, None]  # [B, 1, H, I, J]

    q = (jnp.dot(xn, p["wq"], precision=hi)).reshape(B, I, J, H, ch) / math.sqrt(ch)
    k = (jnp.dot(xn, p["wk"], precision=hi)).reshape(B, I, J, H, ch)
    v = (jnp.dot(xn, p["wv"], precision=hi)).reshape(B, I, J, H, ch)
    a = jnp.einsum("biqhc,bikhc->bihqk", q, k, precision=hi)
    a = a + mask_bias + tb
    a = jax.nn.softmax(a, axis=-1)
    o = jnp.einsum("bihqk,bikhc->biqhc", a, v, precision=hi)
    g = jax.nn.sigmoid(jnp.dot(xn, p["wg"], precision=hi) + p["bg"]).reshape(B, I, J, H, ch)
    o = (o * g).reshape(B, I, J, H * ch)
    out = jnp.dot(o, p["wo"], precision=hi) + p["bo"]
    if not starting:
        out = jnp.swapaxes(out, -2, -3)
    return out


def init_params(key):
    ks = jax.random.split(key, 10)
    s = 0.1
    return {
        "gamma": 1.0 + s * jax.random.normal(ks[0], (C_IN,), jnp.float32),
        "beta": s * jax.random.normal(ks[1], (C_IN,), jnp.float32),
        "wtri": s * jax.random.normal(ks[2], (C_IN, NO_HEADS), jnp.float32),
        "wq": s * jax.random.normal(ks[3], (C_IN, HC), jnp.float32),
        "wk": s * jax.random.normal(ks[4], (C_IN, HC), jnp.float32),
        "wv": s * jax.random.normal(ks[5], (C_IN, HC), jnp.float32),
        "wg": s * jax.random.normal(ks[6], (C_IN, HC), jnp.float32),
        "bg": s * jax.random.normal(ks[7], (HC,), jnp.float32),
        "wo": s * jax.random.normal(ks[8], (HC, C_IN), jnp.float32),
        "bo": s * jax.random.normal(ks[9], (C_IN,), jnp.float32),
    }


if __name__ == "__main__":
    key = jax.random.PRNGKey(0)
    kx, kp = jax.random.split(key, 2)
    B, N = 2, 16
    x = jax.random.normal(kx, (B, N, N, C_IN), jnp.float32)
    # mask with some zeros but no fully-masked row/column under either transpose
    ii = jnp.arange(N)[:, None]
    jj = jnp.arange(N)[None, :]
    mask2d = jnp.where((ii >= N - 2) & (jj >= N - 2), 0.0, 1.0)
    mask = jnp.broadcast_to(mask2d, (B, N, N)).astype(jnp.float32)
    params = init_params(kp)

    for starting in (True, False):
        out = jax.block_until_ready(
            triangle_attention_pallas(x, mask, params, starting=starting))
        ref = triangle_attention_ref(x, mask, params, starting=starting)
        np.testing.assert_allclose(np.asarray(out), np.asarray(ref),
                                   rtol=1e-3, atol=1e-3)
    print("KERNEL_OK")
</pallas_src>

<mosaic_0001>
module attributes {stable_mosaic.version = 11 : i64} {
  func.func @tri_bias_kernel(%arg0: i32, %arg1: i32, %arg2: memref<1x16x16x16xf32, #tpu.memory_space<vmem>>, %arg3: memref<1x16xf32, #tpu.memory_space<vmem>>, %arg4: memref<1x16xf32, #tpu.memory_space<vmem>>, %arg5: memref<16x4xf32, #tpu.memory_space<vmem>>, %arg6: memref<1x4x16x16xf32, #tpu.memory_space<vmem>>) attributes {dimension_semantics = [#tpu.dimension_semantics<parallel>, #tpu.dimension_semantics<arbitrary>], iteration_bounds = array<i64: 2, 1>, scalar_prefetch = 0 : i64, scratch_operands = 0 : i64, tpu.core_type = #tpu.core_type<tc>, window_params = [{transform_indices = @transform_0, window_bounds = array<i64: 1, 16, 16, 16>}, {pipeline_mode = #tpu.pipeline_mode<synchronous>, transform_indices = @transform_1, window_bounds = array<i64: 1, 16>}, {pipeline_mode = #tpu.pipeline_mode<synchronous>, transform_indices = @transform_2, window_bounds = array<i64: 1, 16>}, {pipeline_mode = #tpu.pipeline_mode<synchronous>, transform_indices = @transform_3, window_bounds = array<i64: 16, 4>}, {transform_indices = @transform_4, window_bounds = array<i64: 1, 4, 16, 16>}]} {
    %c0 = arith.constant 0 : index
    %c0_0 = arith.constant 0 : index
    %c0_1 = arith.constant 0 : index
    %c0_2 = arith.constant 0 : index
    %0 = vector.load %arg2[%c0, %c0_0, %c0_1, %c0_2] : memref<1x16x16x16xf32, #tpu.memory_space<vmem>>, vector<1x16x16x16xf32>
    %1 = vector.shape_cast %0 : vector<1x16x16x16xf32> to vector<16x16x16xf32>
    %2 = vector.shape_cast %1 : vector<16x16x16xf32> to vector<256x16xf32>
    %c0_3 = arith.constant 0 : index
    %c0_4 = arith.constant 0 : index
    %3 = vector.load %arg3[%c0_3, %c0_4] : memref<1x16xf32, #tpu.memory_space<vmem>>, vector<1x16xf32>
    %4 = vector.shape_cast %3 : vector<1x16xf32> to vector<16xf32>
    %c0_5 = arith.constant 0 : index
    %c0_6 = arith.constant 0 : index
    %5 = vector.load %arg4[%c0_5, %c0_6] : memref<1x16xf32, #tpu.memory_space<vmem>>, vector<1x16xf32>
    %6 = vector.shape_cast %5 : vector<1x16xf32> to vector<16xf32>
    %cst = arith.constant dense<0.000000e+00> : vector<256xf32>
    %7 = vector.multi_reduction <add>, %2, %cst [1] : vector<256x16xf32> to vector<256xf32>
    %8 = vector.shape_cast %7 : vector<256xf32> to vector<256x1xf32>
    %cst_7 = arith.constant 1.600000e+01 : f32
    %9 = vector.broadcast %cst_7 : f32 to vector<256x1xf32>
    %10 = arith.divf %8, %9 : vector<256x1xf32>
    %11 = vector.broadcast %10 : vector<256x1xf32> to vector<256x16xf32>
    %12 = arith.subf %2, %11 : vector<256x16xf32>
    %13 = arith.mulf %12, %12 : vector<256x16xf32>
    %cst_8 = arith.constant dense<0.000000e+00> : vector<256xf32>
    %14 = vector.multi_reduction <add>, %13, %cst_8 [1] : vector<256x16xf32> to vector<256xf32>
    %15 = vector.shape_cast %14 : vector<256xf32> to vector<256x1xf32>
    %cst_9 = arith.constant 1.600000e+01 : f32
    %16 = vector.broadcast %cst_9 : f32 to vector<256x1xf32>
    %17 = arith.divf %15, %16 : vector<256x1xf32>
    %18 = vector.broadcast %10 : vector<256x1xf32> to vector<256x16xf32>
    %19 = arith.subf %2, %18 : vector<256x16xf32>
    %cst_10 = arith.constant 9.99999974E-6 : f32
    %20 = vector.broadcast %cst_10 : f32 to vector<256x1xf32>
    %21 = arith.addf %17, %20 : vector<256x1xf32>
    %22 = math.sqrt %21 : vector<256x1xf32>
    %23 = vector.broadcast %22 : vector<256x1xf32> to vector<256x16xf32>
    %24 = arith.divf %19, %23 : vector<256x16xf32>
    %25 = vector.shape_cast %4 : vector<16xf32> to vector<1x16xf32>
    %26 = vector.broadcast %25 : vector<1x16xf32> to vector<256x16xf32>
    %27 = arith.mulf %24, %26 : vector<256x16xf32>
    %28 = vector.shape_cast %6 : vector<16xf32> to vector<1x16xf32>
    %29 = vector.broadcast %28 : vector<1x16xf32> to vector<256x16xf32>
    %30 = arith.addf %27, %29 : vector<256x16xf32>
    %c0_11 = arith.constant 0 : index
    %c0_12 = arith.constant 0 : index
    %31 = vector.load %arg5[%c0_11, %c0_12] : memref<16x4xf32, #tpu.memory_space<vmem>>, vector<16x4xf32>
    %cst_13 = arith.constant dense<0.000000e+00> : vector<256x4xf32>
    %32 = tpu.matmul %30, %31, %cst_13 {dimension_numbers = #tpu.dot_dimension_numbers<[1], [0], [0], [1], [0, 0, 1, 1], [], []>, precision = #tpu.contract_precision<fp32>} : vector<256x16xf32>, vector<16x4xf32>, vector<256x4xf32> -> vector<256x4xf32>
    %33 = tpu.transpose %32, [1, 0] : vector<256x4xf32> -> vector<4x256xf32>
    %34 = vector.shape_cast %33 : vector<4x256xf32> to vector<4x16x16xf32>
    %c0_14 = arith.constant 0 : index
    %c0_15 = arith.constant 0 : index
    %c0_16 = arith.constant 0 : index
    %c0_17 = arith.constant 0 : index
    %35 = vector.load %arg6[%c0_14, %c0_15, %c0_16, %c0_17] : memref<1x4x16x16xf32, #tpu.memory_space<vmem>>, vector<1x4x16x16xf32>
    %36 = vector.shape_cast %35 : vector<1x4x16x16xf32> to vector<4x16x16xf32>
    %37 = vector.shape_cast %34 : vector<4x16x16xf32> to vector<1x4x16x16xf32>
    tpu.vector_store %arg6[%c0_14, %c0_15, %c0_16, %c0_17], %37 {strides = array<i32>} : memref<1x4x16x16xf32, #tpu.memory_space<vmem>>, vector<1x4x16x16xf32>,
    return
  }
  func.func @transform_0(%arg0: i32, %arg1: i32) -> (i32, i32, i32, i32) {
    %c0_i32 = arith.constant 0 : i32
    %c0_i32_0 = arith.constant 0 : i32
    %c0_i32_1 = arith.constant 0 : i32
    return %arg0, %arg1, %c0_i32, %c0_i32_0 : i32, i32, i32, i32
  }
  func.func @transform_1(%arg0: i32, %arg1: i32) -> (i32, i32) {
    %c0_i32 = arith.constant 0 : i32
    %c0_i32_0 = arith.constant 0 : i32
    %c0_i32_1 = arith.constant 0 : i32
    return %c0_i32, %c0_i32_0 : i32, i32
  }
  func.func @transform_2(%arg0: i32, %arg1: i32) -> (i32, i32) {
    %c0_i32 = arith.constant 0 : i32
    %c0_i32_0 = arith.constant 0 : i32
    %c0_i32_1 = arith.constant 0 : i32
    return %c0_i32, %c0_i32_0 : i32, i32
  }
  func.func @transform_3(%arg0: i32, %arg1: i32) -> (i32, i32) {
    %c0_i32 = arith.constant 0 : i32
    %c0_i32_0 = arith.constant 0 : i32
    %c0_i32_1 = arith.constant 0 : i32
    return %c0_i32, %c0_i32_0 : i32, i32
  }
  func.func @transform_4(%arg0: i32, %arg1: i32) -> (i32, i32, i32, i32) {
    %c0_i32 = arith.constant 0 : i32
    %c0_i32_0 = arith.constant 0 : i32
    %c0_i32_1 = arith.constant 0 : i32
    return %arg0, %c0_i32, %arg1, %c0_i32_0 : i32, i32, i32, i32
  }
}

</mosaic_0001>

<llo_original>
// kernel: tpu_custom_call.1
$region0: #{tpu_custom_call.1}
  #allocation0 [shape = 'u32[]', space=smem, size = 0x4, offset = 0x4, fixed_abs, tag = 'smem constant byte address 0x4 - core index']
  #allocation1 [shape = 'u32[144,128]{1,0:T(1,128)}', space=vmem, size = 0x12000, scoped, tag = 'internal scratch']
  %s0 = inlined_call_operand.hbm [shape: f32[2,16,16,16], index: 0, kind: input, shape index: {}]
  %s1 = inlined_call_operand.vmem [shape: f32[1,16], index: 1, kind: input, shape index: {}]
  %s2 = inlined_call_operand.vmem [shape: f32[1,16], index: 2, kind: input, shape index: {}]
  %s3 = inlined_call_operand.vmem [shape: f32[16,4], index: 3, kind: input, shape index: {}]
  %s4 = inlined_call_operand.hbm [shape: f32[2,4,16,16], index: 4, kind: output, shape index: {}]
  %s5 = sld [smem:[#allocation0]]
  $region53: #{tpu_custom_call.1} parent=0
    _
  %s7 = ssub.s32 1, %s5
  %s8 = scalar_select 0, %s7, %s5
  $region1: #{tpu_custom_call.1} parent=0
    #allocation2 [shape = 'u8[262144]{0}', space=vmem, size = 0x40000, scoped, tag = 'input window, operand 0']
    #allocation3 [shape = 's32[2]{0}', space=sflag, size = 0x8, scoped, tag = 'scoped memory for tpu_custom_call.1']
    #allocation4 [shape = 's32[2]{0}', space=sflag, size = 0x8, scoped, tag = 'scoped memory for tpu_custom_call.1']
    #allocation5 [shape = 'u8[65536]{0}', space=vmem, size = 0x10000, scoped, tag = 'output window, operand 0']
    %9 = vsyncpa [#allocation3], 0
    %s10 = scalar_lea.sflag [#allocation3], 1
    %11 = vsyncpa %s10, 0
    %12 = vsyncpa [#allocation4], 0
    %s13 = scalar_lea.sflag [#allocation4], 1
    %14 = vsyncpa %s13, 0
    loop: start=0, step=1, limit=4
    $region2: #{tpu_custom_call.1} parent=1 // loop_pre_header
      _
    $region3: #{tpu_custom_call.1} parent=1 // loop_header
      %s16 = sphi 0, %s20
      %p17 = scmp.ge.s32.totalorder %s16, 4
      %s23 = sphi 0, %s35
      %s24 = sphi 0, %s31
      %s25 = sphi 0, %s23
      %s26 = sphi 0, %s24
      %s27 = sphi 0, %s25
      %s28 = sphi 0, %s26
      %s40 = sphi 0, %s42
      %s43 = sphi 0, %s40
      %s44 = sphi 0, %s43
      %s60 = sphi 0, %s44
      %s64 = sphi 0, %s64
      %s66 = sphi 0, %s64
      %s67 = sphi 0, %s66
      %s81 = sphi 0, %s67
      %s85 = sphi 0, %s85
      %s87 = sphi 0, %s85
      %s88 = sphi 0, %s87
      %s102 = sphi 0, %s88
      %s106 = sphi 0, %s106
      %s108 = sphi 0, %s106
      %s109 = sphi 0, %s108
      %s123 = sphi 0, %s109
      %s131 = sphi 0, %s133
      %s134 = sphi 0, %s131
      %s135 = sphi 0, %s134
      %s151 = sphi 0, %s135
    $region4: #{tpu_custom_call.1} parent=1 // loop_header_branch
      %19 = sbr.rel (%p17) target = $region8
    $region5: #{tpu_custom_call.1} parent=1 // loop_body
      %s21 = ssub.s32 %s16, 1
      %s22 = ssub.s32 %s16, 2
      %s29 = sadd.s32 1, %s24
      %p30 = scmp.ge.s32.totalorder %s29, 1
      %s31 = scalar_select %p30, 0, %s29
      %s32 = sadd.s32 1, %s23
      %s33 = scalar_select %p30, %s32, %s23
      %p34 = scmp.ge.s32.totalorder %s33, 2
      %s35 = scalar_select %p34, 0, %s33
      %s36 = ssub.s32 %s23, %s35
      %s37 = ssub.s32 %s24, %s31
      %s38 = sor.u32 %s36, %s37
      %p39 = scmp.eq.s32.totalorder %s38, 0
      %s41 = sadd.s32 %s40, 1
      %s42 = scalar_select %p39, %s40, %s41
      %p45 = pneg %p39
      %p46 = scmp.eq.s32.totalorder %s16, 1
      %p47 = por %p45, %p46
      %p48 = scmp.ne.s32.totalorder %s40, %s43
      %p49 = scmp.eq.s32.totalorder %s16, 0
      %p50 = por %p48, %p49
      %p51 = scmp.ne.s32.totalorder %s40, %s43
      %p52 = scmp.eq.s32.totalorder %s21, 1
      %p53 = por %p51, %p52
      %p54 = scmp.ne.s32.totalorder %s43, %s44
      %p55 = scmp.eq.s32.totalorder %s21, 0
      %p56 = por %p54, %p55
      %p57 = scmp.ne.s32.totalorder %s43, %s44
      %p58 = scmp.eq.s32.totalorder %s22, 1
      %p59 = por %p57, %p58
      %p61 = scmp.ne.s32.totalorder %s44, %s60
      %p62 = scmp.eq.s32.totalorder %s22, 0
      %p63 = por %p61, %p62
      %s65 = sadd.s32 %s64, 1
      %p68 = scmp.eq.s32.totalorder %s16, 1
      %p69 = scmp.ne.s32.totalorder %s64, %s66
      %p70 = scmp.eq.s32.totalorder %s16, 0
      %p71 = por %p69, %p70
      %p72 = scmp.ne.s32.totalorder %s64, %s66
      %p73 = scmp.eq.s32.totalorder %s21, 1
      %p74 = por %p72, %p73
      %p75 = scmp.ne.s32.totalorder %s66, %s67
      %p76 = scmp.eq.s32.totalorder %s21, 0
      %p77 = por %p75, %p76
      %p78 = scmp.ne.s32.totalorder %s66, %s67
      %p79 = scmp.eq.s32.totalorder %s22, 1
      %p80 = por %p78, %p79
      %p82 = scmp.ne.s32.totalorder %s67, %s81
      %p83 = scmp.eq.s32.totalorder %s22, 0
      %p84 = por %p82, %p83
      %s86 = sadd.s32 %s85, 1
      %p89 = scmp.eq.s32.totalorder %s16, 1
      %p90 = scmp.ne.s32.totalorder %s85, %s87
      %p91 = scmp.eq.s32.totalorder %s16, 0
      %p92 = por %p90, %p91
      %p93 = scmp.ne.s32.totalorder %s85, %s87
      %p94 = scmp.eq.s32.totalorder %s21, 1
      %p95 = por %p93, %p94
      %p96 = scmp.ne.s32.totalorder %s87, %s88
      %p97 = scmp.eq.s32.totalorder %s21, 0
      %p98 = por %p96, %p97
      %p99 = scmp.ne.s32.totalorder %s87, %s88
      %p100 = scmp.eq.s32.totalorder %s22, 1
      %p101 = por %p99, %p100
      %p103 = scmp.ne.s32.totalorder %s88, %s102
      %p104 = scmp.eq.s32.totalorder %s22, 0
      %p105 = por %p103, %p104
      %s107 = sadd.s32 %s106, 1
      %p110 = scmp.eq.s32.totalorder %s16, 1
      %p111 = scmp.ne.s32.totalorder %s106, %s108
      %p112 = scmp.eq.s32.totalorder %s16, 0
      %p113 = por %p111, %p112
      %p114 = scmp.ne.s32.totalorder %s106, %s108
      %p115 = scmp.eq.s32.totalorder %s21, 1
      %p116 = por %p114, %p115
      %p117 = scmp.ne.s32.totalorder %s108, %s109
      %p118 = scmp.eq.s32.totalorder %s21, 0
      %p119 = por %p117, %p118
      %p120 = scmp.ne.s32.totalorder %s108, %s109
      %p121 = scmp.eq.s32.totalorder %s22, 1
      %p122 = por %p120, %p121
      %p124 = scmp.ne.s32.totalorder %s109, %s123
      %p125 = scmp.eq.s32.totalorder %s22, 0
      %p126 = por %p124, %p125
      %s127 = ssub.s32 %s23, %s35
      %s128 = ssub.s32 %s24, %s31
      %s129 = sor.u32 %s127, %s128
      %p130 = scmp.eq.s32.totalorder %s129, 0
      %s132 = sadd.s32 %s131, 1
      %s133 = scalar_select %p130, %s131, %s132
      %p136 = pneg %p130
      %p137 = scmp.eq.s32.totalorder %s16, 1
      %p138 = por %p136, %p137
      %p139 = scmp.ne.s32.totalorder %s131, %s134
      %p140 = scmp.eq.s32.totalorder %s16, 0
      %p141 = por %p139, %p140
      %p142 = scmp.ne.s32.totalorder %s131, %s134
      %p143 = scmp.eq.s32.totalorder %s21, 1
      %p144 = por %p142, %p143
      %p145 = scmp.ne.s32.totalorder %s134, %s135
      %p146 = scmp.eq.s32.totalorder %s21, 0
      %p147 = por %p145, %p146
      %p148 = scmp.ne.s32.totalorder %s134, %s135
      %p149 = scmp.eq.s32.totalorder %s22, 1
      %p150 = por %p148, %p149
      %p152 = scmp.ne.s32.totalorder %s135, %s151
      %p153 = scmp.eq.s32.totalorder %s22, 0
      %p154 = por %p152, %p153
      %p155 = scmp.le.s32.totalorder 1, %s16
      %p156 = scmp.lt.s32.totalorder %s16, 3
      %p157 = pnand %p155, %p156
      %p158 = pneg %p157
      // Predicated region
      $region9: #{tpu_custom_call.1} parent=5 // pred_check
        _
      $region10: #{tpu_custom_call.1} parent=5 // pred_check_branch
        %160 = sbr.rel (%p157) target = $region12
      $region11: #{tpu_custom_call.1} parent=5 // pred_region
        %s161 = ssub.s32 %s16, 1
        // Predicated region
        $region13: #{tpu_custom_call.1} parent=11 // pred_check
          %p162 = pneg %p77
        $region14: #{tpu_custom_call.1} parent=11 // pred_check_branch
          %164 = sbr.rel (%p162) target = $region16
        $region15: #{tpu_custom_call.1} parent=11 // pred_region
          _
        $region16: #{tpu_custom_call.1} parent=11 // pred_fallthru
          _
        // Predicated region
        $region17: #{tpu_custom_call.1} parent=11 // pred_check
          %p165 = pneg %p98
        $region18: #{tpu_custom_call.1} parent=11 // pred_check_branch
          %167 = sbr.rel (%p165) target = $region20
        $region19: #{tpu_custom_call.1} parent=11 // pred_region
          _
        $region20: #{tpu_custom_call.1} parent=11 // pred_fallthru
          _
        // Predicated region
        $region21: #{tpu_custom_call.1} parent=11 // pred_check
          %p168 = pneg %p119
        $region22: #{tpu_custom_call.1} parent=11 // pred_check_branch
          %170 = sbr.rel (%p168) target = $region24
        $region23: #{tpu_custom_call.1} parent=11 // pred_region
          _
        $region24: #{tpu_custom_call.1} parent=11 // pred_fallthru
          _
      $region12: #{tpu_custom_call.1} parent=5 // pred_fallthru
        _
      %p171 = scmp.lt.s32.totalorder %s16, 2
      // Predicated region
      $region25: #{tpu_custom_call.1} parent=5 // pred_check
        %p172 = pneg %p171
      $region26: #{tpu_custom_call.1} parent=5 // pred_check_branch
        %174 = sbr.rel (%p172) target = $region28
      $region27: #{tpu_custom_call.1} parent=5 // pred_region
        // Predicated region
        $region29: #{tpu_custom_call.1} parent=27 // pred_check
          %p175 = pneg %p50
        $region30: #{tpu_custom_call.1} parent=27 // pred_check_branch
          %177 = sbr.rel (%p175) target = $region32
        $region31: #{tpu_custom_call.1} parent=27 // pred_region
          %s178 = sand.u32 %s40, 1
          %s179 = scalar_lea.sflag [#allocation3], %s178
          %s180 = sand.u32 %s40, 1
          %s181 = smul.addr %s180, 256
          %s182 = scalar_lea.vmem [#allocation2], %s181
          %s183 = smul.u32 16, %s24
          %s185 = ssub.s32 4096, 4096
          %186 = vsyncadd %s179, %s185
          %s187 = smul.addr %s183, 2
          %s188 = smul.addr %s23, 32
          %s189 = sadd.s32 %s187, %s188
          %s190 = smul.addr %s189, 128
          %s191 = scalar_lea.hbm %s0, %s190
          %s192 = sshll.u32 %s182, 4
          %s193 = int_to_ptr.vmem [resolvable:$true] %s192
          %198 = dma.hbm_to_vmem [thread:$0]  %s191, 4096, %s193, %s179, 128, 128, 8
        $region32: #{tpu_custom_call.1} parent=27 // pred_fallthru
          _
      $region28: #{tpu_custom_call.1} parent=5 // pred_fallthru
        _
      %p199 = scmp.le.s32.totalorder 1, %s16
      %p200 = scmp.lt.s32.totalorder %s16, 3
      %p201 = pnand %p199, %p200
      %p202 = pneg %p201
      // Predicated region
      $region33: #{tpu_custom_call.1} parent=5 // pred_check
        _
      $region34: #{tpu_custom_call.1} parent=5 // pred_check_branch
        %204 = sbr.rel (%p201) target = $region36
      $region35: #{tpu_custom_call.1} parent=5 // pred_region
        %s205 = ssub.s32 %s16, 1
        %s206 = sand.u32 %s43, 1
        %s207 = scalar_lea.sflag [#allocation3], %s206
        %s208 = sand.u32 %s43, 1
        %s209 = smul.addr %s208, 256
        %s210 = scalar_lea.vmem [#allocation2], %s209
        // Predicated region
        $region37: #{tpu_custom_call.1} parent=35 // pred_check
          %p211 = pneg %p56
        $region38: #{tpu_custom_call.1} parent=35 // pred_check_branch
          %213 = sbr.rel (%p211) target = $region40
        $region39: #{tpu_custom_call.1} parent=35 // pred_region
          %214 = dma.done %s207, 4096
        $region40: #{tpu_custom_call.1} parent=35 // pred_fallthru
          _
        %s215 = sand.u32 %s43, 1
        %s216 = scalar_lea.sflag [#allocation3], %s215
        %s217 = sand.u32 %s43, 1
        %s218 = smul.addr %s217, 256
        %s219 = scalar_lea.vmem [#allocation2], %s218
        %p220 = pneg %p56
        %p221 = pneg %p53
        %p222 = pneg %p77
        %p223 = pneg %p74
        %p224 = pneg %p98
        %p225 = pneg %p95
        %p226 = pneg %p119
        %p227 = pneg %p116
        %p228 = pneg %p147
        %p229 = pneg %p144
        %s230 = sand.u32 %s134, 1
        %s231 = scalar_lea.sflag [#allocation4], %s230
        %s232 = sand.u32 %s134, 1
        %s233 = smul.addr %s232, 64
        %s234 = scalar_lea.vmem [#allocation5], %s233
        %s235 = smul.u32 16, %s26
        %s236 = smul.u32 2, %s26
        %v237 = vld [vmem:[%s210] sm:$0xff]
        %v238 = vld [vmem:[%s210 + $0x8] sm:$0xff]
        %v239 = vld [vmem:[%s210 + $0x10] sm:$0xff]
        %v240 = vld [vmem:[%s210 + $0x18] sm:$0xff]
        %v241 = vld [vmem:[%s210 + $0x20] sm:$0xff]
        %v242 = vld [vmem:[%s210 + $0x28] sm:$0xff]
        %v243 = vld [vmem:[%s210 + $0x30] sm:$0xff]
        %v244 = vld [vmem:[%s210 + $0x38] sm:$0xff]
        %v245 = vld [vmem:[%s210 + $0x40] sm:$0xff]
        %v246 = vld [vmem:[%s210 + $0x48] sm:$0xff]
        %v247 = vld [vmem:[%s210 + $0x50] sm:$0xff]
        %v248 = vld [vmem:[%s210 + $0x58] sm:$0xff]
        %v249 = vld [vmem:[%s210 + $0x60] sm:$0xff]
        %v250 = vld [vmem:[%s210 + $0x68] sm:$0xff]
        %v251 = vld [vmem:[%s210 + $0x70] sm:$0xff]
        %v252 = vld [vmem:[%s210 + $0x78] sm:$0xff]
        %v253 = vld [vmem:[%s210 + $0x80] sm:$0xff]
        %v254 = vld [vmem:[%s210 + $0x88] sm:$0xff]
        %v255 = vld [vmem:[%s210 + $0x90] sm:$0xff]
        %v256 = vld [vmem:[%s210 + $0x98] sm:$0xff]
        %v257 = vld [vmem:[%s210 + $0xa0] sm:$0xff]
        %v258 = vld [vmem:[%s210 + $0xa8] sm:$0xff]
        %v259 = vld [vmem:[%s210 + $0xb0] sm:$0xff]
        %v260 = vld [vmem:[%s210 + $0xb8] sm:$0xff]
        %v261 = vld [vmem:[%s210 + $0xc0] sm:$0xff]
        %v262 = vld [vmem:[%s210 + $0xc8] sm:$0xff]
        %v263 = vld [vmem:[%s210 + $0xd0] sm:$0xff]
        %v264 = vld [vmem:[%s210 + $0xd8] sm:$0xff]
        %v265 = vld [vmem:[%s210 + $0xe0] sm:$0xff]
        %v266 = vld [vmem:[%s210 + $0xe8] sm:$0xff]
        %v267 = vld [vmem:[%s210 + $0xf0] sm:$0xff]
        %v268 = vld [vmem:[%s210 + $0xf8] sm:$0xff]
        %v269 = vld [vmem:[%s1] sm:$0x1]
        %v270 = vld [vmem:[%s2] sm:$0x1]
        %vm271 = vcmask 130048
        %v272 = vsel %vm271, %v237, 0.0
        %273 = vadd.xlane.f32.xlu0 %v272
        %v274 = vpop.xlane.xlu0 %273
        %v275 = vsel %vm271, %v238, 0.0
        %276 = vadd.xlane.f32.xlu0 %v275
        %v277 = vpop.xlane.xlu0 %276
        %v278 = vsel %vm271, %v239, 0.0
        %279 = vadd.xlane.f32.xlu0 %v278
        %v280 = vpop.xlane.xlu0 %279
        %v281 = vsel %vm271, %v240, 0.0
        %282 = vadd.xlane.f32.xlu0 %v281
        %v283 = vpop.xlane.xlu0 %282
        %v284 = vsel %vm271, %v241, 0.0
        %285 = vadd.xlane.f32.xlu0 %v284
        %v286 = vpop.xlane.xlu0 %285
        %v287 = vsel %vm271, %v242, 0.0
        %288 = vadd.xlane.f32.xlu0 %v287
        %v289 = vpop.xlane.xlu0 %288
        %v290 = vsel %vm271, %v243, 0.0
        %291 = vadd.xlane.f32.xlu0 %v290
        %v292 = vpop.xlane.xlu0 %291
        %v293 = vsel %vm271, %v244, 0.0
        %294 = vadd.xlane.f32.xlu0 %v293
        %v295 = vpop.xlane.xlu0 %294
        %v296 = vsel %vm271, %v245, 0.0
        %297 = vadd.xlane.f32.xlu0 %v296
        %v298 = vpop.xlane.xlu0 %297
        %v299 = vsel %vm271, %v246, 0.0
        %300 = vadd.xlane.f32.xlu0 %v299
        %v301 = vpop.xlane.xlu0 %300
        %v302 = vsel %vm271, %v247, 0.0
        %303 = vadd.xlane.f32.xlu0 %v302
        %v304 = vpop.xlane.xlu0 %303
        %v305 = vsel %vm271, %v248, 0.0
        %306 = vadd.xlane.f32.xlu0 %v305
        %v307 = vpop.xlane.xlu0 %306
        %v308 = vsel %vm271, %v249, 0.0
        %309 = vadd.xlane.f32.xlu0 %v308
        %v310 = vpop.xlane.xlu0 %309
        %v311 = vsel %vm271, %v250, 0.0
        %312 = vadd.xlane.f32.xlu0 %v311
        %v313 = vpop.xlane.xlu0 %312
        %v314 = vsel %vm271, %v251, 0.0
        %315 = vadd.xlane.f32.xlu0 %v314
        %v316 = vpop.xlane.xlu0 %315
        %v317 = vsel %vm271, %v252, 0.0
        %318 = vadd.xlane.f32.xlu0 %v317
        %v319 = vpop.xlane.xlu0 %318
        %v320 = vsel %vm271, %v253, 0.0
        %321 = vadd.xlane.f32.xlu0 %v320
        %v322 = vpop.xlane.xlu0 %321
        %v323 = vsel %vm271, %v254, 0.0
        %324 = vadd.xlane.f32.xlu0 %v323
        %v325 = vpop.xlane.xlu0 %324
        %v326 = vsel %vm271, %v255, 0.0
        %327 = vadd.xlane.f32.xlu0 %v326
        %v328 = vpop.xlane.xlu0 %327
        %v329 = vsel %vm271, %v256, 0.0
        %330 = vadd.xlane.f32.xlu0 %v329
        %v331 = vpop.xlane.xlu0 %330
        %v332 = vsel %vm271, %v257, 0.0
        %333 = vadd.xlane.f32.xlu0 %v332
        %v334 = vpop.xlane.xlu0 %333
        %v335 = vsel %vm271, %v258, 0.0
        %336 = vadd.xlane.f32.xlu0 %v335
        %v337 = vpop.xlane.xlu0 %336
        %v338 = vsel %vm271, %v259, 0.0
        %339 = vadd.xlane.f32.xlu0 %v338
        %v340 = vpop.xlane.xlu0 %339
        %v341 = vsel %vm271, %v260, 0.0
        %342 = vadd.xlane.f32.xlu0 %v341
        %v343 = vpop.xlane.xlu0 %342
        %v344 = vsel %vm271, %v261, 0.0
        %345 = vadd.xlane.f32.xlu0 %v344
        %v346 = vpop.xlane.xlu0 %345
        %v347 = vsel %vm271, %v262, 0.0
        %348 = vadd.xlane.f32.xlu0 %v347
        %v349 = vpop.xlane.xlu0 %348
        %v350 = vsel %vm271, %v263, 0.0
        %351 = vadd.xlane.f32.xlu0 %v350
        %v352 = vpop.xlane.xlu0 %351
        %v353 = vsel %vm271, %v264, 0.0
        %354 = vadd.xlane.f32.xlu0 %v353
        %v355 = vpop.xlane.xlu0 %354
        %v356 = vsel %vm271, %v265, 0.0
        %357 = vadd.xlane.f32.xlu0 %v356
        %v358 = vpop.xlane.xlu0 %357
        %v359 = vsel %vm271, %v266, 0.0
        %360 = vadd.xlane.f32.xlu0 %v359
        %v361 = vpop.xlane.xlu0 %360
        %v362 = vsel %vm271, %v267, 0.0
        %363 = vadd.xlane.f32.xlu0 %v362
        %v364 = vpop.xlane.xlu0 %363
        %v365 = vsel %vm271, %v268, 0.0
        %366 = vadd.xlane.f32.xlu0 %v365
        %v367 = vpop.xlane.xlu0 %366
        %v368 = vrcp.pop 16.0
        %v369 = vmul.f32 %v274, %v368
        %v370 = vmul.f32 %v277, %v368
        %v371 = vmul.f32 %v280, %v368
        %v372 = vmul.f32 %v283, %v368
        %v373 = vmul.f32 %v286, %v368
        %v374 = vmul.f32 %v289, %v368
        %v375 = vmul.f32 %v292, %v368
        %v376 = vmul.f32 %v295, %v368
        %v377 = vmul.f32 %v298, %v368
        %v378 = vmul.f32 %v301, %v368
        %v379 = vmul.f32 %v304, %v368
        %v380 = vmul.f32 %v307, %v368
        %v381 = vmul.f32 %v310, %v368
        %v382 = vmul.f32 %v313, %v368
        %v383 = vmul.f32 %v316, %v368
        %v384 = vmul.f32 %v319, %v368
        %v385 = vmul.f32 %v322, %v368
        %v386 = vmul.f32 %v325, %v368
        %v387 = vmul.f32 %v328, %v368
        %v388 = vmul.f32 %v331, %v368
        %v389 = vmul.f32 %v334, %v368
        %v390 = vmul.f32 %v337, %v368
        %v391 = vmul.f32 %v340, %v368
        %v392 = vmul.f32 %v343, %v368
        %v393 = vmul.f32 %v346, %v368
        %v394 = vmul.f32 %v349, %v368
        %v395 = vmul.f32 %v352, %v368
        %v396 = vmul.f32 %v355, %v368
        %v397 = vmul.f32 %v358, %v368
        %v398 = vmul.f32 %v361, %v368
        %v399 = vmul.f32 %v364, %v368
        %v400 = vmul.f32 %v367, %v368
        %v401 = vsub.f32 %v237, %v369
        %v402 = vsub.f32 %v238, %v370
        %v403 = vsub.f32 %v239, %v371
        %v404 = vsub.f32 %v240, %v372
        %v405 = vsub.f32 %v241, %v373
        %v406 = vsub.f32 %v242, %v374
        %v407 = vsub.f32 %v243, %v375
        %v408 = vsub.f32 %v244, %v376
        %v409 = vsub.f32 %v245, %v377
        %v410 = vsub.f32 %v246, %v378
        %v411 = vsub.f32 %v247, %v379
        %v412 = vsub.f32 %v248, %v380
        %v413 = vsub.f32 %v249, %v381
        %v414 = vsub.f32 %v250, %v382
        %v415 = vsub.f32 %v251, %v383
        %v416 = vsub.f32 %v252, %v384
        %v417 = vsub.f32 %v253, %v385
        %v418 = vsub.f32 %v254, %v386
        %v419 = vsub.f32 %v255, %v387
        %v420 = vsub.f32 %v256, %v388
        %v421 = vsub.f32 %v257, %v389
        %v422 = vsub.f32 %v258, %v390
        %v423 = vsub.f32 %v259, %v391
        %v424 = vsub.f32 %v260, %v392
        %v425 = vsub.f32 %v261, %v393
        %v426 = vsub.f32 %v262, %v394
        %v427 = vsub.f32 %v263, %v395
        %v428 = vsub.f32 %v264, %v396
        %v429 = vsub.f32 %v265, %v397
        %v430 = vsub.f32 %v266, %v398
        %v431 = vsub.f32 %v267, %v399
        %v432 = vsub.f32 %v268, %v400
        %v433 = vmul.f32 %v401, %v401
        %v434 = vmul.f32 %v402, %v402
        %v435 = vmul.f32 %v403, %v403
        %v436 = vmul.f32 %v404, %v404
        %v437 = vmul.f32 %v405, %v405
        %v438 = vmul.f32 %v406, %v406
        %v439 = vmul.f32 %v407, %v407
        %v440 = vmul.f32 %v408, %v408
        %v441 = vmul.f32 %v409, %v409
        %v442 = vmul.f32 %v410, %v410
        %v443 = vmul.f32 %v411, %v411
        %v444 = vmul.f32 %v412, %v412
        %v445 = vmul.f32 %v413, %v413
        %v446 = vmul.f32 %v414, %v414
        %v447 = vmul.f32 %v415, %v415
        %v448 = vmul.f32 %v416, %v416
        %v449 = vmul.f32 %v417, %v417
        %v450 = vmul.f32 %v418, %v418
        %v451 = vmul.f32 %v419, %v419
        %v452 = vmul.f32 %v420, %v420
        %v453 = vmul.f32 %v421, %v421
        %v454 = vmul.f32 %v422, %v422
        %v455 = vmul.f32 %v423, %v423
        %v456 = vmul.f32 %v424, %v424
        %v457 = vmul.f32 %v425, %v425
        %v458 = vmul.f32 %v426, %v426
        %v459 = vmul.f32 %v427, %v427
        %v460 = vmul.f32 %v428, %v428
        %v461 = vmul.f32 %v429, %v429
        %v462 = vmul.f32 %v430, %v430
        %v463 = vmul.f32 %v431, %v431
        %v464 = vmul.f32 %v432, %v432
        %v465 = vsel %vm271, %v433, 0.0
        %466 = vadd.xlane.f32.xlu0 %v465
        %v467 = vpop.xlane.xlu0 %466
        %v468 = vsel %vm271, %v434, 0.0
        %469 = vadd.xlane.f32.xlu0 %v468
        %v470 = vpop.xlane.xlu0 %469
        %v471 = vsel %vm271, %v435, 0.0
        %472 = vadd.xlane.f32.xlu0 %v471
        %v473 = vpop.xlane.xlu0 %472
        %v474 = vsel %vm271, %v436, 0.0
        %475 = vadd.xlane.f32.xlu0 %v474
        %v476 = vpop.xlane.xlu0 %475
        %v477 = vsel %vm271, %v437, 0.0
        %478 = vadd.xlane.f32.xlu0 %v477
        %v479 = vpop.xlane.xlu0 %478
        %v480 = vsel %vm271, %v438, 0.0
        %481 = vadd.xlane.f32.xlu0 %v480
        %v482 = vpop.xlane.xlu0 %481
        %v483 = vsel %vm271, %v439, 0.0
        %484 = vadd.xlane.f32.xlu0 %v483
        %v485 = vpop.xlane.xlu0 %484
        %v486 = vsel %vm271, %v440, 0.0
        %487 = vadd.xlane.f32.xlu0 %v486
        %v488 = vpop.xlane.xlu0 %487
        %v489 = vsel %vm271, %v441, 0.0
        %490 = vadd.xlane.f32.xlu0 %v489
        %v491 = vpop.xlane.xlu0 %490
        %v492 = vsel %vm271, %v442, 0.0
        %493 = vadd.xlane.f32.xlu0 %v492
        %v494 = vpop.xlane.xlu0 %493
        %v495 = vsel %vm271, %v443, 0.0
        %496 = vadd.xlane.f32.xlu0 %v495
        %v497 = vpop.xlane.xlu0 %496
        %v498 = vsel %vm271, %v444, 0.0
        %499 = vadd.xlane.f32.xlu0 %v498
        %v500 = vpop.xlane.xlu0 %499
        %v501 = vsel %vm271, %v445, 0.0
        %502 = vadd.xlane.f32.xlu0 %v501
        %v503 = vpop.xlane.xlu0 %502
        %v504 = vsel %vm271, %v446, 0.0
        %505 = vadd.xlane.f32.xlu0 %v504
        %v506 = vpop.xlane.xlu0 %505
        %v507 = vsel %vm271, %v447, 0.0
        %508 = vadd.xlane.f32.xlu0 %v507
        %v509 = vpop.xlane.xlu0 %508
        %v510 = vsel %vm271, %v448, 0.0
        %511 = vadd.xlane.f32.xlu0 %v510
        %v512 = vpop.xlane.xlu0 %511
        %v513 = vsel %vm271, %v449, 0.0
        %514 = vadd.xlane.f32.xlu0 %v513
        %v515 = vpop.xlane.xlu0 %514
        %v516 = vsel %vm271, %v450, 0.0
        %517 = vadd.xlane.f32.xlu0 %v516
        %v518 = vpop.xlane.xlu0 %517
        %v519 = vsel %vm271, %v451, 0.0
        %520 = vadd.xlane.f32.xlu0 %v519
        %v521 = vpop.xlane.xlu0 %520
        %v522 = vsel %vm271, %v452, 0.0
        %523 = vadd.xlane.f32.xlu0 %v522
        %v524 = vpop.xlane.xlu0 %523
        %v525 = vsel %vm271, %v453, 0.0
        %526 = vadd.xlane.f32.xlu0 %v525
        %v527 = vpop.xlane.xlu0 %526
        %v528 = vsel %vm271, %v454, 0.0
        %529 = vadd.xlane.f32.xlu0 %v528
        %v530 = vpop.xlane.xlu0 %529
        %v531 = vsel %vm271, %v455, 0.0
        %532 = vadd.xlane.f32.xlu0 %v531
        %v533 = vpop.xlane.xlu0 %532
        %v534 = vsel %vm271, %v456, 0.0
        %535 = vadd.xlane.f32.xlu0 %v534
        %v536 = vpop.xlane.xlu0 %535
        %v537 = vsel %vm271, %v457, 0.0
        %538 = vadd.xlane.f32.xlu0 %v537
        %v539 = vpop.xlane.xlu0 %538
        %v540 = vsel %vm271, %v458, 0.0
        %541 = vadd.xlane.f32.xlu0 %v540
        %v542 = vpop.xlane.xlu0 %541
        %v543 = vsel %vm271, %v459, 0.0
        %544 = vadd.xlane.f32.xlu0 %v543
        %v545 = vpop.xlane.xlu0 %544
        %v546 = vsel %vm271, %v460, 0.0
        %547 = vadd.xlane.f32.xlu0 %v546
        %v548 = vpop.xlane.xlu0 %547
        %v549 = vsel %vm271, %v461, 0.0
        %550 = vadd.xlane.f32.xlu0 %v549
        %v551 = vpop.xlane.xlu0 %550
        %v552 = vsel %vm271, %v462, 0.0
        %553 = vadd.xlane.f32.xlu0 %v552
        %v554 = vpop.xlane.xlu0 %553
        %v555 = vsel %vm271, %v463, 0.0
        %556 = vadd.xlane.f32.xlu0 %v555
        %v557 = vpop.xlane.xlu0 %556
        %v558 = vsel %vm271, %v464, 0.0
        %559 = vadd.xlane.f32.xlu0 %v558
        %v560 = vpop.xlane.xlu0 %559
        %v561 = vmul.f32 %v467, %v368
        %v562 = vmul.f32 %v470, %v368
        %v563 = vmul.f32 %v473, %v368
        %v564 = vmul.f32 %v476, %v368
        %v565 = vmul.f32 %v479, %v368
        %v566 = vmul.f32 %v482, %v368
        %v567 = vmul.f32 %v485, %v368
        %v568 = vmul.f32 %v488, %v368
        %v569 = vmul.f32 %v491, %v368
        %v570 = vmul.f32 %v494, %v368
        %v571 = vmul.f32 %v497, %v368
        %v572 = vmul.f32 %v500, %v368
        %v573 = vmul.f32 %v503, %v368
        %v574 = vmul.f32 %v506, %v368
        %v575 = vmul.f32 %v509, %v368
        %v576 = vmul.f32 %v512, %v368
        %v577 = vmul.f32 %v515, %v368
        %v578 = vmul.f32 %v518, %v368
        %v579 = vmul.f32 %v521, %v368
        %v580 = vmul.f32 %v524, %v368
        %v581 = vmul.f32 %v527, %v368
        %v582 = vmul.f32 %v530, %v368
        %v583 = vmul.f32 %v533, %v368
        %v584 = vmul.f32 %v536, %v368
        %v585 = vmul.f32 %v539, %v368
        %v586 = vmul.f32 %v542, %v368
        %v587 = vmul.f32 %v545, %v368
        %v588 = vmul.f32 %v548, %v368
        %v589 = vmul.f32 %v551, %v368
        %v590 = vmul.f32 %v554, %v368
        %v591 = vmul.f32 %v557, %v368
        %v592 = vmul.f32 %v560, %v368
        %v593 = vadd.f32 %v561, 1e-05
        %v594 = vadd.f32 %v562, 1e-05
        %v595 = vadd.f32 %v563, 1e-05
        %v596 = vadd.f32 %v564, 1e-05
        %v597 = vadd.f32 %v565, 1e-05
        %v598 = vadd.f32 %v566, 1e-05
        %v599 = vadd.f32 %v567, 1e-05
        %v600 = vadd.f32 %v568, 1e-05
        %v601 = vadd.f32 %v569, 1e-05
        %v602 = vadd.f32 %v570, 1e-05
        %v603 = vadd.f32 %v571, 1e-05
        %v604 = vadd.f32 %v572, 1e-05
        %v605 = vadd.f32 %v573, 1e-05
        %v606 = vadd.f32 %v574, 1e-05
        %v607 = vadd.f32 %v575, 1e-05
        %v608 = vadd.f32 %v576, 1e-05
        %v609 = vadd.f32 %v577, 1e-05
        %v610 = vadd.f32 %v578, 1e-05
        %v611 = vadd.f32 %v579, 1e-05
        %v612 = vadd.f32 %v580, 1e-05
        %v613 = vadd.f32 %v581, 1e-05
        %v614 = vadd.f32 %v582, 1e-05
        %v615 = vadd.f32 %v583, 1e-05
        %v616 = vadd.f32 %v584, 1e-05
        %v617 = vadd.f32 %v585, 1e-05
        %v618 = vadd.f32 %v586, 1e-05
        %v619 = vadd.f32 %v587, 1e-05
        %v620 = vadd.f32 %v588, 1e-05
        %v621 = vadd.f32 %v589, 1e-05
        %v622 = vadd.f32 %v590, 1e-05
        %v623 = vadd.f32 %v591, 1e-05
        %v624 = vadd.f32 %v592, 1e-05
        %v625 = vrsqrt.pop %v593
        %v626 = vmul.f32 %v593, %v625
        %vm627 = vcmp.eq.f32.partialorder %v593, inf
        %v628 = vsel %vm627, %v593, %v626
        %vm629 = vcmp.eq.f32.partialorder %v593, 0.0
        %v630 = vand.u32 %v593, 2147483648
        %v631 = vsel %vm629, %v630, %v628
        %v632 = vrsqrt.pop %v594
        %v633 = vmul.f32 %v594, %v632
        %vm634 = vcmp.eq.f32.partialorder %v594, inf
        %v635 = vsel %vm634, %v594, %v633
        %vm636 = vcmp.eq.f32.partialorder %v594, 0.0
        %v637 = vand.u32 %v594, 2147483648
        %v638 = vsel %vm636, %v637, %v635
        %v639 = vrsqrt.pop %v595
        %v640 = vmul.f32 %v595, %v639
        %vm641 = vcmp.eq.f32.partialorder %v595, inf
        %v642 = vsel %vm641, %v595, %v640
        %vm643 = vcmp.eq.f32.partialorder %v595, 0.0
        %v644 = vand.u32 %v595, 2147483648
        %v645 = vsel %vm643, %v644, %v642
        %v646 = vrsqrt.pop %v596
        %v647 = vmul.f32 %v596, %v646
        %vm648 = vcmp.eq.f32.partialorder %v596, inf
        %v649 = vsel %vm648, %v596, %v647
        %vm650 = vcmp.eq.f32.partialorder %v596, 0.0
        %v651 = vand.u32 %v596, 2147483648
        %v652 = vsel %vm650, %v651, %v649
        %v653 = vrsqrt.pop %v597
        %v654 = vmul.f32 %v597, %v653
        %vm655 = vcmp.eq.f32.partialorder %v597, inf
        %v656 = vsel %vm655, %v597, %v654
        %vm657 = vcmp.eq.f32.partialorder %v597, 0.0
        %v658 = vand.u32 %v597, 2147483648
        %v659 = vsel %vm657, %v658, %v656
        %v660 = vrsqrt.pop %v598
        %v661 = vmul.f32 %v598, %v660
        %vm662 = vcmp.eq.f32.partialorder %v598, inf
        %v663 = vsel %vm662, %v598, %v661
        %vm664 = vcmp.eq.f32.partialorder %v598, 0.0
        %v665 = vand.u32 %v598, 2147483648
        %v666 = vsel %vm664, %v665, %v663
        %v667 = vrsqrt.pop %v599
        %v668 = vmul.f32 %v599, %v667
        %vm669 = vcmp.eq.f32.partialorder %v599, inf
        %v670 = vsel %vm669, %v599, %v668
        %vm671 = vcmp.eq.f32.partialorder %v599, 0.0
        %v672 = vand.u32 %v599, 2147483648
        %v673 = vsel %vm671, %v672, %v670
        %v674 = vrsqrt.pop %v600
        %v675 = vmul.f32 %v600, %v674
        %vm676 = vcmp.eq.f32.partialorder %v600, inf
        %v677 = vsel %vm676, %v600, %v675
        %vm678 = vcmp.eq.f32.partialorder %v600, 0.0
        %v679 = vand.u32 %v600, 2147483648
        %v680 = vsel %vm678, %v679, %v677
        %v681 = vrsqrt.pop %v601
        %v682 = vmul.f32 %v601, %v681
        %vm683 = vcmp.eq.f32.partialorder %v601, inf
        %v684 = vsel %vm683, %v601, %v682
        %vm685 = vcmp.eq.f32.partialorder %v601, 0.0
        %v686 = vand.u32 %v601, 2147483648
        %v687 = vsel %vm685, %v686, %v684
        %v688 = vrsqrt.pop %v602
        %v689 = vmul.f32 %v602, %v688
        %vm690 = vcmp.eq.f32.partialorder %v602, inf
        %v691 = vsel %vm690, %v602, %v689
        %vm692 = vcmp.eq.f32.partialorder %v602, 0.0
        %v693 = vand.u32 %v602, 2147483648
        %v694 = vsel %vm692, %v693, %v691
        %v695 = vrsqrt.pop %v603
        %v696 = vmul.f32 %v603, %v695
        %vm697 = vcmp.eq.f32.partialorder %v603, inf
        %v698 = vsel %vm697, %v603, %v696
        %vm699 = vcmp.eq.f32.partialorder %v603, 0.0
        %v700 = vand.u32 %v603, 2147483648
        %v701 = vsel %vm699, %v700, %v698
        %v702 = vrsqrt.pop %v604
        %v703 = vmul.f32 %v604, %v702
        %vm704 = vcmp.eq.f32.partialorder %v604, inf
        %v705 = vsel %vm704, %v604, %v703
        %vm706 = vcmp.eq.f32.partialorder %v604, 0.0
        %v707 = vand.u32 %v604, 2147483648
        %v708 = vsel %vm706, %v707, %v705
        %v709 = vrsqrt.pop %v605
        %v710 = vmul.f32 %v605, %v709
        %vm711 = vcmp.eq.f32.partialorder %v605, inf
        %v712 = vsel %vm711, %v605, %v710
        %vm713 = vcmp.eq.f32.partialorder %v605, 0.0
        %v714 = vand.u32 %v605, 2147483648
        %v715 = vsel %vm713, %v714, %v712
        %v716 = vrsqrt.pop %v606
        %v717 = vmul.f32 %v606, %v716
        %vm718 = vcmp.eq.f32.partialorder %v606, inf
        %v719 = vsel %vm718, %v606, %v717
        %vm720 = vcmp.eq.f32.partialorder %v606, 0.0
        %v721 = vand.u32 %v606, 2147483648
        %v722 = vsel %vm720, %v721, %v719
        %v723 = vrsqrt.pop %v607
        %v724 = vmul.f32 %v607, %v723
        %vm725 = vcmp.eq.f32.partialorder %v607, inf
        %v726 = vsel %vm725, %v607, %v724
        %vm727 = vcmp.eq.f32.partialorder %v607, 0.0
        %v728 = vand.u32 %v607, 2147483648
        %v729 = vsel %vm727, %v728, %v726
        %v730 = vrsqrt.pop %v608
        %v731 = vmul.f32 %v608, %v730
        %vm732 = vcmp.eq.f32.partialorder %v608, inf
        %v733 = vsel %vm732, %v608, %v731
        %vm734 = vcmp.eq.f32.partialorder %v608, 0.0
        %v735 = vand.u32 %v608, 2147483648
        %v736 = vsel %vm734, %v735, %v733
        %v737 = vrsqrt.pop %v609
        %v738 = vmul.f32 %v609, %v737
        %vm739 = vcmp.eq.f32.partialorder %v609, inf
        %v740 = vsel %vm739, %v609, %v738
        %vm741 = vcmp.eq.f32.partialorder %v609, 0.0
        %v742 = vand.u32 %v609, 2147483648
        %v743 = vsel %vm741, %v742, %v740
        %v744 = vrsqrt.pop %v610
        %v745 = vmul.f32 %v610, %v744
        %vm746 = vcmp.eq.f32.partialorder %v610, inf
        %v747 = vsel %vm746, %v610, %v745
        %vm748 = vcmp.eq.f32.partialorder %v610, 0.0
        %v749 = vand.u32 %v610, 2147483648
        %v750 = vsel %vm748, %v749, %v747
        %v751 = vrsqrt.pop %v611
        %v752 = vmul.f32 %v611, %v751
        %vm753 = vcmp.eq.f32.partialorder %v611, inf
        %v754 = vsel %vm753, %v611, %v752
        %vm755 = vcmp.eq.f32.partialorder %v611, 0.0
        %v756 = vand.u32 %v611, 2147483648
        %v757 = vsel %vm755, %v756, %v754
        %v758 = vrsqrt.pop %v612
        %v759 = vmul.f32 %v612, %v758
        %vm760 = vcmp.eq.f32.partialorder %v612, inf
        %v761 = vsel %vm760, %v612, %v759
        %vm762 = vcmp.eq.f32.partialorder %v612, 0.0
        %v763 = vand.u32 %v612, 2147483648
        %v764 = vsel %vm762, %v763, %v761
        %v765 = vrsqrt.pop %v613
        %v766 = vmul.f32 %v613, %v765
        %vm767 = vcmp.eq.f32.partialorder %v613, inf
        %v768 = vsel %vm767, %v613, %v766
        %vm769 = vcmp.eq.f32.partialorder %v613, 0.0
        %v770 = vand.u32 %v613, 2147483648
        %v771 = vsel %vm769, %v770, %v768
        %v772 = vrsqrt.pop %v614
        %v773 = vmul.f32 %v614, %v772
        %vm774 = vcmp.eq.f32.partialorder %v614, inf
        %v775 = vsel %vm774, %v614, %v773
        %vm776 = vcmp.eq.f32.partialorder %v614, 0.0
        %v777 = vand.u32 %v614, 2147483648
        %v778 = vsel %vm776, %v777, %v775
        %v779 = vrsqrt.pop %v615
        %v780 = vmul.f32 %v615, %v779
        %vm781 = vcmp.eq.f32.partialorder %v615, inf
        %v782 = vsel %vm781, %v615, %v780
        %vm783 = vcmp.eq.f32.partialorder %v615, 0.0
        %v784 = vand.u32 %v615, 2147483648
        %v785 = vsel %vm783, %v784, %v782
        %v786 = vrsqrt.pop %v616
        %v787 = vmul.f32 %v616, %v786
        %vm788 = vcmp.eq.f32.partialorder %v616, inf
        %v789 = vsel %vm788, %v616, %v787
        %vm790 = vcmp.eq.f32.partialorder %v616, 0.0
        %v791 = vand.u32 %v616, 2147483648
        %v792 = vsel %vm790, %v791, %v789
        %v793 = vrsqrt.pop %v617
        %v794 = vmul.f32 %v617, %v793
        %vm795 = vcmp.eq.f32.partialorder %v617, inf
        %v796 = vsel %vm795, %v617, %v794
        %vm797 = vcmp.eq.f32.partialorder %v617, 0.0
        %v798 = vand.u32 %v617, 2147483648
        %v799 = vsel %vm797, %v798, %v796
        %v800 = vrsqrt.pop %v618
        %v801 = vmul.f32 %v618, %v800
        %vm802 = vcmp.eq.f32.partialorder %v618, inf
        %v803 = vsel %vm802, %v618, %v801
        %vm804 = vcmp.eq.f32.partialorder %v618, 0.0
        %v805 = vand.u32 %v618, 2147483648
        %v806 = vsel %vm804, %v805, %v803
        %v807 = vrsqrt.pop %v619
        %v808 = vmul.f32 %v619, %v807
        %vm809 = vcmp.eq.f32.partialorder %v619, inf
        %v810 = vsel %vm809, %v619, %v808
        %vm811 = vcmp.eq.f32.partialorder %v619, 0.0
        %v812 = vand.u32 %v619, 2147483648
        %v813 = vsel %vm811, %v812, %v810
        %v814 = vrsqrt.pop %v620
        %v815 = vmul.f32 %v620, %v814
        %vm816 = vcmp.eq.f32.partialorder %v620, inf
        %v817 = vsel %vm816, %v620, %v815
        %vm818 = vcmp.eq.f32.partialorder %v620, 0.0
        %v819 = vand.u32 %v620, 2147483648
        %v820 = vsel %vm818, %v819, %v817
        %v821 = vrsqrt.pop %v621
        %v822 = vmul.f32 %v621, %v821
        %vm823 = vcmp.eq.f32.partialorder %v621, inf
        %v824 = vsel %vm823, %v621, %v822
        %vm825 = vcmp.eq.f32.partialorder %v621, 0.0
        %v826 = vand.u32 %v621, 2147483648
        %v827 = vsel %vm825, %v826, %v824
        %v828 = vrsqrt.pop %v622
        %v829 = vmul.f32 %v622, %v828
        %vm830 = vcmp.eq.f32.partialorder %v622, inf
        %v831 = vsel %vm830, %v622, %v829
        %vm832 = vcmp.eq.f32.partialorder %v622, 0.0
        %v833 = vand.u32 %v622, 2147483648
        %v834 = vsel %vm832, %v833, %v831
        %v835 = vrsqrt.pop %v623
        %v836 = vmul.f32 %v623, %v835
        %vm837 = vcmp.eq.f32.partialorder %v623, inf
        %v838 = vsel %vm837, %v623, %v836
        %vm839 = vcmp.eq.f32.partialorder %v623, 0.0
        %v840 = vand.u32 %v623, 2147483648
        %v841 = vsel %vm839, %v840, %v838
        %v842 = vrsqrt.pop %v624
        %v843 = vmul.f32 %v624, %v842
        %vm844 = vcmp.eq.f32.partialorder %v624, inf
        %v845 = vsel %vm844, %v624, %v843
        %vm846 = vcmp.eq.f32.partialorder %v624, 0.0
        %v847 = vand.u32 %v624, 2147483648
        %v848 = vsel %vm846, %v847, %v845
        %v849 = vrcp.pop %v631
        %v850 = vmul.f32 %v401, %v849
        %v851 = vrcp.pop %v638
        %v852 = vmul.f32 %v402, %v851
        %v853 = vrcp.pop %v645
        %v854 = vmul.f32 %v403, %v853
        %v855 = vrcp.pop %v652
        %v856 = vmul.f32 %v404, %v855
        %v857 = vrcp.pop %v659
        %v858 = vmul.f32 %v405, %v857
        %v859 = vrcp.pop %v666
        %v860 = vmul.f32 %v406, %v859
        %v861 = vrcp.pop %v673
        %v862 = vmul.f32 %v407, %v861
        %v863 = vrcp.pop %v680
        %v864 = vmul.f32 %v408, %v863
        %v865 = vrcp.pop %v687
        %v866 = vmul.f32 %v409, %v865
        %v867 = vrcp.pop %v694
        %v868 = vmul.f32 %v410, %v867
        %v869 = vrcp.pop %v701
        %v870 = vmul.f32 %v411, %v869
        %v871 = vrcp.pop %v708
        %v872 = vmul.f32 %v412, %v871
        %v873 = vrcp.pop %v715
        %v874 = vmul.f32 %v413, %v873
        %v875 = vrcp.pop %v722
        %v876 = vmul.f32 %v414, %v875
        %v877 = vrcp.pop %v729
        %v878 = vmul.f32 %v415, %v877
        %v879 = vrcp.pop %v736
        %v880 = vmul.f32 %v416, %v879
        %v881 = vrcp.pop %v743
        %v882 = vmul.f32 %v417, %v881
        %v883 = vrcp.pop %v750
        %v884 = vmul.f32 %v418, %v883
        %v885 = vrcp.pop %v757
        %v886 = vmul.f32 %v419, %v885
        %v887 = vrcp.pop %v764
        %v888 = vmul.f32 %v420, %v887
        %v889 = vrcp.pop %v771
        %v890 = vmul.f32 %v421, %v889
        %v891 = vrcp.pop %v778
        %v892 = vmul.f32 %v422, %v891
        %v893 = vrcp.pop %v785
        %v894 = vmul.f32 %v423, %v893
        %v895 = vrcp.pop %v792
        %v896 = vmul.f32 %v424, %v895
        %v897 = vrcp.pop %v799
        %v898 = vmul.f32 %v425, %v897
        %v899 = vrcp.pop %v806
        %v900 = vmul.f32 %v426, %v899
        %v901 = vrcp.pop %v813
        %v902 = vmul.f32 %v427, %v901
        %v903 = vrcp.pop %v820
        %v904 = vmul.f32 %v428, %v903
        %v905 = vrcp.pop %v827
        %v906 = vmul.f32 %v429, %v905
        %v907 = vrcp.pop %v834
        %v908 = vmul.f32 %v430, %v907
        %v909 = vrcp.pop %v841
        %v910 = vmul.f32 %v431, %v909
        %v911 = vrcp.pop %v848
        %v912 = vmul.f32 %v432, %v911
        %v914 = vlaneseq
        %v915 = vshrl.u32 %v914, 7
        %v916 = vsub.s32 0, %v915
        %v917 = vrot.slane %v269, %v916
        %v919 = vmul.f32 %v850, %v917
        %v920 = vmul.f32 %v852, %v917
        %v921 = vmul.f32 %v854, %v917
        %v922 = vmul.f32 %v856, %v917
        %v923 = vmul.f32 %v858, %v917
        %v924 = vmul.f32 %v860, %v917
        %v925 = vmul.f32 %v862, %v917
        %v926 = vmul.f32 %v864, %v917
        %v927 = vmul.f32 %v866, %v917
        %v928 = vmul.f32 %v868, %v917
        %v929 = vmul.f32 %v870, %v917
        %v930 = vmul.f32 %v872, %v917
        %v931 = vmul.f32 %v874, %v917
        %v932 = vmul.f32 %v876, %v917
        %v933 = vmul.f32 %v878, %v917
        %v934 = vmul.f32 %v880, %v917
        %v935 = vmul.f32 %v882, %v917
        %v936 = vmul.f32 %v884, %v917
        %v937 = vmul.f32 %v886, %v917
        %v938 = vmul.f32 %v888, %v917
        %v939 = vmul.f32 %v890, %v917
        %v940 = vmul.f32 %v892, %v917
        %v941 = vmul.f32 %v894, %v917
        %v942 = vmul.f32 %v896, %v917
        %v943 = vmul.f32 %v898, %v917
        %v944 = vmul.f32 %v900, %v917
        %v945 = vmul.f32 %v902, %v917
        %v946 = vmul.f32 %v904, %v917
        %v947 = vmul.f32 %v906, %v917
        %v948 = vmul.f32 %v908, %v917
        %v949 = vmul.f32 %v910, %v917
        %v950 = vmul.f32 %v912, %v917
        %v952 = vlaneseq
        %v953 = vshrl.u32 %v952, 7
        %v954 = vsub.s32 0, %v953
        %v955 = vrot.slane %v270, %v954
        %v957 = vadd.f32 %v919, %v955
        %v958 = vadd.f32 %v920, %v955
        %v959 = vadd.f32 %v921, %v955
        %v960 = vadd.f32 %v922, %v955
        %v961 = vadd.f32 %v923, %v955
        %v962 = vadd.f32 %v924, %v955
        %v963 = vadd.f32 %v925, %v955
        %v964 = vadd.f32 %v926, %v955
        %v965 = vadd.f32 %v927, %v955
        %v966 = vadd.f32 %v928, %v955
        %v967 = vadd.f32 %v929, %v955
        %v968 = vadd.f32 %v930, %v955
        %v969 = vadd.f32 %v931, %v955
        %v970 = vadd.f32 %v932, %v955
        %v971 = vadd.f32 %v933, %v955
        %v972 = vadd.f32 %v934, %v955
        %v973 = vadd.f32 %v935, %v955
        %v974 = vadd.f32 %v936, %v955
        %v975 = vadd.f32 %v937, %v955
        %v976 = vadd.f32 %v938, %v955
        %v977 = vadd.f32 %v939, %v955
        %v978 = vadd.f32 %v940, %v955
        %v979 = vadd.f32 %v941, %v955
        %v980 = vadd.f32 %v942, %v955
        %v981 = vadd.f32 %v943, %v955
        %v982 = vadd.f32 %v944, %v955
        %v983 = vadd.f32 %v945, %v955
        %v984 = vadd.f32 %v946, %v955
        %v985 = vadd.f32 %v947, %v955
        %v986 = vadd.f32 %v948, %v955
        %v987 = vadd.f32 %v949, %v955
        %v988 = vadd.f32 %v950, %v955
        %v989 = vld [vmem:[%s3] sm:$0xff]
        %v990 = vld [vmem:[%s3 + $0x8] sm:$0xff]
        %v992 = vsel %vm271, %v957, 0
        %v995 = vsel %vm271, %v958, 0
        %v998 = vsel %vm271, %v959, 0
        %v1001 = vsel %vm271, %v960, 0
        %v1004 = vsel %vm271, %v961, 0
        %v1007 = vsel %vm271, %v962, 0
        %v1010 = vsel %vm271, %v963, 0
        %v1013 = vsel %vm271, %v964, 0
        %v1016 = vsel %vm271, %v965, 0
        %v1019 = vsel %vm271, %v966, 0
        %v1022 = vsel %vm271, %v967, 0
        %v1025 = vsel %vm271, %v968, 0
        %v1028 = vsel %vm271, %v969, 0
        %v1031 = vsel %vm271, %v970, 0
        %v1034 = vsel %vm271, %v971, 0
        %v1037 = vsel %vm271, %v972, 0
        %v1040 = vsel %vm271, %v973, 0
        %v1043 = vsel %vm271, %v974, 0
        %v1046 = vsel %vm271, %v975, 0
        %v1049 = vsel %vm271, %v976, 0
        %v1052 = vsel %vm271, %v977, 0
        %v1055 = vsel %vm271, %v978, 0
        %v1058 = vsel %vm271, %v979, 0
        %v1061 = vsel %vm271, %v980, 0
        %v1064 = vsel %vm271, %v981, 0
        %v1067 = vsel %vm271, %v982, 0
        %v1070 = vsel %vm271, %v983, 0
        %v1073 = vsel %vm271, %v984, 0
        %v1076 = vsel %vm271, %v985, 0
        %v1079 = vsel %vm271, %v986, 0
        %v1082 = vsel %vm271, %v987, 0
        %v1085 = vsel %vm271, %v988, 0
        %1087 = vmatprep.subr.mxu0 0.0
        %v1088 = vand.u32 %v989, 4294901760
        %1089 = vmatpush1.msra.mxu0 %v1088
        %1090 = vmatprep.subr.mxu0 0.0
        %v1091 = vand.u32 %v990, 4294901760
        %1092 = vmatpush1.msra.mxu0 %v1091
        %1093 = vmatprep.subr.mxu0 0.0
        %1094 = vmatpush1.msra.mxu0 0.0
        %1095 = vmatprep.subr.mxu0 0.0
        %1096 = vmatpush1.msra.mxu0 0.0
        %1097 = vmatprep.subr.mxu0 0.0
        %1098 = vmatpush1.msra.mxu0 0.0
        %1099 = vmatprep.subr.mxu0 0.0
        %1100 = vmatpush1.msra.mxu0 0.0
        %1101 = vmatprep.subr.mxu0 0.0
        %1102 = vmatpush1.msra.mxu0 0.0
        %1103 = vmatprep.subr.mxu0 0.0
        %1104 = vmatpush1.msra.mxu0 0.0
        %1105 = vmatprep.subr.mxu0 0.0
        %1106 = vmatpush1.msra.mxu0 0.0
        %1107 = vmatprep.subr.mxu0 0.0
        %1108 = vmatpush1.msra.mxu0 0.0
        %1109 = vmatprep.subr.mxu0 0.0
        %1110 = vmatpush1.msra.mxu0 0.0
        %1111 = vmatprep.subr.mxu0 0.0
        %1112 = vmatpush1.msra.mxu0 0.0
        %1113 = vmatprep.subr.mxu0 0.0
        %1114 = vmatpush1.msra.mxu0 0.0
        %1115 = vmatprep.subr.mxu0 0.0
        %1116 = vmatpush1.msra.mxu0 0.0
        %1117 = vmatprep.subr.mxu0 0.0
        %1118 = vmatpush1.msra.mxu0 0.0
        %1119 = vmatprep.subr.mxu0 0.0
        %1120 = vmatpush1.msra.mxu0 0.0
        %1121 = vmatprep.subr.mxu0 0.0
        %1122 = vmatpush1.msra.mxu0 0.0
        %1123 = vmatprep.subr.mxu0 0.0
        %1124 = vmatpush1.msra.mxu0 0.0
        %1125 = vmatprep.subr.mxu0 0.0
        %1126 = vmatpush1.msra.mxu0 0.0
        %1127 = vmatprep.subr.mxu0 0.0
        %1128 = vmatpush1.msra.mxu0 0.0
        %1129 = vmatprep.subr.mxu0 0.0
        %1130 = vmatpush1.msra.mxu0 0.0
        %1131 = vmatprep.subr.mxu0 0.0
        %1132 = vmatpush1.msra.mxu0 0.0
        %1133 = vmatprep.subr.mxu0 0.0
        %1134 = vmatpush1.msra.mxu0 0.0
        %1135 = vmatprep.subr.mxu0 0.0
        %1136 = vmatpush1.msra.mxu0 0.0
        %1137 = vmatprep.subr.mxu0 0.0
        %1138 = vmatpush1.msra.mxu0 0.0
        %1139 = vmatprep.subr.mxu0 0.0
        %1140 = vmatpush1.msra.mxu0 0.0
        %1141 = vmatprep.subr.mxu0 0.0
        %1142 = vmatpush1.msra.mxu0 0.0
        %1143 = vmatprep.subr.mxu0 0.0
        %1144 = vmatpush1.msra.mxu0 0.0
        %1145 = vmatprep.subr.mxu0 0.0
        %1146 = vmatpush1.msra.mxu0 0.0
        %1147 = vmatprep.subr.mxu0 0.0
        %1148 = vmatpush1.msra.mxu0 0.0
        %1149 = vmatprep.subr.mxu0 0.0
        %1150 = vmatpush1.msra.mxu0 0.0
        %1151 = vmatprep.subr.mxu0 0.0
        %1152 = vmatpush1.msra.mxu0 0.0
        %1153 = vmatprep.mubr.f32.mxu0 0.0
        %v1154 = vand.u32 %v992, 4294901760
        %v1155 = vsub.f32 %v992, %v1154
        %v1156 = vand.u32 %v1155, 4294901760
        %v1157 = vsub.f32 %v1155, %v1156
        %v1158 = vand.u32 %v1157, 4294901760
        %1159 = vmatmul.mubr.f32.gmra.mrb[0].mxu0 %v1158
        %v1160 = vpop.f32.mrb[0].mxu0
        %v1161 = vadd.f32 0.0, %v1160
        %v1162 = vpop.f32.mrb[0].mxu0
        %1163 = vmatprep.mubr.f32.mxu0 0.0
        %v1164 = vand.u32 %v995, 4294901760
        %v1165 = vsub.f32 %v995, %v1164
        %v1166 = vand.u32 %v1165, 4294901760
        %v1167 = vsub.f32 %v1165, %v1166
        %v1168 = vand.u32 %v1167, 4294901760
        %1169 = vmatmul.mubr.f32.gmra.mrb[0].mxu0 %v1168
        %v1170 = vpop.f32.mrb[0].mxu0
        %v1171 = vadd.f32 0.0, %v1170
        %v1172 = vpop.f32.mrb[0].mxu0
        %1173 = vmatprep.mubr.f32.mxu0 0.0
        %v1174 = vand.u32 %v998, 4294901760
        %v1175 = vsub.f32 %v998, %v1174
        %v1176 = vand.u32 %v1175, 4294901760
        %v1177 = vsub.f32 %v1175, %v1176
        %v1178 = vand.u32 %v1177, 4294901760
        %1179 = vmatmul.mubr.f32.gmra.mrb[0].mxu0 %v1178
        %v1180 = vpop.f32.mrb[0].mxu0
        %v1181 = vadd.f32 0.0, %v1180
        %v1182 = vpop.f32.mrb[0].mxu0
        %1183 = vmatprep.mubr.f32.mxu0 0.0
        %v1184 = vand.u32 %v1001, 4294901760
        %v1185 = vsub.f32 %v1001, %v1184
        %v1186 = vand.u32 %v1185, 4294901760
        %v1187 = vsub.f32 %v1185, %v1186
        %v1188 = vand.u32 %v1187, 4294901760
        %1189 = vmatmul.mubr.f32.gmra.mrb[0].mxu0 %v1188
        %v1190 = vpop.f32.mrb[0].mxu0
        %v1191 = vadd.f32 0.0, %v1190
        %v1192 = vpop.f32.mrb[0].mxu0
        %1193 = vmatprep.mubr.f32.mxu0 0.0
        %v1194 = vand.u32 %v1004, 4294901760
        %v1195 = vsub.f32 %v1004, %v1194
        %v1196 = vand.u32 %v1195, 4294901760
        %v1197 = vsub.f32 %v1195, %v1196
        %v1198 = vand.u32 %v1197, 4294901760
        %1199 = vmatmul.mubr.f32.gmra.mrb[0].mxu0 %v1198
        %v1200 = vpop.f32.mrb[0].mxu0
        %v1201 = vadd.f32 0.0, %v1200
        %v1202 = vpop.f32.mrb[0].mxu0
        %1203 = vmatprep.mubr.f32.mxu0 0.0
        %v1204 = vand.u32 %v1007, 4294901760
        %v1205 = vsub.f32 %v1007, %v1204
        %v1206 = vand.u32 %v1205, 4294901760
        %v1207 = vsub.f32 %v1205, %v1206
        %v1208 = vand.u32 %v1207, 4294901760
        %1209 = vmatmul.mubr.f32.gmra.mrb[0].mxu0 %v1208
        %v1210 = vpop.f32.mrb[0].mxu0
        %v1211 = vadd.f32 0.0, %v1210
        %v1212 = vpop.f32.mrb[0].mxu0
        %1213 = vmatprep.mubr.f32.mxu0 0.0
        %v1214 = vand.u32 %v1010, 4294901760
        %v1215 = vsub.f32 %v1010, %v1214
        %v1216 = vand.u32 %v1215, 4294901760
        %v1217 = vsub.f32 %v1215, %v1216
        %v1218 = vand.u32 %v1217, 4294901760
        %1219 = vmatmul.mubr.f32.gmra.mrb[0].mxu0 %v1218
        %v1220 = vpop.f32.mrb[0].mxu0
        %v1221 = vadd.f32 0.0, %v1220
        %v1222 = vpop.f32.mrb[0].mxu0
        %1223 = vmatprep.mubr.f32.mxu0 0.0
        %v1224 = vand.u32 %v1013, 4294901760
        %v1225 = vsub.f32 %v1013, %v1224
        %v1226 = vand.u32 %v1225, 4294901760
        %v1227 = vsub.f32 %v1225, %v1226
        %v1228 = vand.u32 %v1227, 4294901760
        %1229 = vmatmul.mubr.f32.gmra.mrb[0].mxu0 %v1228
        %v1230 = vpop.f32.mrb[0].mxu0
        %v1231 = vadd.f32 0.0, %v1230
        %v1232 = vpop.f32.mrb[0].mxu0
        %1233 = vmatprep.mubr.f32.mxu0 0.0
        %v1234 = vand.u32 %v1016, 4294901760
        %v1235 = vsub.f32 %v1016, %v1234
        %v1236 = vand.u32 %v1235, 4294901760
        %v1237 = vsub.f32 %v1235, %v1236
        %v1238 = vand.u32 %v1237, 4294901760
        %1239 = vmatmul.mubr.f32.gmra.mrb[0].mxu0 %v1238
        %v1240 = vpop.f32.mrb[0].mxu0
        %v1241 = vadd.f32 0.0, %v1240
        %v1242 = vpop.f32.mrb[0].mxu0
        %1243 = vmatprep.mubr.f32.mxu0 0.0
        %v1244 = vand.u32 %v1019, 4294901760
        %v1245 = vsub.f32 %v1019, %v1244
        %v1246 = vand.u32 %v1245, 4294901760
        %v1247 = vsub.f32 %v1245, %v1246
        %v1248 = vand.u32 %v1247, 4294901760
        %1249 = vmatmul.mubr.f32.gmra.mrb[0].mxu0 %v1248
        %v1250 = vpop.f32.mrb[0].mxu0
        %v1251 = vadd.f32 0.0, %v1250
        %v1252 = vpop.f32.mrb[0].mxu0
        %1253 = vmatprep.mubr.f32.mxu0 0.0
        %v1254 = vand.u32 %v1022, 4294901760
        %v1255 = vsub.f32 %v1022, %v1254
        %v1256 = vand.u32 %v1255, 4294901760
        %v1257 = vsub.f32 %v1255, %v1256
        %v1258 = vand.u32 %v1257, 4294901760
        %1259 = vmatmul.mubr.f32.gmra.mrb[0].mxu0 %v1258
        %v1260 = vpop.f32.mrb[0].mxu0
        %v1261 = vadd.f32 0.0, %v1260
        %v1262 = vpop.f32.mrb[0].mxu0
        %1263 = vmatprep.mubr.f32.mxu0 0.0
        %v1264 = vand.u32 %v1025, 4294901760
        %v1265 = vsub.f32 %v1025, %v1264
        %v1266 = vand.u32 %v1265, 4294901760
        %v1267 = vsub.f32 %v1265, %v1266
        %v1268 = vand.u32 %v1267, 4294901760
        %1269 = vmatmul.mubr.f32.gmra.mrb[0].mxu0 %v1268
        %v1270 = vpop.f32.mrb[0].mxu0
        %v1271 = vadd.f32 0.0, %v1270
        %v1272 = vpop.f32.mrb[0].mxu0
        %1273 = vmatprep.mubr.f32.mxu0 0.0
        %v1274 = vand.u32 %v1028, 4294901760
        %v1275 = vsub.f32 %v1028, %v1274
        %v1276 = vand.u32 %v1275, 4294901760
        %v1277 = vsub.f32 %v1275, %v1276
        %v1278 = vand.u32 %v1277, 4294901760
        %1279 = vmatmul.mubr.f32.gmra.mrb[0].mxu0 %v1278
        %v1280 = vpop.f32.mrb[0].mxu0
        %v1281 = vadd.f32 0.0, %v1280
        %v1282 = vpop.f32.mrb[0].mxu0
        %1283 = vmatprep.mubr.f32.mxu0 0.0
        %v1284 = vand.u32 %v1031, 4294901760
        %v1285 = vsub.f32 %v1031, %v1284
        %v1286 = vand.u32 %v1285, 4294901760
        %v1287 = vsub.f32 %v1285, %v1286
        %v1288 = vand.u32 %v1287, 4294901760
        %1289 = vmatmul.mubr.f32.gmra.mrb[0].mxu0 %v1288
        %v1290 = vpop.f32.mrb[0].mxu0
        %v1291 = vadd.f32 0.0, %v1290
        %v1292 = vpop.f32.mrb[0].mxu0
        %1293 = vmatprep.mubr.f32.mxu0 0.0
        %v1294 = vand.u32 %v1034, 4294901760
        %v1295 = vsub.f32 %v1034, %v1294
        %v1296 = vand.u32 %v1295, 4294901760
        %v1297 = vsub.f32 %v1295, %v1296
        %v1298 = vand.u32 %v1297, 4294901760
        %1299 = vmatmul.mubr.f32.gmra.mrb[0].mxu0 %v1298
        %v1300 = vpop.f32.mrb[0].mxu0
        %v1301 = vadd.f32 0.0, %v1300
        %v1302 = vpop.f32.mrb[0].mxu0
        %1303 = vmatprep.mubr.f32.mxu0 0.0
        %v1304 = vand.u32 %v1037, 4294901760
        %v1305 = vsub.f32 %v1037, %v1304
        %v1306 = vand.u32 %v1305, 4294901760
        %v1307 = vsub.f32 %v1305, %v1306
        %v1308 = vand.u32 %v1307, 4294901760
        %1309 = vmatmul.mubr.f32.gmra.mrb[0].mxu0 %v1308
        %v1310 = vpop.f32.mrb[0].mxu0
        %v1311 = vadd.f32 0.0, %v1310
        %v1312 = vpop.f32.mrb[0].mxu0
        %1313 = vmatprep.mubr.f32.mxu0 0.0
        %v1314 = vand.u32 %v1040, 4294901760
        %v1315 = vsub.f32 %v1040, %v1314
        %v1316 = vand.u32 %v1315, 4294901760
        %v1317 = vsub.f32 %v1315, %v1316
        %v1318 = vand.u32 %v1317, 4294901760
        %1319 = vmatmul.mubr.f32.gmra.mrb[0].mxu0 %v1318
        %v1320 = vpop.f32.mrb[0].mxu0
        %v1321 = vadd.f32 0.0, %v1320
        %v1322 = vpop.f32.mrb[0].mxu0
        %1323 = vmatprep.mubr.f32.mxu0 0.0
        %v1324 = vand.u32 %v1043, 4294901760
        %v1325 = vsub.f32 %v1043, %v1324
        %v1326 = vand.u32 %v1325, 4294901760
        %v1327 = vsub.f32 %v1325, %v1326
        %v1328 = vand.u32 %v1327, 4294901760
        %1329 = vmatmul.mubr.f32.gmra.mrb[0].mxu0 %v1328
        %v1330 = vpop.f32.mrb[0].mxu0
        %v1331 = vadd.f32 0.0, %v1330
        %v1332 = vpop.f32.mrb[0].mxu0
        %1333 = vmatprep.mubr.f32.mxu0 0.0
        %v1334 = vand.u32 %v1046, 4294901760
        %v1335 = vsub.f32 %v1046, %v1334
        %v1336 = vand.u32 %v1335, 4294901760
        %v1337 = vsub.f32 %v1335, %v1336
        %v1338 = vand.u32 %v1337, 4294901760
        %1339 = vmatmul.mubr.f32.gmra.mrb[0].mxu0 %v1338
        %v1340 = vpop.f32.mrb[0].mxu0
        %v1341 = vadd.f32 0.0, %v1340
        %v1342 = vpop.f32.mrb[0].mxu0
        %1343 = vmatprep.mubr.f32.mxu0 0.0
        %v1344 = vand.u32 %v1049, 4294901760
        %v1345 = vsub.f32 %v1049, %v1344
        %v1346 = vand.u32 %v1345, 4294901760
        %v1347 = vsub.f32 %v1345, %v1346
        %v1348 = vand.u32 %v1347, 4294901760
        %1349 = vmatmul.mubr.f32.gmra.mrb[0].mxu0 %v1348
        %v1350 = vpop.f32.mrb[0].mxu0
        %v1351 = vadd.f32 0.0, %v1350
        %v1352 = vpop.f32.mrb[0].mxu0
        %1353 = vmatprep.mubr.f32.mxu0 0.0
        %v1354 = vand.u32 %v1052, 4294901760
        %v1355 = vsub.f32 %v1052, %v1354
        %v1356 = vand.u32 %v1355, 4294901760
        %v1357 = vsub.f32 %v1355, %v1356
        %v1358 = vand.u32 %v1357, 4294901760
        %1359 = vmatmul.mubr.f32.gmra.mrb[0].mxu0 %v1358
        %v1360 = vpop.f32.mrb[0].mxu0
        %v1361 = vadd.f32 0.0, %v1360
        %v1362 = vpop.f32.mrb[0].mxu0
        %1363 = vmatprep.mubr.f32.mxu0 0.0
        %v1364 = vand.u32 %v1055, 4294901760
        %v1365 = vsub.f32 %v1055, %v1364
        %v1366 = vand.u32 %v1365, 4294901760
        %v1367 = vsub.f32 %v1365, %v1366
        %v1368 = vand.u32 %v1367, 4294901760
        %1369 = vmatmul.mubr.f32.gmra.mrb[0].mxu0 %v1368
        %v1370 = vpop.f32.mrb[0].mxu0
        %v1371 = vadd.f32 0.0, %v1370
        %v1372 = vpop.f32.mrb[0].mxu0
        %1373 = vmatprep.mubr.f32.mxu0 0.0
        %v1374 = vand.u32 %v1058, 4294901760
        %v1375 = vsub.f32 %v1058, %v1374
        %v1376 = vand.u32 %v1375, 4294901760
        %v1377 = vsub.f32 %v1375, %v1376
        %v1378 = vand.u32 %v1377, 4294901760
        %1379 = vmatmul.mubr.f32.gmra.mrb[0].mxu0 %v1378
        %v1380 = vpop.f32.mrb[0].mxu0
        %v1381 = vadd.f32 0.0, %v1380
        %v1382 = vpop.f32.mrb[0].mxu0
        %1383 = vmatprep.mubr.f32.mxu0 0.0
        %v1384 = vand.u32 %v1061, 4294901760
        %v1385 = vsub.f32 %v1061, %v1384
        %v1386 = vand.u32 %v1385, 4294901760
        %v1387 = vsub.f32 %v1385, %v1386
        %v1388 = vand.u32 %v1387, 4294901760
        %1389 = vmatmul.mubr.f32.gmra.mrb[0].mxu0 %v1388
        %v1390 = vpop.f32.mrb[0].mxu0
        %v1391 = vadd.f32 0.0, %v1390
        %v1392 = vpop.f32.mrb[0].mxu0
        %1393 = vmatprep.mubr.f32.mxu0 0.0
        %v1394 = vand.u32 %v1064, 4294901760
        %v1395 = vsub.f32 %v1064, %v1394
        %v1396 = vand.u32 %v1395, 4294901760
        %v1397 = vsub.f32 %v1395, %v1396
        %v1398 = vand.u32 %v1397, 4294901760
        %1399 = vmatmul.mubr.f32.gmra.mrb[0].mxu0 %v1398
        %v1400 = vpop.f32.mrb[0].mxu0
        %v1401 = vadd.f32 0.0, %v1400
        %v1402 = vpop.f32.mrb[0].mxu0
        %1403 = vmatprep.mubr.f32.mxu0 0.0
        %v1404 = vand.u32 %v1067, 4294901760
        %v1405 = vsub.f32 %v1067, %v1404
        %v1406 = vand.u32 %v1405, 4294901760
        %v1407 = vsub.f32 %v1405, %v1406
        %v1408 = vand.u32 %v1407, 4294901760
        %1409 = vmatmul.mubr.f32.gmra.mrb[0].mxu0 %v1408
        %v1410 = vpop.f32.mrb[0].mxu0
        %v1411 = vadd.f32 0.0, %v1410
        %v1412 = vpop.f32.mrb[0].mxu0
        %1413 = vmatprep.mubr.f32.mxu0 0.0
        %v1414 = vand.u32 %v1070, 4294901760
        %v1415 = vsub.f32 %v1070, %v1414
        %v1416 = vand.u32 %v1415, 4294901760
        %v1417 = vsub.f32 %v1415, %v1416
        %v1418 = vand.u32 %v1417, 4294901760
        %1419 = vmatmul.mubr.f32.gmra.mrb[0].mxu0 %v1418
        %v1420 = vpop.f32.mrb[0].mxu0
        %v1421 = vadd.f32 0.0, %v1420
        %v1422 = vpop.f32.mrb[0].mxu0
        %1423 = vmatprep.mubr.f32.mxu0 0.0
        %v1424 = vand.u32 %v1073, 4294901760
        %v1425 = vsub.f32 %v1073, %v1424
        %v1426 = vand.u32 %v1425, 4294901760
        %v1427 = vsub.f32 %v1425, %v1426
        %v1428 = vand.u32 %v1427, 4294901760
        %1429 = vmatmul.mubr.f32.gmra.mrb[0].mxu0 %v1428
        %v1430 = vpop.f32.mrb[0].mxu0
        %v1431 = vadd.f32 0.0, %v1430
        %v1432 = vpop.f32.mrb[0].mxu0
        %1433 = vmatprep.mubr.f32.mxu0 0.0
        %v1434 = vand.u32 %v1076, 4294901760
        %v1435 = vsub.f32 %v1076, %v1434
        %v1436 = vand.u32 %v1435, 4294901760
        %v1437 = vsub.f32 %v1435, %v1436
        %v1438 = vand.u32 %v1437, 4294901760
        %1439 = vmatmul.mubr.f32.gmra.mrb[0].mxu0 %v1438
        %v1440 = vpop.f32.mrb[0].mxu0
        %v1441 = vadd.f32 0.0, %v1440
        %v1442 = vpop.f32.mrb[0].mxu0
        %1443 = vmatprep.mubr.f32.mxu0 0.0
        %v1444 = vand.u32 %v1079, 4294901760
        %v1445 = vsub.f32 %v1079, %v1444
        %v1446 = vand.u32 %v1445, 4294901760
        %v1447 = vsub.f32 %v1445, %v1446
        %v1448 = vand.u32 %v1447, 4294901760
        %1449 = vmatmul.mubr.f32.gmra.mrb[0].mxu0 %v1448
        %v1450 = vpop.f32.mrb[0].mxu0
        %v1451 = vadd.f32 0.0, %v1450
        %v1452 = vpop.f32.mrb[0].mxu0
        %1453 = vmatprep.mubr.f32.mxu0 0.0
        %v1454 = vand.u32 %v1082, 4294901760
        %v1455 = vsub.f32 %v1082, %v1454
        %v1456 = vand.u32 %v1455, 4294901760
        %v1457 = vsub.f32 %v1455, %v1456
        %v1458 = vand.u32 %v1457, 4294901760
        %1459 = vmatmul.mubr.f32.gmra.mrb[0].mxu0 %v1458
        %v1460 = vpop.f32.mrb[0].mxu0
        %v1461 = vadd.f32 0.0, %v1460
        %v1462 = vpop.f32.mrb[0].mxu0
        %1463 = vmatprep.mubr.f32.mxu0 0.0
        %v1464 = vand.u32 %v1085, 4294901760
        %v1465 = vsub.f32 %v1085, %v1464
        %v1466 = vand.u32 %v1465, 4294901760
        %v1467 = vsub.f32 %v1465, %v1466
        %v1468 = vand.u32 %v1467, 4294901760
        %1469 = vmatmul.mubr.f32.gmra.mrb[0].mxu0 %v1468
        %v1470 = vpop.f32.mrb[0].mxu0
        %v1471 = vadd.f32 0.0, %v1470
        %v1472 = vpop.f32.mrb[0].mxu0
        %1473 = vdwg.mxu0
        %1474 = vmatprep.subr.mxu0 0.0
        %v1475 = vand.u32 %v989, 4294901760
        %v1476 = vsub.f32 %v989, %v1475
        %v1477 = vand.u32 %v1476, 4294901760
        %v1478 = vsub.f32 %v1476, %v1477
        %v1479 = vand.u32 %v1478, 4294901760
        %1480 = vmatpush1.msra.mxu0 %v1479
        %1481 = vmatprep.subr.mxu0 0.0
        %v1482 = vand.u32 %v990, 4294901760
        %v1483 = vsub.f32 %v990, %v1482
        %v1484 = vand.u32 %v1483, 4294901760
        %v1485 = vsub.f32 %v1483, %v1484
        %v1486 = vand.u32 %v1485, 4294901760
        %1487 = vmatpush1.msra.mxu0 %v1486
        %1488 = vmatprep.subr.mxu0 0.0
        %1489 = vmatpush1.msra.mxu0 0.0
        %1490 = vmatprep.subr.mxu0 0.0
        %1491 = vmatpush1.msra.mxu0 0.0
        %1492 = vmatprep.subr.mxu0 0.0
        %1493 = vmatpush1.msra.mxu0 0.0
        %1494 = vmatprep.subr.mxu0 0.0
        %1495 = vmatpush1.msra.mxu0 0.0
        %1496 = vmatprep.subr.mxu0 0.0
        %1497 = vmatpush1.msra.mxu0 0.0
        %1498 = vmatprep.subr.mxu0 0.0
        %1499 = vmatpush1.msra.mxu0 0.0
        %1500 = vmatprep.subr.mxu0 0.0
        %1501 = vmatpush1.msra.mxu0 0.0
        %1502 = vmatprep.subr.mxu0 0.0
        %1503 = vmatpush1.msra.mxu0 0.0
        %1504 = vmatprep.subr.mxu0 0.0
        %1505 = vmatpush1.msra.mxu0 0.0
        %1506 = vmatprep.subr.mxu0 0.0
        %1507 = vmatpush1.msra.mxu0 0.0
        %1508 = vmatprep.subr.mxu0 0.0
        %1509 = vmatpush1.msra.mxu0 0.0
        %1510 = vmatprep.subr.mxu0 0.0
        %1511 = vmatpush1.msra.mxu0 0.0
        %1512 = vmatprep.subr.mxu0 0.0
        %1513 = vmatpush1.msra.mxu0 0.0
        %1514 = vmatprep.subr.mxu0 0.0
        %1515 = vmatpush1.msra.mxu0 0.0
        %1516 = vmatprep.subr.mxu0 0.0
        %1517 = vmatpush1.msra.mxu0 0.0
        %1518 = vmatprep.subr.mxu0 0.0
        %1519 = vmatpush1.msra.mxu0 0.0
        %1520 = vmatprep.subr.mxu0 0.0
        %1521 = vmatpush1.msra.mxu0 0.0
        %1522 = vmatprep.subr.mxu0 0.0
        %1523 = vmatpush1.msra.mxu0 0.0
        %1524 = vmatprep.subr.mxu0 0.0
        %1525 = vmatpush1.msra.mxu0 0.0
        %1526 = vmatprep.subr.mxu0 0.0
        %1527 = vmatpush1.msra.mxu0 0.0
        %1528 = vmatprep.subr.mxu0 0.0
        %1529 = vmatpush1.msra.mxu0 0.0
        %1530 = vmatprep.subr.mxu0 0.0
        %1531 = vmatpush1.msra.mxu0 0.0
        %1532 = vmatprep.subr.mxu0 0.0
        %1533 = vmatpush1.msra.mxu0 0.0
        %1534 = vmatprep.subr.mxu0 0.0
        %1535 = vmatpush1.msra.mxu0 0.0
        %1536 = vmatprep.subr.mxu0 0.0
        %1537 = vmatpush1.msra.mxu0 0.0
        %1538 = vmatprep.subr.mxu0 0.0
        %1539 = vmatpush1.msra.mxu0 0.0
        %1540 = vmatprep.subr.mxu0 0.0
        %1541 = vmatpush1.msra.mxu0 0.0
        %1542 = vmatprep.subr.mxu0 0.0
        %1543 = vmatpush1.msra.mxu0 0.0
        %1544 = vmatprep.subr.mxu0 0.0
        %1545 = vmatpush1.msra.mxu0 0.0
        %1546 = vmatprep.subr.mxu0 0.0
        %1547 = vmatpush1.msra.mxu0 0.0
        %1548 = vmatprep.mubr.f32.mxu0 0.0
        %v1549 = vand.u32 %v992, 4294901760
        %1550 = vmatmul.mubr.f32.gmra.mrb[0].mxu0 %v1549
        %v1551 = vpop.f32.mrb[0].mxu0
        %v1552 = vadd.f32 %v1161, %v1551
        %v1553 = vpop.f32.mrb[0].mxu0
        %1554 = vmatprep.mubr.f32.mxu0 0.0
        %v1555 = vand.u32 %v995, 4294901760
        %1556 = vmatmul.mubr.f32.gmra.mrb[0].mxu0 %v1555
        %v1557 = vpop.f32.mrb[0].mxu0
        %v1558 = vadd.f32 %v1171, %v1557
        %v1559 = vpop.f32.mrb[0].mxu0
        %1560 = vmatprep.mubr.f32.mxu0 0.0
        %v1561 = vand.u32 %v998, 4294901760
        %1562 = vmatmul.mubr.f32.gmra.mrb[0].mxu0 %v1561
        %v1563 = vpop.f32.mrb[0].mxu0
        %v1564 = vadd.f32 %v1181, %v1563
        %v1565 = vpop.f32.mrb[0].mxu0
        %1566 = vmatprep.mubr.f32.mxu0 0.0
        %v1567 = vand.u32 %v1001, 4294901760
        %1568 = vmatmul.mubr.f32.gmra.mrb[0].mxu0 %v1567
        %v1569 = vpop.f32.mrb[0].mxu0
        %v1570 = vadd.f32 %v1191, %v1569
        %v1571 = vpop.f32.mrb[0].mxu0
        %1572 = vmatprep.mubr.f32.mxu0 0.0
        %v1573 = vand.u32 %v1004, 4294901760
        %1574 = vmatmul.mubr.f32.gmra.mrb[0].mxu0 %v1573
        %v1575 = vpop.f32.mrb[0].mxu0
        %v1576 = vadd.f32 %v1201, %v1575
        %v1577 = vpop.f32.mrb[0].mxu0
        %1578 = vmatprep.mubr.f32.mxu0 0.0
        %v1579 = vand.u32 %v1007, 4294901760
        %1580 = vmatmul.mubr.f32.gmra.mrb[0].mxu0 %v1579
        %v1581 = vpop.f32.mrb[0].mxu0
        %v1582 = vadd.f32 %v1211, %v1581
        %v1583 = vpop.f32.mrb[0].mxu0
        %1584 = vmatprep.mubr.f32.mxu0 0.0
        %v1585 = vand.u32 %v1010, 4294901760
        %1586 = vmatmul.mubr.f32.gmra.mrb[0].mxu0 %v1585
        %v1587 = vpop.f32.mrb[0].mxu0
        %v1588 = vadd.f32 %v1221, %v1587
        %v1589 = vpop.f32.mrb[0].mxu0
        %1590 = vmatprep.mubr.f32.mxu0 0.0
        %v1591 = vand.u32 %v1013, 4294901760
        %1592 = vmatmul.mubr.f32.gmra.mrb[0].mxu0 %v1591
        %v1593 = vpop.f32.mrb[0].mxu0
        %v1594 = vadd.f32 %v1231, %v1593
        %v1595 = vpop.f32.mrb[0].mxu0
        %1596 = vmatprep.mubr.f32.mxu0 0.0
        %v1597 = vand.u32 %v1016, 4294901760
        %1598 = vmatmul.mubr.f32.gmra.mrb[0].mxu0 %v1597
        %v1599 = vpop.f32.mrb[0].mxu0
        %v1600 = vadd.f32 %v1241, %v1599
        %v1601 = vpop.f32.mrb[0].mxu0
        %1602 = vmatprep.mubr.f32.mxu0 0.0
        %v1603 = vand.u32 %v1019, 4294901760
        %1604 = vmatmul.mubr.f32.gmra.mrb[0].mxu0 %v1603
        %v1605 = vpop.f32.mrb[0].mxu0
        %v1606 = vadd.f32 %v1251, %v1605
        %v1607 = vpop.f32.mrb[0].mxu0
        %1608 = vmatprep.mubr.f32.mxu0 0.0
        %v1609 = vand.u32 %v1022, 4294901760
        %1610 = vmatmul.mubr.f32.gmra.mrb[0].mxu0 %v1609
        %v1611 = vpop.f32.mrb[0].mxu0
        %v1612 = vadd.f32 %v1261, %v1611
        %v1613 = vpop.f32.mrb[0].mxu0
        %1614 = vmatprep.mubr.f32.mxu0 0.0
        %v1615 = vand.u32 %v1025, 4294901760
        %1616 = vmatmul.mubr.f32.gmra.mrb[0].mxu0 %v1615
        %v1617 = vpop.f32.mrb[0].mxu0
        %v1618 = vadd.f32 %v1271, %v1617
        %v1619 = vpop.f32.mrb[0].mxu0
        %1620 = vmatprep.mubr.f32.mxu0 0.0
        %v1621 = vand.u32 %v1028, 4294901760
        %1622 = vmatmul.mubr.f32.gmra.mrb[0].mxu0 %v1621
        %v1623 = vpop.f32.mrb[0].mxu0
        %v1624 = vadd.f32 %v1281, %v1623
        %v1625 = vpop.f32.mrb[0].mxu0
        %1626 = vmatprep.mubr.f32.mxu0 0.0
        %v1627 = vand.u32 %v1031, 4294901760
        %1628 = vmatmul.mubr.f32.gmra.mrb[0].mxu0 %v1627
        %v1629 = vpop.f32.mrb[0].mxu0
        %v1630 = vadd.f32 %v1291, %v1629
        %v1631 = vpop.f32.mrb[0].mxu0
        %1632 = vmatprep.mubr.f32.mxu0 0.0
        %v1633 = vand.u32 %v1034, 4294901760
        %1634 = vmatmul.mubr.f32.gmra.mrb[0].mxu0 %v1633
        %v1635 = vpop.f32.mrb[0].mxu0
        %v1636 = vadd.f32 %v1301, %v1635
        %v1637 = vpop.f32.mrb[0].mxu0
        %1638 = vmatprep.mubr.f32.mxu0 0.0
        %v1639 = vand.u32 %v1037, 4294901760
        %1640 = vmatmul.mubr.f32.gmra.mrb[0].mxu0 %v1639
        %v1641 = vpop.f32.mrb[0].mxu0
        %v1642 = vadd.f32 %v1311, %v1641
        %v1643 = vpop.f32.mrb[0].mxu0
        %1644 = vmatprep.mubr.f32.mxu0 0.0
        %v1645 = vand.u32 %v1040, 4294901760
        %1646 = vmatmul.mubr.f32.gmra.mrb[0].mxu0 %v1645
        %v1647 = vpop.f32.mrb[0].mxu0
        %v1648 = vadd.f32 %v1321, %v1647
        %v1649 = vpop.f32.mrb[0].mxu0
        %1650 = vmatprep.mubr.f32.mxu0 0.0
        %v1651 = vand.u32 %v1043, 4294901760
        %1652 = vmatmul.mubr.f32.gmra.mrb[0].mxu0 %v1651
        %v1653 = vpop.f32.mrb[0].mxu0
        %v1654 = vadd.f32 %v1331, %v1653
        %v1655 = vpop.f32.mrb[0].mxu0
        %1656 = vmatprep.mubr.f32.mxu0 0.0
        %v1657 = vand.u32 %v1046, 4294901760
        %1658 = vmatmul.mubr.f32.gmra.mrb[0].mxu0 %v1657
        %v1659 = vpop.f32.mrb[0].mxu0
        %v1660 = vadd.f32 %v1341, %v1659
        %v1661 = vpop.f32.mrb[0].mxu0
        %1662 = vmatprep.mubr.f32.mxu0 0.0
        %v1663 = vand.u32 %v1049, 4294901760
        %1664 = vmatmul.mubr.f32.gmra.mrb[0].mxu0 %v1663
        %v1665 = vpop.f32.mrb[0].mxu0
        %v1666 = vadd.f32 %v1351, %v1665
        %v1667 = vpop.f32.mrb[0].mxu0
        %1668 = vmatprep.mubr.f32.mxu0 0.0
        %v1669 = vand.u32 %v1052, 4294901760
        %1670 = vmatmul.mubr.f32.gmra.mrb[0].mxu0 %v1669
        %v1671 = vpop.f32.mrb[0].mxu0
        %v1672 = vadd.f32 %v1361, %v1671
        %v1673 = vpop.f32.mrb[0].mxu0
        %1674 = vmatprep.mubr.f32.mxu0 0.0
        %v1675 = vand.u32 %v1055, 4294901760
        %1676 = vmatmul.mubr.f32.gmra.mrb[0].mxu0 %v1675
        %v1677 = vpop.f32.mrb[0].mxu0
        %v1678 = vadd.f32 %v1371, %v1677
        %v1679 = vpop.f32.mrb[0].mxu0
        %1680 = vmatprep.mubr.f32.mxu0 0.0
        %v1681 = vand.u32 %v1058, 4294901760
        %1682 = vmatmul.mubr.f32.gmra.mrb[0].mxu0 %v1681
        %v1683 = vpop.f32.mrb[0].mxu0
        %v1684 = vadd.f32 %v1381, %v1683
        %v1685 = vpop.f32.mrb[0].mxu0
        %1686 = vmatprep.mubr.f32.mxu0 0.0
        %v1687 = vand.u32 %v1061, 4294901760
        %1688 = vmatmul.mubr.f32.gmra.mrb[0].mxu0 %v1687
        %v1689 = vpop.f32.mrb[0].mxu0
        %v1690 = vadd.f32 %v1391, %v1689
        %v1691 = vpop.f32.mrb[0].mxu0
        %1692 = vmatprep.mubr.f32.mxu0 0.0
        %v1693 = vand.u32 %v1064, 4294901760
        %1694 = vmatmul.mubr.f32.gmra.mrb[0].mxu0 %v1693
        %v1695 = vpop.f32.mrb[0].mxu0
        %v1696 = vadd.f32 %v1401, %v1695
        %v1697 = vpop.f32.mrb[0].mxu0
        %1698 = vmatprep.mubr.f32.mxu0 0.0
        %v1699 = vand.u32 %v1067, 4294901760
        %1700 = vmatmul.mubr.f32.gmra.mrb[0].mxu0 %v1699
        %v1701 = vpop.f32.mrb[0].mxu0
        %v1702 = vadd.f32 %v1411, %v1701
        %v1703 = vpop.f32.mrb[0].mxu0
        %1704 = vmatprep.mubr.f32.mxu0 0.0
        %v1705 = vand.u32 %v1070, 4294901760
        %1706 = vmatmul.mubr.f32.gmra.mrb[0].mxu0 %v1705
        %v1707 = vpop.f32.mrb[0].mxu0
        %v1708 = vadd.f32 %v1421, %v1707
        %v1709 = vpop.f32.mrb[0].mxu0
        %1710 = vmatprep.mubr.f32.mxu0 0.0
        %v1711 = vand.u32 %v1073, 4294901760
        %1712 = vmatmul.mubr.f32.gmra.mrb[0].mxu0 %v1711
        %v1713 = vpop.f32.mrb[0].mxu0
        %v1714 = vadd.f32 %v1431, %v1713
        %v1715 = vpop.f32.mrb[0].mxu0
        %1716 = vmatprep.mubr.f32.mxu0 0.0
        %v1717 = vand.u32 %v1076, 4294901760
        %1718 = vmatmul.mubr.f32.gmra.mrb[0].mxu0 %v1717
        %v1719 = vpop.f32.mrb[0].mxu0
        %v1720 = vadd.f32 %v1441, %v1719
        %v1721 = vpop.f32.mrb[0].mxu0
        %1722 = vmatprep.mubr.f32.mxu0 0.0
        %v1723 = vand.u32 %v1079, 4294901760
        %1724 = vmatmul.mubr.f32.gmra.mrb[0].mxu0 %v1723
        %v1725 = vpop.f32.mrb[0].mxu0
        %v1726 = vadd.f32 %v1451, %v1725
        %v1727 = vpop.f32.mrb[0].mxu0
        %1728 = vmatprep.mubr.f32.mxu0 0.0
        %v1729 = vand.u32 %v1082, 4294901760
        %1730 = vmatmul.mubr.f32.gmra.mrb[0].mxu0 %v1729
        %v1731 = vpop.f32.mrb[0].mxu0
        %v1732 = vadd.f32 %v1461, %v1731
        %v1733 = vpop.f32.mrb[0].mxu0
        %1734 = vmatprep.mubr.f32.mxu0 0.0
        %v1735 = vand.u32 %v1085, 4294901760
        %1736 = vmatmul.mubr.f32.gmra.mrb[0].mxu0 %v1735
        %v1737 = vpop.f32.mrb[0].mxu0
        %v1738 = vadd.f32 %v1471, %v1737
        %v1739 = vpop.f32.mrb[0].mxu0
        %1740 = vdwg.mxu0
        %1741 = vmatprep.subr.mxu0 0.0
        %v1742 = vand.u32 %v989, 4294901760
        %v1743 = vsub.f32 %v989, %v1742
        %1744 = vmatpush1.msra.mxu0 %v1743
        %1745 = vmatprep.subr.mxu0 0.0
        %v1746 = vand.u32 %v990, 4294901760
        %v1747 = vsub.f32 %v990, %v1746
        %1748 = vmatpush1.msra.mxu0 %v1747
        %1749 = vmatprep.subr.mxu0 0.0
        %1750 = vmatpush1.msra.mxu0 0.0
        %1751 = vmatprep.subr.mxu0 0.0
        %1752 = vmatpush1.msra.mxu0 0.0
        %1753 = vmatprep.subr.mxu0 0.0
        %1754 = vmatpush1.msra.mxu0 0.0
        %1755 = vmatprep.subr.mxu0 0.0
        %1756 = vmatpush1.msra.mxu0 0.0
        %1757 = vmatprep.subr.mxu0 0.0
        %1758 = vmatpush1.msra.mxu0 0.0
        %1759 = vmatprep.subr.mxu0 0.0
        %1760 = vmatpush1.msra.mxu0 0.0
        %1761 = vmatprep.subr.mxu0 0.0
        %1762 = vmatpush1.msra.mxu0 0.0
        %1763 = vmatprep.subr.mxu0 0.0
        %1764 = vmatpush1.msra.mxu0 0.0
        %1765 = vmatprep.subr.mxu0 0.0
        %1766 = vmatpush1.msra.mxu0 0.0
        %1767 = vmatprep.subr.mxu0 0.0
        %1768 = vmatpush1.msra.mxu0 0.0
        %1769 = vmatprep.subr.mxu0 0.0
        %1770 = vmatpush1.msra.mxu0 0.0
        %1771 = vmatprep.subr.mxu0 0.0
        %1772 = vmatpush1.msra.mxu0 0.0
        %1773 = vmatprep.subr.mxu0 0.0
        %1774 = vmatpush1.msra.mxu0 0.0
        %1775 = vmatprep.subr.mxu0 0.0
        %1776 = vmatpush1.msra.mxu0 0.0
        %1777 = vmatprep.subr.mxu0 0.0
        %1778 = vmatpush1.msra.mxu0 0.0
        %1779 = vmatprep.subr.mxu0 0.0
        %1780 = vmatpush1.msra.mxu0 0.0
        %1781 = vmatprep.subr.mxu0 0.0
        %1782 = vmatpush1.msra.mxu0 0.0
        %1783 = vmatprep.subr.mxu0 0.0
        %1784 = vmatpush1.msra.mxu0 0.0
        %1785 = vmatprep.subr.mxu0 0.0
        %1786 = vmatpush1.msra.mxu0 0.0
        %1787 = vmatprep.subr.mxu0 0.0
        %1788 = vmatpush1.msra.mxu0 0.0
        %1789 = vmatprep.subr.mxu0 0.0
        %1790 = vmatpush1.msra.mxu0 0.0
        %1791 = vmatprep.subr.mxu0 0.0
        %1792 = vmatpush1.msra.mxu0 0.0
        %1793 = vmatprep.subr.mxu0 0.0
        %1794 = vmatpush1.msra.mxu0 0.0
        %1795 = vmatprep.subr.mxu0 0.0
        %1796 = vmatpush1.msra.mxu0 0.0
        %1797 = vmatprep.subr.mxu0 0.0
        %1798 = vmatpush1.msra.mxu0 0.0
        %1799 = vmatprep.subr.mxu0 0.0
        %1800 = vmatpush1.msra.mxu0 0.0
        %1801 = vmatprep.subr.mxu0 0.0
        %1802 = vmatpush1.msra.mxu0 0.0
        %1803 = vmatprep.subr.mxu0 0.0
        %1804 = vmatpush1.msra.mxu0 0.0
        %1805 = vmatprep.subr.mxu0 0.0
        %1806 = vmatpush1.msra.mxu0 0.0
        %1807 = vmatprep.subr.mxu0 0.0
        %1808 = vmatpush1.msra.mxu0 0.0
        %1809 = vmatprep.mubr.f32.mxu0 0.0
        %v1810 = vand.u32 %v992, 4294901760
        %v1811 = vsub.f32 %v992, %v1810
        %1812 = vmatmul.mubr.f32.gmra.mrb[0].mxu0 %v1811
        %v1813 = vpop.f32.mrb[0].mxu0
        %v1814 = vadd.f32 %v1552, %v1813
        %v1815 = vpop.f32.mrb[0].mxu0
        %1816 = vmatprep.mubr.f32.mxu0 0.0
        %v1817 = vand.u32 %v995, 4294901760
        %v1818 = vsub.f32 %v995, %v1817
        %1819 = vmatmul.mubr.f32.gmra.mrb[0].mxu0 %v1818
        %v1820 = vpop.f32.mrb[0].mxu0
        %v1821 = vadd.f32 %v1558, %v1820
        %v1822 = vpop.f32.mrb[0].mxu0
        %1823 = vmatprep.mubr.f32.mxu0 0.0
        %v1824 = vand.u32 %v998, 4294901760
        %v1825 = vsub.f32 %v998, %v1824
        %1826 = vmatmul.mubr.f32.gmra.mrb[0].mxu0 %v1825
        %v1827 = vpop.f32.mrb[0].mxu0
        %v1828 = vadd.f32 %v1564, %v1827
        %v1829 = vpop.f32.mrb[0].mxu0
        %1830 = vmatprep.mubr.f32.mxu0 0.0
        %v1831 = vand.u32 %v1001, 4294901760
        %v1832 = vsub.f32 %v1001, %v1831
        %1833 = vmatmul.mubr.f32.gmra.mrb[0].mxu0 %v1832
        %v1834 = vpop.f32.mrb[0].mxu0
        %v1835 = vadd.f32 %v1570, %v1834
        %v1836 = vpop.f32.mrb[0].mxu0
        %1837 = vmatprep.mubr.f32.mxu0 0.0
        %v1838 = vand.u32 %v1004, 4294901760
        %v1839 = vsub.f32 %v1004, %v1838
        %1840 = vmatmul.mubr.f32.gmra.mrb[0].mxu0 %v1839
        %v1841 = vpop.f32.mrb[0].mxu0
        %v1842 = vadd.f32 %v1576, %v1841
        %v1843 = vpop.f32.mrb[0].mxu0
        %1844 = vmatprep.mubr.f32.mxu0 0.0
        %v1845 = vand.u32 %v1007, 4294901760
        %v1846 = vsub.f32 %v1007, %v1845
        %1847 = vmatmul.mubr.f32.gmra.mrb[0].mxu0 %v1846
        %v1848 = vpop.f32.mrb[0].mxu0
        %v1849 = vadd.f32 %v1582, %v1848
        %v1850 = vpop.f32.mrb[0].mxu0
        %1851 = vmatprep.mubr.f32.mxu0 0.0
        %v1852 = vand.u32 %v1010, 4294901760
        %v1853 = vsub.f32 %v1010, %v1852
        %1854 = vmatmul.mubr.f32.gmra.mrb[0].mxu0 %v1853
        %v1855 = vpop.f32.mrb[0].mxu0
        %v1856 = vadd.f32 %v1588, %v1855
        %v1857 = vpop.f32.mrb[0].mxu0
        %1858 = vmatprep.mubr.f32.mxu0 0.0
        %v1859 = vand.u32 %v1013, 4294901760
        %v1860 = vsub.f32 %v1013, %v1859
        %1861 = vmatmul.mubr.f32.gmra.mrb[0].mxu0 %v1860
        %v1862 = vpop.f32.mrb[0].mxu0
        %v1863 = vadd.f32 %v1594, %v1862
        %v1864 = vpop.f32.mrb[0].mxu0
        %1865 = vmatprep.mubr.f32.mxu0 0.0
        %v1866 = vand.u32 %v1016, 4294901760
        %v1867 = vsub.f32 %v1016, %v1866
        %1868 = vmatmul.mubr.f32.gmra.mrb[0].mxu0 %v1867
        %v1869 = vpop.f32.mrb[0].mxu0
        %v1870 = vadd.f32 %v1600, %v1869
        %v1871 = vpop.f32.mrb[0].mxu0
        %1872 = vmatprep.mubr.f32.mxu0 0.0
        %v1873 = vand.u32 %v1019, 4294901760
        %v1874 = vsub.f32 %v1019, %v1873
        %1875 = vmatmul.mubr.f32.gmra.mrb[0].mxu0 %v1874
        %v1876 = vpop.f32.mrb[0].mxu0
        %v1877 = vadd.f32 %v1606, %v1876
        %v1878 = vpop.f32.mrb[0].mxu0
        %1879 = vmatprep.mubr.f32.mxu0 0.0
        %v1880 = vand.u32 %v1022, 4294901760
        %v1881 = vsub.f32 %v1022, %v1880
        %1882 = vmatmul.mubr.f32.gmra.mrb[0].mxu0 %v1881
        %v1883 = vpop.f32.mrb[0].mxu0
        %v1884 = vadd.f32 %v1612, %v1883
        %v1885 = vpop.f32.mrb[0].mxu0
        %1886 = vmatprep.mubr.f32.mxu0 0.0
        %v1887 = vand.u32 %v1025, 4294901760
        %v1888 = vsub.f32 %v1025, %v1887
        %1889 = vmatmul.mubr.f32.gmra.mrb[0].mxu0 %v1888
        %v1890 = vpop.f32.mrb[0].mxu0
        %v1891 = vadd.f32 %v1618, %v1890
        %v1892 = vpop.f32.mrb[0].mxu0
        %1893 = vmatprep.mubr.f32.mxu0 0.0
        %v1894 = vand.u32 %v1028, 4294901760
        %v1895 = vsub.f32 %v1028, %v1894
        %1896 = vmatmul.mubr.f32.gmra.mrb[0].mxu0 %v1895
        %v1897 = vpop.f32.mrb[0].mxu0
        %v1898 = vadd.f32 %v1624, %v1897
        %v1899 = vpop.f32.mrb[0].mxu0
        %1900 = vmatprep.mubr.f32.mxu0 0.0
        %v1901 = vand.u32 %v1031, 4294901760
        %v1902 = vsub.f32 %v1031, %v1901
        %1903 = vmatmul.mubr.f32.gmra.mrb[0].mxu0 %v1902
        %v1904 = vpop.f32.mrb[0].mxu0
        %v1905 = vadd.f32 %v1630, %v1904
        %v1906 = vpop.f32.mrb[0].mxu0
        %1907 = vmatprep.mubr.f32.mxu0 0.0
        %v1908 = vand.u32 %v1034, 4294901760
        %v1909 = vsub.f32 %v1034, %v1908
        %1910 = vmatmul.mubr.f32.gmra.mrb[0].mxu0 %v1909
        %v1911 = vpop.f32.mrb[0].mxu0
        %v1912 = vadd.f32 %v1636, %v1911
        %v1913 = vpop.f32.mrb[0].mxu0
        %1914 = vmatprep.mubr.f32.mxu0 0.0
        %v1915 = vand.u32 %v1037, 4294901760
        %v1916 = vsub.f32 %v1037, %v1915
        %1917 = vmatmul.mubr.f32.gmra.mrb[0].mxu0 %v1916
        %v1918 = vpop.f32.mrb[0].mxu0
        %v1919 = vadd.f32 %v1642, %v1918
        %v1920 = vpop.f32.mrb[0].mxu0
        %1921 = vmatprep.mubr.f32.mxu0 0.0
        %v1922 = vand.u32 %v1040, 4294901760
        %v1923 = vsub.f32 %v1040, %v1922
        %1924 = vmatmul.mubr.f32.gmra.mrb[0].mxu0 %v1923
        %v1925 = vpop.f32.mrb[0].mxu0
        %v1926 = vadd.f32 %v1648, %v1925
        %v1927 = vpop.f32.mrb[0].mxu0
        %1928 = vmatprep.mubr.f32.mxu0 0.0
        %v1929 = vand.u32 %v1043, 4294901760
        %v1930 = vsub.f32 %v1043, %v1929
        %1931 = vmatmul.mubr.f32.gmra.mrb[0].mxu0 %v1930
        %v1932 = vpop.f32.mrb[0].mxu0
        %v1933 = vadd.f32 %v1654, %v1932
        %v1934 = vpop.f32.mrb[0].mxu0
        %1935 = vmatprep.mubr.f32.mxu0 0.0
        %v1936 = vand.u32 %v1046, 4294901760
        %v1937 = vsub.f32 %v1046, %v1936
        %1938 = vmatmul.mubr.f32.gmra.mrb[0].mxu0 %v1937
        %v1939 = vpop.f32.mrb[0].mxu0
        %v1940 = vadd.f32 %v1660, %v1939
        %v1941 = vpop.f32.mrb[0].mxu0
        %1942 = vmatprep.mubr.f32.mxu0 0.0
        %v1943 = vand.u32 %v1049, 4294901760
        %v1944 = vsub.f32 %v1049, %v1943
        %1945 = vmatmul.mubr.f32.gmra.mrb[0].mxu0 %v1944
        %v1946 = vpop.f32.mrb[0].mxu0
        %v1947 = vadd.f32 %v1666, %v1946
        %v1948 = vpop.f32.mrb[0].mxu0
        %1949 = vmatprep.mubr.f32.mxu0 0.0
        %v1950 = vand.u32 %v1052, 4294901760
        %v1951 = vsub.f32 %v1052, %v1950
        %1952 = vmatmul.mubr.f32.gmra.mrb[0].mxu0 %v1951
        %v1953 = vpop.f32.mrb[0].mxu0
        %v1954 = vadd.f32 %v1672, %v1953
        %v1955 = vpop.f32.mrb[0].mxu0
        %1956 = vmatprep.mubr.f32.mxu0 0.0
        %v1957 = vand.u32 %v1055, 4294901760
        %v1958 = vsub.f32 %v1055, %v1957
        %1959 = vmatmul.mubr.f32.gmra.mrb[0].mxu0 %v1958
        %v1960 = vpop.f32.mrb[0].mxu0
        %v1961 = vadd.f32 %v1678, %v1960
        %v1962 = vpop.f32.mrb[0].mxu0
        %1963 = vmatprep.mubr.f32.mxu0 0.0
        %v1964 = vand.u32 %v1058, 4294901760
        %v1965 = vsub.f32 %v1058, %v1964
        %1966 = vmatmul.mubr.f32.gmra.mrb[0].mxu0 %v1965
        %v1967 = vpop.f32.mrb[0].mxu0
        %v1968 = vadd.f32 %v1684, %v1967
        %v1969 = vpop.f32.mrb[0].mxu0
        %1970 = vmatprep.mubr.f32.mxu0 0.0
        %v1971 = vand.u32 %v1061, 4294901760
        %v1972 = vsub.f32 %v1061, %v1971
        %1973 = vmatmul.mubr.f32.gmra.mrb[0].mxu0 %v1972
        %v1974 = vpop.f32.mrb[0].mxu0
        %v1975 = vadd.f32 %v1690, %v1974
        %v1976 = vpop.f32.mrb[0].mxu0
        %1977 = vmatprep.mubr.f32.mxu0 0.0
        %v1978 = vand.u32 %v1064, 4294901760
        %v1979 = vsub.f32 %v1064, %v1978
        %1980 = vmatmul.mubr.f32.gmra.mrb[0].mxu0 %v1979
        %v1981 = vpop.f32.mrb[0].mxu0
        %v1982 = vadd.f32 %v1696, %v1981
        %v1983 = vpop.f32.mrb[0].mxu0
        %1984 = vmatprep.mubr.f32.mxu0 0.0
        %v1985 = vand.u32 %v1067, 4294901760
        %v1986 = vsub.f32 %v1067, %v1985
        %1987 = vmatmul.mubr.f32.gmra.mrb[0].mxu0 %v1986
        %v1988 = vpop.f32.mrb[0].mxu0
        %v1989 = vadd.f32 %v1702, %v1988
        %v1990 = vpop.f32.mrb[0].mxu0
        %1991 = vmatprep.mubr.f32.mxu0 0.0
        %v1992 = vand.u32 %v1070, 4294901760
        %v1993 = vsub.f32 %v1070, %v1992
        %1994 = vmatmul.mubr.f32.gmra.mrb[0].mxu0 %v1993
        %v1995 = vpop.f32.mrb[0].mxu0
        %v1996 = vadd.f32 %v1708, %v1995
        %v1997 = vpop.f32.mrb[0].mxu0
        %1998 = vmatprep.mubr.f32.mxu0 0.0
        %v1999 = vand.u32 %v1073, 4294901760
        %v2000 = vsub.f32 %v1073, %v1999
        %2001 = vmatmul.mubr.f32.gmra.mrb[0].mxu0 %v2000
        %v2002 = vpop.f32.mrb[0].mxu0
        %v2003 = vadd.f32 %v1714, %v2002
        %v2004 = vpop.f32.mrb[0].mxu0
        %2005 = vmatprep.mubr.f32.mxu0 0.0
        %v2006 = vand.u32 %v1076, 4294901760
        %v2007 = vsub.f32 %v1076, %v2006
        %2008 = vmatmul.mubr.f32.gmra.mrb[0].mxu0 %v2007
        %v2009 = vpop.f32.mrb[0].mxu0
        %v2010 = vadd.f32 %v1720, %v2009
        %v2011 = vpop.f32.mrb[0].mxu0
        %2012 = vmatprep.mubr.f32.mxu0 0.0
        %v2013 = vand.u32 %v1079, 4294901760
        %v2014 = vsub.f32 %v1079, %v2013
        %2015 = vmatmul.mubr.f32.gmra.mrb[0].mxu0 %v2014
        %v2016 = vpop.f32.mrb[0].mxu0
        %v2017 = vadd.f32 %v1726, %v2016
        %v2018 = vpop.f32.mrb[0].mxu0
        %2019 = vmatprep.mubr.f32.mxu0 0.0
        %v2020 = vand.u32 %v1082, 4294901760
        %v2021 = vsub.f32 %v1082, %v2020
        %2022 = vmatmul.mubr.f32.gmra.mrb[0].mxu0 %v2021
        %v2023 = vpop.f32.mrb[0].mxu0
        %v2024 = vadd.f32 %v1732, %v2023
        %v2025 = vpop.f32.mrb[0].mxu0
        %2026 = vmatprep.mubr.f32.mxu0 0.0
        %v2027 = vand.u32 %v1085, 4294901760
        %v2028 = vsub.f32 %v1085, %v2027
        %2029 = vmatmul.mubr.f32.gmra.mrb[0].mxu0 %v2028
        %v2030 = vpop.f32.mrb[0].mxu0
        %v2031 = vadd.f32 %v1738, %v2030
        %v2032 = vpop.f32.mrb[0].mxu0
        %2033 = vdwg.mxu0
        %2034 = vmatprep.subr.mxu0 0.0
        %v2035 = vand.u32 %v989, 4294901760
        %2036 = vmatpush1.msra.mxu0 %v2035
        %2037 = vmatprep.subr.mxu0 0.0
        %v2038 = vand.u32 %v990, 4294901760
        %2039 = vmatpush1.msra.mxu0 %v2038
        %2040 = vmatprep.subr.mxu0 0.0
        %2041 = vmatpush1.msra.mxu0 0.0
        %2042 = vmatprep.subr.mxu0 0.0
        %2043 = vmatpush1.msra.mxu0 0.0
        %2044 = vmatprep.subr.mxu0 0.0
        %2045 = vmatpush1.msra.mxu0 0.0
        %2046 = vmatprep.subr.mxu0 0.0
        %2047 = vmatpush1.msra.mxu0 0.0
        %2048 = vmatprep.subr.mxu0 0.0
        %2049 = vmatpush1.msra.mxu0 0.0
        %2050 = vmatprep.subr.mxu0 0.0
        %2051 = vmatpush1.msra.mxu0 0.0
        %2052 = vmatprep.subr.mxu0 0.0
        %2053 = vmatpush1.msra.mxu0 0.0
        %2054 = vmatprep.subr.mxu0 0.0
        %2055 = vmatpush1.msra.mxu0 0.0
        %2056 = vmatprep.subr.mxu0 0.0
        %2057 = vmatpush1.msra.mxu0 0.0
        %2058 = vmatprep.subr.mxu0 0.0
        %2059 = vmatpush1.msra.mxu0 0.0
        %2060 = vmatprep.subr.mxu0 0.0
        %2061 = vmatpush1.msra.mxu0 0.0
        %2062 = vmatprep.subr.mxu0 0.0
        %2063 = vmatpush1.msra.mxu0 0.0
        %2064 = vmatprep.subr.mxu0 0.0
        %2065 = vmatpush1.msra.mxu0 0.0
        %2066 = vmatprep.subr.mxu0 0.0
        %2067 = vmatpush1.msra.mxu0 0.0
        %2068 = vmatprep.subr.mxu0 0.0
        %2069 = vmatpush1.msra.mxu0 0.0
        %2070 = vmatprep.subr.mxu0 0.0
        %2071 = vmatpush1.msra.mxu0 0.0
        %2072 = vmatprep.subr.mxu0 0.0
        %2073 = vmatpush1.msra.mxu0 0.0
        %2074 = vmatprep.subr.mxu0 0.0
        %2075 = vmatpush1.msra.mxu0 0.0
        %2076 = vmatprep.subr.mxu0 0.0
        %2077 = vmatpush1.msra.mxu0 0.0
        %2078 = vmatprep.subr.mxu0 0.0
        %2079 = vmatpush1.msra.mxu0 0.0
        %2080 = vmatprep.subr.mxu0 0.0
        %2081 = vmatpush1.msra.mxu0 0.0
        %2082 = vmatprep.subr.mxu0 0.0
        %2083 = vmatpush1.msra.mxu0 0.0
        %2084 = vmatprep.subr.mxu0 0.0
        %2085 = vmatpush1.msra.mxu0 0.0
        %2086 = vmatprep.subr.mxu0 0.0
        %2087 = vmatpush1.msra.mxu0 0.0
        %2088 = vmatprep.subr.mxu0 0.0
        %2089 = vmatpush1.msra.mxu0 0.0
        %2090 = vmatprep.subr.mxu0 0.0
        %2091 = vmatpush1.msra.mxu0 0.0
        %2092 = vmatprep.subr.mxu0 0.0
        %2093 = vmatpush1.msra.mxu0 0.0
        %2094 = vmatprep.subr.mxu0 0.0
        %2095 = vmatpush1.msra.mxu0 0.0
        %2096 = vmatprep.subr.mxu0 0.0
        %2097 = vmatpush1.msra.mxu0 0.0
        %2098 = vmatprep.subr.mxu0 0.0
        %2099 = vmatpush1.msra.mxu0 0.0
        %2100 = vmatprep.mubr.f32.mxu0 0.0
        %v2101 = vand.u32 %v992, 4294901760
        %v2102 = vsub.f32 %v992, %v2101
        %v2103 = vand.u32 %v2102, 4294901760
        %2104 = vmatmul.mubr.f32.gmra.mrb[0].mxu0 %v2103
        %v2105 = vpop.f32.mrb[0].mxu0
        %v2106 = vadd.f32 %v1814, %v2105
        %v2107 = vpop.f32.mrb[0].mxu0
        %2108 = vmatprep.mubr.f32.mxu0 0.0
        %v2109 = vand.u32 %v995, 4294901760
        %v2110 = vsub.f32 %v995, %v2109
        %v2111 = vand.u32 %v2110, 4294901760
        %2112 = vmatmul.mubr.f32.gmra.mrb[0].mxu0 %v2111
        %v2113 = vpop.f32.mrb[0].mxu0
        %v2114 = vadd.f32 %v1821, %v2113
        %v2115 = vpop.f32.mrb[0].mxu0
        %2116 = vmatprep.mubr.f32.mxu0 0.0
        %v2117 = vand.u32 %v998, 4294901760
        %v2118 = vsub.f32 %v998, %v2117
        %v2119 = vand.u32 %v2118, 4294901760
        %2120 = vmatmul.mubr.f32.gmra.mrb[0].mxu0 %v2119
        %v2121 = vpop.f32.mrb[0].mxu0
        %v2122 = vadd.f32 %v1828, %v2121
        %v2123 = vpop.f32.mrb[0].mxu0
        %2124 = vmatprep.mubr.f32.mxu0 0.0
        %v2125 = vand.u32 %v1001, 4294901760
        %v2126 = vsub.f32 %v1001, %v2125
        %v2127 = vand.u32 %v2126, 4294901760
        %2128 = vmatmul.mubr.f32.gmra.mrb[0].mxu0 %v2127
        %v2129 = vpop.f32.mrb[0].mxu0
        %v2130 = vadd.f32 %v1835, %v2129
        %v2131 = vpop.f32.mrb[0].mxu0
        %2132 = vmatprep.mubr.f32.mxu0 0.0
        %v2133 = vand.u32 %v1004, 4294901760
        %v2134 = vsub.f32 %v1004, %v2133
        %v2135 = vand.u32 %v2134, 4294901760
        %2136 = vmatmul.mubr.f32.gmra.mrb[0].mxu0 %v2135
        %v2137 = vpop.f32.mrb[0].mxu0
        %v2138 = vadd.f32 %v1842, %v2137
        %v2139 = vpop.f32.mrb[0].mxu0
        %2140 = vmatprep.mubr.f32.mxu0 0.0
        %v2141 = vand.u32 %v1007, 4294901760
        %v2142 = vsub.f32 %v1007, %v2141
        %v2143 = vand.u32 %v2142, 4294901760
        %2144 = vmatmul.mubr.f32.gmra.mrb[0].mxu0 %v2143
        %v2145 = vpop.f32.mrb[0].mxu0
        %v2146 = vadd.f32 %v1849, %v2145
        %v2147 = vpop.f32.mrb[0].mxu0
        %2148 = vmatprep.mubr.f32.mxu0 0.0
        %v2149 = vand.u32 %v1010, 4294901760
        %v2150 = vsub.f32 %v1010, %v2149
        %v2151 = vand.u32 %v2150, 4294901760
        %2152 = vmatmul.mubr.f32.gmra.mrb[0].mxu0 %v2151
        %v2153 = vpop.f32.mrb[0].mxu0
        %v2154 = vadd.f32 %v1856, %v2153
        %v2155 = vpop.f32.mrb[0].mxu0
        %2156 = vmatprep.mubr.f32.mxu0 0.0
        %v2157 = vand.u32 %v1013, 4294901760
        %v2158 = vsub.f32 %v1013, %v2157
        %v2159 = vand.u32 %v2158, 4294901760
        %2160 = vmatmul.mubr.f32.gmra.mrb[0].mxu0 %v2159
        %v2161 = vpop.f32.mrb[0].mxu0
        %v2162 = vadd.f32 %v1863, %v2161
        %v2163 = vpop.f32.mrb[0].mxu0
        %2164 = vmatprep.mubr.f32.mxu0 0.0
        %v2165 = vand.u32 %v1016, 4294901760
        %v2166 = vsub.f32 %v1016, %v2165
        %v2167 = vand.u32 %v2166, 4294901760
        %2168 = vmatmul.mubr.f32.gmra.mrb[0].mxu0 %v2167
        %v2169 = vpop.f32.mrb[0].mxu0
        %v2170 = vadd.f32 %v1870, %v2169
        %v2171 = vpop.f32.mrb[0].mxu0
        %2172 = vmatprep.mubr.f32.mxu0 0.0
        %v2173 = vand.u32 %v1019, 4294901760
        %v2174 = vsub.f32 %v1019, %v2173
        %v2175 = vand.u32 %v2174, 4294901760
        %2176 = vmatmul.mubr.f32.gmra.mrb[0].mxu0 %v2175
        %v2177 = vpop.f32.mrb[0].mxu0
        %v2178 = vadd.f32 %v1877, %v2177
        %v2179 = vpop.f32.mrb[0].mxu0
        %2180 = vmatprep.mubr.f32.mxu0 0.0
        %v2181 = vand.u32 %v1022, 4294901760
        %v2182 = vsub.f32 %v1022, %v2181
        %v2183 = vand.u32 %v2182, 4294901760
        %2184 = vmatmul.mubr.f32.gmra.mrb[0].mxu0 %v2183
        %v2185 = vpop.f32.mrb[0].mxu0
        %v2186 = vadd.f32 %v1884, %v2185
        %v2187 = vpop.f32.mrb[0].mxu0
        %2188 = vmatprep.mubr.f32.mxu0 0.0
        %v2189 = vand.u32 %v1025, 4294901760
        %v2190 = vsub.f32 %v1025, %v2189
        %v2191 = vand.u32 %v2190, 4294901760
        %2192 = vmatmul.mubr.f32.gmra.mrb[0].mxu0 %v2191
        %v2193 = vpop.f32.mrb[0].mxu0
        %v2194 = vadd.f32 %v1891, %v2193
        %v2195 = vpop.f32.mrb[0].mxu0
        %2196 = vmatprep.mubr.f32.mxu0 0.0
        %v2197 = vand.u32 %v1028, 4294901760
        %v2198 = vsub.f32 %v1028, %v2197
        %v2199 = vand.u32 %v2198, 4294901760
        %2200 = vmatmul.mubr.f32.gmra.mrb[0].mxu0 %v2199
        %v2201 = vpop.f32.mrb[0].mxu0
        %v2202 = vadd.f32 %v1898, %v2201
        %v2203 = vpop.f32.mrb[0].mxu0
        %2204 = vmatprep.mubr.f32.mxu0 0.0
        %v2205 = vand.u32 %v1031, 4294901760
        %v2206 = vsub.f32 %v1031, %v2205
        %v2207 = vand.u32 %v2206, 4294901760
        %2208 = vmatmul.mubr.f32.gmra.mrb[0].mxu0 %v2207
        %v2209 = vpop.f32.mrb[0].mxu0
        %v2210 = vadd.f32 %v1905, %v2209
        %v2211 = vpop.f32.mrb[0].mxu0
        %2212 = vmatprep.mubr.f32.mxu0 0.0
        %v2213 = vand.u32 %v1034, 4294901760
        %v2214 = vsub.f32 %v1034, %v2213
        %v2215 = vand.u32 %v2214, 4294901760
        %2216 = vmatmul.mubr.f32.gmra.mrb[0].mxu0 %v2215
        %v2217 = vpop.f32.mrb[0].mxu0
        %v2218 = vadd.f32 %v1912, %v2217
        %v2219 = vpop.f32.mrb[0].mxu0
        %2220 = vmatprep.mubr.f32.mxu0 0.0
        %v2221 = vand.u32 %v1037, 4294901760
        %v2222 = vsub.f32 %v1037, %v2221
        %v2223 = vand.u32 %v2222, 4294901760
        %2224 = vmatmul.mubr.f32.gmra.mrb[0].mxu0 %v2223
        %v2225 = vpop.f32.mrb[0].mxu0
        %v2226 = vadd.f32 %v1919, %v2225
        %v2227 = vpop.f32.mrb[0].mxu0
        %2228 = vmatprep.mubr.f32.mxu0 0.0
        %v2229 = vand.u32 %v1040, 4294901760
        %v2230 = vsub.f32 %v1040, %v2229
        %v2231 = vand.u32 %v2230, 4294901760
        %2232 = vmatmul.mubr.f32.gmra.mrb[0].mxu0 %v2231
        %v2233 = vpop.f32.mrb[0].mxu0
        %v2234 = vadd.f32 %v1926, %v2233
        %v2235 = vpop.f32.mrb[0].mxu0
        %2236 = vmatprep.mubr.f32.mxu0 0.0
        %v2237 = vand.u32 %v1043, 4294901760
        %v2238 = vsub.f32 %v1043, %v2237
        %v2239 = vand.u32 %v2238, 4294901760
        %2240 = vmatmul.mubr.f32.gmra.mrb[0].mxu0 %v2239
        %v2241 = vpop.f32.mrb[0].mxu0
        %v2242 = vadd.f32 %v1933, %v2241
        %v2243 = vpop.f32.mrb[0].mxu0
        %2244 = vmatprep.mubr.f32.mxu0 0.0
        %v2245 = vand.u32 %v1046, 4294901760
        %v2246 = vsub.f32 %v1046, %v2245
        %v2247 = vand.u32 %v2246, 4294901760
        %2248 = vmatmul.mubr.f32.gmra.mrb[0].mxu0 %v2247
        %v2249 = vpop.f32.mrb[0].mxu0
        %v2250 = vadd.f32 %v1940, %v2249
        %v2251 = vpop.f32.mrb[0].mxu0
        %2252 = vmatprep.mubr.f32.mxu0 0.0
        %v2253 = vand.u32 %v1049, 4294901760
        %v2254 = vsub.f32 %v1049, %v2253
        %v2255 = vand.u32 %v2254, 4294901760
        %2256 = vmatmul.mubr.f32.gmra.mrb[0].mxu0 %v2255
        %v2257 = vpop.f32.mrb[0].mxu0
        %v2258 = vadd.f32 %v1947, %v2257
        %v2259 = vpop.f32.mrb[0].mxu0
        %2260 = vmatprep.mubr.f32.mxu0 0.0
        %v2261 = vand.u32 %v1052, 4294901760
        %v2262 = vsub.f32 %v1052, %v2261
        %v2263 = vand.u32 %v2262, 4294901760
        %2264 = vmatmul.mubr.f32.gmra.mrb[0].mxu0 %v2263
        %v2265 = vpop.f32.mrb[0].mxu0
        %v2266 = vadd.f32 %v1954, %v2265
        %v2267 = vpop.f32.mrb[0].mxu0
        %2268 = vmatprep.mubr.f32.mxu0 0.0
        %v2269 = vand.u32 %v1055, 4294901760
        %v2270 = vsub.f32 %v1055, %v2269
        %v2271 = vand.u32 %v2270, 4294901760
        %2272 = vmatmul.mubr.f32.gmra.mrb[0].mxu0 %v2271
        %v2273 = vpop.f32.mrb[0].mxu0
        %v2274 = vadd.f32 %v1961, %v2273
        %v2275 = vpop.f32.mrb[0].mxu0
        %2276 = vmatprep.mubr.f32.mxu0 0.0
        %v2277 = vand.u32 %v1058, 4294901760
        %v2278 = vsub.f32 %v1058, %v2277
        %v2279 = vand.u32 %v2278, 4294901760
        %2280 = vmatmul.mubr.f32.gmra.mrb[0].mxu0 %v2279
        %v2281 = vpop.f32.mrb[0].mxu0
        %v2282 = vadd.f32 %v1968, %v2281
        %v2283 = vpop.f32.mrb[0].mxu0
        %2284 = vmatprep.mubr.f32.mxu0 0.0
        %v2285 = vand.u32 %v1061, 4294901760
        %v2286 = vsub.f32 %v1061, %v2285
        %v2287 = vand.u32 %v2286, 4294901760
        %2288 = vmatmul.mubr.f32.gmra.mrb[0].mxu0 %v2287
        %v2289 = vpop.f32.mrb[0].mxu0
        %v2290 = vadd.f32 %v1975, %v2289
        %v2291 = vpop.f32.mrb[0].mxu0
        %2292 = vmatprep.mubr.f32.mxu0 0.0
        %v2293 = vand.u32 %v1064, 4294901760
        %v2294 = vsub.f32 %v1064, %v2293
        %v2295 = vand.u32 %v2294, 4294901760
        %2296 = vmatmul.mubr.f32.gmra.mrb[0].mxu0 %v2295
        %v2297 = vpop.f32.mrb[0].mxu0
        %v2298 = vadd.f32 %v1982, %v2297
        %v2299 = vpop.f32.mrb[0].mxu0
        %2300 = vmatprep.mubr.f32.mxu0 0.0
        %v2301 = vand.u32 %v1067, 4294901760
        %v2302 = vsub.f32 %v1067, %v2301
        %v2303 = vand.u32 %v2302, 4294901760
        %2304 = vmatmul.mubr.f32.gmra.mrb[0].mxu0 %v2303
        %v2305 = vpop.f32.mrb[0].mxu0
        %v2306 = vadd.f32 %v1989, %v2305
        %v2307 = vpop.f32.mrb[0].mxu0
        %2308 = vmatprep.mubr.f32.mxu0 0.0
        %v2309 = vand.u32 %v1070, 4294901760
        %v2310 = vsub.f32 %v1070, %v2309
        %v2311 = vand.u32 %v2310, 4294901760
        %2312 = vmatmul.mubr.f32.gmra.mrb[0].mxu0 %v2311
        %v2313 = vpop.f32.mrb[0].mxu0
        %v2314 = vadd.f32 %v1996, %v2313
        %v2315 = vpop.f32.mrb[0].mxu0
        %2316 = vmatprep.mubr.f32.mxu0 0.0
        %v2317 = vand.u32 %v1073, 4294901760
        %v2318 = vsub.f32 %v1073, %v2317
        %v2319 = vand.u32 %v2318, 4294901760
        %2320 = vmatmul.mubr.f32.gmra.mrb[0].mxu0 %v2319
        %v2321 = vpop.f32.mrb[0].mxu0
        %v2322 = vadd.f32 %v2003, %v2321
        %v2323 = vpop.f32.mrb[0].mxu0
        %2324 = vmatprep.mubr.f32.mxu0 0.0
        %v2325 = vand.u32 %v1076, 4294901760
        %v2326 = vsub.f32 %v1076, %v2325
        %v2327 = vand.u32 %v2326, 4294901760
        %2328 = vmatmul.mubr.f32.gmra.mrb[0].mxu0 %v2327
        %v2329 = vpop.f32.mrb[0].mxu0
        %v2330 = vadd.f32 %v2010, %v2329
        %v2331 = vpop.f32.mrb[0].mxu0
        %2332 = vmatprep.mubr.f32.mxu0 0.0
        %v2333 = vand.u32 %v1079, 4294901760
        %v2334 = vsub.f32 %v1079, %v2333
        %v2335 = vand.u32 %v2334, 4294901760
        %2336 = vmatmul.mubr.f32.gmra.mrb[0].mxu0 %v2335
        %v2337 = vpop.f32.mrb[0].mxu0
        %v2338 = vadd.f32 %v2017, %v2337
        %v2339 = vpop.f32.mrb[0].mxu0
        %2340 = vmatprep.mubr.f32.mxu0 0.0
        %v2341 = vand.u32 %v1082, 4294901760
        %v2342 = vsub.f32 %v1082, %v2341
        %v2343 = vand.u32 %v2342, 4294901760
        %2344 = vmatmul.mubr.f32.gmra.mrb[0].mxu0 %v2343
        %v2345 = vpop.f32.mrb[0].mxu0
        %v2346 = vadd.f32 %v2024, %v2345
        %v2347 = vpop.f32.mrb[0].mxu0
        %2348 = vmatprep.mubr.f32.mxu0 0.0
        %v2349 = vand.u32 %v1085, 4294901760
        %v2350 = vsub.f32 %v1085, %v2349
        %v2351 = vand.u32 %v2350, 4294901760
        %2352 = vmatmul.mubr.f32.gmra.mrb[0].mxu0 %v2351
        %v2353 = vpop.f32.mrb[0].mxu0
        %v2354 = vadd.f32 %v2031, %v2353
        %v2355 = vpop.f32.mrb[0].mxu0
        %2356 = vdwg.mxu0
        %2357 = vmatprep.subr.mxu0 0.0
        %v2358 = vand.u32 %v989, 4294901760
        %v2359 = vsub.f32 %v989, %v2358
        %v2360 = vand.u32 %v2359, 4294901760
        %2361 = vmatpush1.msra.mxu0 %v2360
        %2362 = vmatprep.subr.mxu0 0.0
        %v2363 = vand.u32 %v990, 4294901760
        %v2364 = vsub.f32 %v990, %v2363
        %v2365 = vand.u32 %v2364, 4294901760
        %2366 = vmatpush1.msra.mxu0 %v2365
        %2367 = vmatprep.subr.mxu0 0.0
        %2368 = vmatpush1.msra.mxu0 0.0
        %2369 = vmatprep.subr.mxu0 0.0
        %2370 = vmatpush1.msra.mxu0 0.0
        %2371 = vmatprep.subr.mxu0 0.0
        %2372 = vmatpush1.msra.mxu0 0.0
        %2373 = vmatprep.subr.mxu0 0.0
        %2374 = vmatpush1.msra.mxu0 0.0
        %2375 = vmatprep.subr.mxu0 0.0
        %2376 = vmatpush1.msra.mxu0 0.0
        %2377 = vmatprep.subr.mxu0 0.0
        %2378 = vmatpush1.msra.mxu0 0.0
        %2379 = vmatprep.subr.mxu0 0.0
        %2380 = vmatpush1.msra.mxu0 0.0
        %2381 = vmatprep.subr.mxu0 0.0
        %2382 = vmatpush1.msra.mxu0 0.0
        %2383 = vmatprep.subr.mxu0 0.0
        %2384 = vmatpush1.msra.mxu0 0.0
        %2385 = vmatprep.subr.mxu0 0.0
        %2386 = vmatpush1.msra.mxu0 0.0
        %2387 = vmatprep.subr.mxu0 0.0
        %2388 = vmatpush1.msra.mxu0 0.0
        %2389 = vmatprep.subr.mxu0 0.0
        %2390 = vmatpush1.msra.mxu0 0.0
        %2391 = vmatprep.subr.mxu0 0.0
        %2392 = vmatpush1.msra.mxu0 0.0
        %2393 = vmatprep.subr.mxu0 0.0
        %2394 = vmatpush1.msra.mxu0 0.0
        %2395 = vmatprep.subr.mxu0 0.0
        %2396 = vmatpush1.msra.mxu0 0.0
        %2397 = vmatprep.subr.mxu0 0.0
        %2398 = vmatpush1.msra.mxu0 0.0
        %2399 = vmatprep.subr.mxu0 0.0
        %2400 = vmatpush1.msra.mxu0 0.0
        %2401 = vmatprep.subr.mxu0 0.0
        %2402 = vmatpush1.msra.mxu0 0.0
        %2403 = vmatprep.subr.mxu0 0.0
        %2404 = vmatpush1.msra.mxu0 0.0
        %2405 = vmatprep.subr.mxu0 0.0
        %2406 = vmatpush1.msra.mxu0 0.0
        %2407 = vmatprep.subr.mxu0 0.0
        %2408 = vmatpush1.msra.mxu0 0.0
        %2409 = vmatprep.subr.mxu0 0.0
        %2410 = vmatpush1.msra.mxu0 0.0
        %2411 = vmatprep.subr.mxu0 0.0
        %2412 = vmatpush1.msra.mxu0 0.0
        %2413 = vmatprep.subr.mxu0 0.0
        %2414 = vmatpush1.msra.mxu0 0.0
        %2415 = vmatprep.subr.mxu0 0.0
        %2416 = vmatpush1.msra.mxu0 0.0
        %2417 = vmatprep.subr.mxu0 0.0
        %2418 = vmatpush1.msra.mxu0 0.0
        %2419 = vmatprep.subr.mxu0 0.0
        %2420 = vmatpush1.msra.mxu0 0.0
        %2421 = vmatprep.subr.mxu0 0.0
        %2422 = vmatpush1.msra.mxu0 0.0
        %2423 = vmatprep.subr.mxu0 0.0
        %2424 = vmatpush1.msra.mxu0 0.0
        %2425 = vmatprep.subr.mxu0 0.0
        %2426 = vmatpush1.msra.mxu0 0.0
        %2427 = vmatprep.mubr.f32.mxu0 0.0
        %v2428 = vand.u32 %v992, 4294901760
        %2429 = vmatmul.mubr.f32.gmra.mrb[0].mxu0 %v2428
        %v2430 = vpop.f32.mrb[0].mxu0
        %v2431 = vadd.f32 %v2106, %v2430
        %v2432 = vpop.f32.mrb[0].mxu0
        %2433 = vmatprep.mubr.f32.mxu0 0.0
        %v2434 = vand.u32 %v995, 4294901760
        %2435 = vmatmul.mubr.f32.gmra.mrb[0].mxu0 %v2434
        %v2436 = vpop.f32.mrb[0].mxu0
        %v2437 = vadd.f32 %v2114, %v2436
        %v2438 = vpop.f32.mrb[0].mxu0
        %2439 = vmatprep.mubr.f32.mxu0 0.0
        %v2440 = vand.u32 %v998, 4294901760
        %2441 = vmatmul.mubr.f32.gmra.mrb[0].mxu0 %v2440
        %v2442 = vpop.f32.mrb[0].mxu0
        %v2443 = vadd.f32 %v2122, %v2442
        %v2444 = vpop.f32.mrb[0].mxu0
        %2445 = vmatprep.mubr.f32.mxu0 0.0
        %v2446 = vand.u32 %v1001, 4294901760
        %2447 = vmatmul.mubr.f32.gmra.mrb[0].mxu0 %v2446
        %v2448 = vpop.f32.mrb[0].mxu0
        %v2449 = vadd.f32 %v2130, %v2448
        %v2450 = vpop.f32.mrb[0].mxu0
        %2451 = vmatprep.mubr.f32.mxu0 0.0
        %v2452 = vand.u32 %v1004, 4294901760
        %2453 = vmatmul.mubr.f32.gmra.mrb[0].mxu0 %v2452
        %v2454 = vpop.f32.mrb[0].mxu0
        %v2455 = vadd.f32 %v2138, %v2454
        %v2456 = vpop.f32.mrb[0].mxu0
        %2457 = vmatprep.mubr.f32.mxu0 0.0
        %v2458 = vand.u32 %v1007, 4294901760
        %2459 = vmatmul.mubr.f32.gmra.mrb[0].mxu0 %v2458
        %v2460 = vpop.f32.mrb[0].mxu0
        %v2461 = vadd.f32 %v2146, %v2460
        %v2462 = vpop.f32.mrb[0].mxu0
        %2463 = vmatprep.mubr.f32.mxu0 0.0
        %v2464 = vand.u32 %v1010, 4294901760
        %2465 = vmatmul.mubr.f32.gmra.mrb[0].mxu0 %v2464
        %v2466 = vpop.f32.mrb[0].mxu0
        %v2467 = vadd.f32 %v2154, %v2466
        %v2468 = vpop.f32.mrb[0].mxu0
        %2469 = vmatprep.mubr.f32.mxu0 0.0
        %v2470 = vand.u32 %v1013, 4294901760
        %2471 = vmatmul.mubr.f32.gmra.mrb[0].mxu0 %v2470
        %v2472 = vpop.f32.mrb[0].mxu0
        %v2473 = vadd.f32 %v2162, %v2472
        %v2474 = vpop.f32.mrb[0].mxu0
        %2475 = vmatprep.mubr.f32.mxu0 0.0
        %v2476 = vand.u32 %v1016, 4294901760
        %2477 = vmatmul.mubr.f32.gmra.mrb[0].mxu0 %v2476
        %v2478 = vpop.f32.mrb[0].mxu0
        %v2479 = vadd.f32 %v2170, %v2478
        %v2480 = vpop.f32.mrb[0].mxu0
        %2481 = vmatprep.mubr.f32.mxu0 0.0
        %v2482 = vand.u32 %v1019, 4294901760
        %2483 = vmatmul.mubr.f32.gmra.mrb[0].mxu0 %v2482
        %v2484 = vpop.f32.mrb[0].mxu0
        %v2485 = vadd.f32 %v2178, %v2484
        %v2486 = vpop.f32.mrb[0].mxu0
        %2487 = vmatprep.mubr.f32.mxu0 0.0
        %v2488 = vand.u32 %v1022, 4294901760
        %2489 = vmatmul.mubr.f32.gmra.mrb[0].mxu0 %v2488
        %v2490 = vpop.f32.mrb[0].mxu0
        %v2491 = vadd.f32 %v2186, %v2490
        %v2492 = vpop.f32.mrb[0].mxu0
        %2493 = vmatprep.mubr.f32.mxu0 0.0
        %v2494 = vand.u32 %v1025, 4294901760
        %2495 = vmatmul.mubr.f32.gmra.mrb[0].mxu0 %v2494
        %v2496 = vpop.f32.mrb[0].mxu0
        %v2497 = vadd.f32 %v2194, %v2496
        %v2498 = vpop.f32.mrb[0].mxu0
        %2499 = vmatprep.mubr.f32.mxu0 0.0
        %v2500 = vand.u32 %v1028, 4294901760
        %2501 = vmatmul.mubr.f32.gmra.mrb[0].mxu0 %v2500
        %v2502 = vpop.f32.mrb[0].mxu0
        %v2503 = vadd.f32 %v2202, %v2502
        %v2504 = vpop.f32.mrb[0].mxu0
        %2505 = vmatprep.mubr.f32.mxu0 0.0
        %v2506 = vand.u32 %v1031, 4294901760
        %2507 = vmatmul.mubr.f32.gmra.mrb[0].mxu0 %v2506
        %v2508 = vpop.f32.mrb[0].mxu0
        %v2509 = vadd.f32 %v2210, %v2508
        %v2510 = vpop.f32.mrb[0].mxu0
        %2511 = vmatprep.mubr.f32.mxu0 0.0
        %v2512 = vand.u32 %v1034, 4294901760
        %2513 = vmatmul.mubr.f32.gmra.mrb[0].mxu0 %v2512
        %v2514 = vpop.f32.mrb[0].mxu0
        %v2515 = vadd.f32 %v2218, %v2514
        %v2516 = vpop.f32.mrb[0].mxu0
        %2517 = vmatprep.mubr.f32.mxu0 0.0
        %v2518 = vand.u32 %v1037, 4294901760
        %2519 = vmatmul.mubr.f32.gmra.mrb[0].mxu0 %v2518
        %v2520 = vpop.f32.mrb[0].mxu0
        %v2521 = vadd.f32 %v2226, %v2520
        %v2522 = vpop.f32.mrb[0].mxu0
        %2523 = vmatprep.mubr.f32.mxu0 0.0
        %v2524 = vand.u32 %v1040, 4294901760
        %2525 = vmatmul.mubr.f32.gmra.mrb[0].mxu0 %v2524
        %v2526 = vpop.f32.mrb[0].mxu0
        %v2527 = vadd.f32 %v2234, %v2526
        %v2528 = vpop.f32.mrb[0].mxu0
        %2529 = vmatprep.mubr.f32.mxu0 0.0
        %v2530 = vand.u32 %v1043, 4294901760
        %2531 = vmatmul.mubr.f32.gmra.mrb[0].mxu0 %v2530
        %v2532 = vpop.f32.mrb[0].mxu0
        %v2533 = vadd.f32 %v2242, %v2532
        %v2534 = vpop.f32.mrb[0].mxu0
        %2535 = vmatprep.mubr.f32.mxu0 0.0
        %v2536 = vand.u32 %v1046, 4294901760
        %2537 = vmatmul.mubr.f32.gmra.mrb[0].mxu0 %v2536
        %v2538 = vpop.f32.mrb[0].mxu0
        %v2539 = vadd.f32 %v2250, %v2538
        %v2540 = vpop.f32.mrb[0].mxu0
        %2541 = vmatprep.mubr.f32.mxu0 0.0
        %v2542 = vand.u32 %v1049, 4294901760
        %2543 = vmatmul.mubr.f32.gmra.mrb[0].mxu0 %v2542
        %v2544 = vpop.f32.mrb[0].mxu0
        %v2545 = vadd.f32 %v2258, %v2544
        %v2546 = vpop.f32.mrb[0].mxu0
        %2547 = vmatprep.mubr.f32.mxu0 0.0
        %v2548 = vand.u32 %v1052, 4294901760
        %2549 = vmatmul.mubr.f32.gmra.mrb[0].mxu0 %v2548
        %v2550 = vpop.f32.mrb[0].mxu0
        %v2551 = vadd.f32 %v2266, %v2550
        %v2552 = vpop.f32.mrb[0].mxu0
        %2553 = vmatprep.mubr.f32.mxu0 0.0
        %v2554 = vand.u32 %v1055, 4294901760
        %2555 = vmatmul.mubr.f32.gmra.mrb[0].mxu0 %v2554
        %v2556 = vpop.f32.mrb[0].mxu0
        %v2557 = vadd.f32 %v2274, %v2556
        %v2558 = vpop.f32.mrb[0].mxu0
        %2559 = vmatprep.mubr.f32.mxu0 0.0
        %v2560 = vand.u32 %v1058, 4294901760
        %2561 = vmatmul.mubr.f32.gmra.mrb[0].mxu0 %v2560
        %v2562 = vpop.f32.mrb[0].mxu0
        %v2563 = vadd.f32 %v2282, %v2562
        %v2564 = vpop.f32.mrb[0].mxu0
        %2565 = vmatprep.mubr.f32.mxu0 0.0
        %v2566 = vand.u32 %v1061, 4294901760
        %2567 = vmatmul.mubr.f32.gmra.mrb[0].mxu0 %v2566
        %v2568 = vpop.f32.mrb[0].mxu0
        %v2569 = vadd.f32 %v2290, %v2568
        %v2570 = vpop.f32.mrb[0].mxu0
        %2571 = vmatprep.mubr.f32.mxu0 0.0
        %v2572 = vand.u32 %v1064, 4294901760
        %2573 = vmatmul.mubr.f32.gmra.mrb[0].mxu0 %v2572
        %v2574 = vpop.f32.mrb[0].mxu0
        %v2575 = vadd.f32 %v2298, %v2574
        %v2576 = vpop.f32.mrb[0].mxu0
        %2577 = vmatprep.mubr.f32.mxu0 0.0
        %v2578 = vand.u32 %v1067, 4294901760
        %2579 = vmatmul.mubr.f32.gmra.mrb[0].mxu0 %v2578
        %v2580 = vpop.f32.mrb[0].mxu0
        %v2581 = vadd.f32 %v2306, %v2580
        %v2582 = vpop.f32.mrb[0].mxu0
        %2583 = vmatprep.mubr.f32.mxu0 0.0
        %v2584 = vand.u32 %v1070, 4294901760
        %2585 = vmatmul.mubr.f32.gmra.mrb[0].mxu0 %v2584
        %v2586 = vpop.f32.mrb[0].mxu0
        %v2587 = vadd.f32 %v2314, %v2586
        %v2588 = vpop.f32.mrb[0].mxu0
        %2589 = vmatprep.mubr.f32.mxu0 0.0
        %v2590 = vand.u32 %v1073, 4294901760
        %2591 = vmatmul.mubr.f32.gmra.mrb[0].mxu0 %v2590
        %v2592 = vpop.f32.mrb[0].mxu0
        %v2593 = vadd.f32 %v2322, %v2592
        %v2594 = vpop.f32.mrb[0].mxu0
        %2595 = vmatprep.mubr.f32.mxu0 0.0
        %v2596 = vand.u32 %v1076, 4294901760
        %2597 = vmatmul.mubr.f32.gmra.mrb[0].mxu0 %v2596
        %v2598 = vpop.f32.mrb[0].mxu0
        %v2599 = vadd.f32 %v2330, %v2598
        %v2600 = vpop.f32.mrb[0].mxu0
        %2601 = vmatprep.mubr.f32.mxu0 0.0
        %v2602 = vand.u32 %v1079, 4294901760
        %2603 = vmatmul.mubr.f32.gmra.mrb[0].mxu0 %v2602
        %v2604 = vpop.f32.mrb[0].mxu0
        %v2605 = vadd.f32 %v2338, %v2604
        %v2606 = vpop.f32.mrb[0].mxu0
        %2607 = vmatprep.mubr.f32.mxu0 0.0
        %v2608 = vand.u32 %v1082, 4294901760
        %2609 = vmatmul.mubr.f32.gmra.mrb[0].mxu0 %v2608
        %v2610 = vpop.f32.mrb[0].mxu0
        %v2611 = vadd.f32 %v2346, %v2610
        %v2612 = vpop.f32.mrb[0].mxu0
        %2613 = vmatprep.mubr.f32.mxu0 0.0
        %v2614 = vand.u32 %v1085, 4294901760
        %2615 = vmatmul.mubr.f32.gmra.mrb[0].mxu0 %v2614
        %v2616 = vpop.f32.mrb[0].mxu0
        %v2617 = vadd.f32 %v2354, %v2616
        %v2618 = vpop.f32.mrb[0].mxu0
        %2619 = vdwg.mxu0
        %2620 = vmatprep.subr.mxu0 0.0
        %v2621 = vand.u32 %v989, 4294901760
        %2622 = vmatpush1.msra.mxu0 %v2621
        %2623 = vmatprep.subr.mxu0 0.0
        %v2624 = vand.u32 %v990, 4294901760
        %2625 = vmatpush1.msra.mxu0 %v2624
        %2626 = vmatprep.subr.mxu0 0.0
        %2627 = vmatpush1.msra.mxu0 0.0
        %2628 = vmatprep.subr.mxu0 0.0
        %2629 = vmatpush1.msra.mxu0 0.0
        %2630 = vmatprep.subr.mxu0 0.0
        %2631 = vmatpush1.msra.mxu0 0.0
        %2632 = vmatprep.subr.mxu0 0.0
        %2633 = vmatpush1.msra.mxu0 0.0
        %2634 = vmatprep.subr.mxu0 0.0
        %2635 = vmatpush1.msra.mxu0 0.0
        %2636 = vmatprep.subr.mxu0 0.0
        %2637 = vmatpush1.msra.mxu0 0.0
        %2638 = vmatprep.subr.mxu0 0.0
        %2639 = vmatpush1.msra.mxu0 0.0
        %2640 = vmatprep.subr.mxu0 0.0
        %2641 = vmatpush1.msra.mxu0 0.0
        %2642 = vmatprep.subr.mxu0 0.0
        %2643 = vmatpush1.msra.mxu0 0.0
        %2644 = vmatprep.subr.mxu0 0.0
        %2645 = vmatpush1.msra.mxu0 0.0
        %2646 = vmatprep.subr.mxu0 0.0
        %2647 = vmatpush1.msra.mxu0 0.0
        %2648 = vmatprep.subr.mxu0 0.0
        %2649 = vmatpush1.msra.mxu0 0.0
        %2650 = vmatprep.subr.mxu0 0.0
        %2651 = vmatpush1.msra.mxu0 0.0
        %2652 = vmatprep.subr.mxu0 0.0
        %2653 = vmatpush1.msra.mxu0 0.0
        %2654 = vmatprep.subr.mxu0 0.0
        %2655 = vmatpush1.msra.mxu0 0.0
        %2656 = vmatprep.subr.mxu0 0.0
        %2657 = vmatpush1.msra.mxu0 0.0
        %2658 = vmatprep.subr.mxu0 0.0
        %2659 = vmatpush1.msra.mxu0 0.0
        %2660 = vmatprep.subr.mxu0 0.0
        %2661 = vmatpush1.msra.mxu0 0.0
        %2662 = vmatprep.subr.mxu0 0.0
        %2663 = vmatpush1.msra.mxu0 0.0
        %2664 = vmatprep.subr.mxu0 0.0
        %2665 = vmatpush1.msra.mxu0 0.0
        %2666 = vmatprep.subr.mxu0 0.0
        %2667 = vmatpush1.msra.mxu0 0.0
        %2668 = vmatprep.subr.mxu0 0.0
        %2669 = vmatpush1.msra.mxu0 0.0
        %2670 = vmatprep.subr.mxu0 0.0
        %2671 = vmatpush1.msra.mxu0 0.0
        %2672 = vmatprep.subr.mxu0 0.0
        %2673 = vmatpush1.msra.mxu0 0.0
        %2674 = vmatprep.subr.mxu0 0.0
        %2675 = vmatpush1.msra.mxu0 0.0
        %2676 = vmatprep.subr.mxu0 0.0
        %2677 = vmatpush1.msra.mxu0 0.0
        %2678 = vmatprep.subr.mxu0 0.0
        %2679 = vmatpush1.msra.mxu0 0.0
        %2680 = vmatprep.subr.mxu0 0.0
        %2681 = vmatpush1.msra.mxu0 0.0
        %2682 = vmatprep.subr.mxu0 0.0
        %2683 = vmatpush1.msra.mxu0 0.0
        %2684 = vmatprep.subr.mxu0 0.0
        %2685 = vmatpush1.msra.mxu0 0.0
        %2686 = vmatprep.mubr.f32.mxu0 0.0
        %v2687 = vand.u32 %v992, 4294901760
        %2688 = vmatmul.mubr.f32.gmra.mrb[0].mxu0 %v2687
        %v2689 = vpop.f32.mrb[0].mxu0
        %v2690 = vadd.f32 %v2431, %v2689
        %v2691 = vpop.f32.mrb[0].mxu0
        %2692 = vmatprep.mubr.f32.mxu0 0.0
        %v2693 = vand.u32 %v995, 4294901760
        %2694 = vmatmul.mubr.f32.gmra.mrb[0].mxu0 %v2693
        %v2695 = vpop.f32.mrb[0].mxu0
        %v2696 = vadd.f32 %v2437, %v2695
        %v2697 = vpop.f32.mrb[0].mxu0
        %2698 = vmatprep.mubr.f32.mxu0 0.0
        %v2699 = vand.u32 %v998, 4294901760
        %2700 = vmatmul.mubr.f32.gmra.mrb[0].mxu0 %v2699
        %v2701 = vpop.f32.mrb[0].mxu0
        %v2702 = vadd.f32 %v2443, %v2701
        %v2703 = vpop.f32.mrb[0].mxu0
        %2704 = vmatprep.mubr.f32.mxu0 0.0
        %v2705 = vand.u32 %v1001, 4294901760
        %2706 = vmatmul.mubr.f32.gmra.mrb[0].mxu0 %v2705
        %v2707 = vpop.f32.mrb[0].mxu0
        %v2708 = vadd.f32 %v2449, %v2707
        %v2709 = vpop.f32.mrb[0].mxu0
        %2710 = vmatprep.mubr.f32.mxu0 0.0
        %v2711 = vand.u32 %v1004, 4294901760
        %2712 = vmatmul.mubr.f32.gmra.mrb[0].mxu0 %v2711
        %v2713 = vpop.f32.mrb[0].mxu0
        %v2714 = vadd.f32 %v2455, %v2713
        %v2715 = vpop.f32.mrb[0].mxu0
        %2716 = vmatprep.mubr.f32.mxu0 0.0
        %v2717 = vand.u32 %v1007, 4294901760
        %2718 = vmatmul.mubr.f32.gmra.mrb[0].mxu0 %v2717
        %v2719 = vpop.f32.mrb[0].mxu0
        %v2720 = vadd.f32 %v2461, %v2719
        %v2721 = vpop.f32.mrb[0].mxu0
        %2722 = vmatprep.mubr.f32.mxu0 0.0
        %v2723 = vand.u32 %v1010, 4294901760
        %2724 = vmatmul.mubr.f32.gmra.mrb[0].mxu0 %v2723
        %v2725 = vpop.f32.mrb[0].mxu0
        %v2726 = vadd.f32 %v2467, %v2725
        %v2727 = vpop.f32.mrb[0].mxu0
        %2728 = vmatprep.mubr.f32.mxu0 0.0
        %v2729 = vand.u32 %v1013, 4294901760
        %2730 = vmatmul.mubr.f32.gmra.mrb[0].mxu0 %v2729
        %v2731 = vpop.f32.mrb[0].mxu0
        %v2732 = vadd.f32 %v2473, %v2731
        %v2733 = vpop.f32.mrb[0].mxu0
        %2734 = vmatprep.mubr.f32.mxu0 0.0
        %v2735 = vand.u32 %v1016, 4294901760
        %2736 = vmatmul.mubr.f32.gmra.mrb[0].mxu0 %v2735
        %v2737 = vpop.f32.mrb[0].mxu0
        %v2738 = vadd.f32 %v2479, %v2737
        %v2739 = vpop.f32.mrb[0].mxu0
        %2740 = vmatprep.mubr.f32.mxu0 0.0
        %v2741 = vand.u32 %v1019, 4294901760
        %2742 = vmatmul.mubr.f32.gmra.mrb[0].mxu0 %v2741
        %v2743 = vpop.f32.mrb[0].mxu0
        %v2744 = vadd.f32 %v2485, %v2743
        %v2745 = vpop.f32.mrb[0].mxu0
        %2746 = vmatprep.mubr.f32.mxu0 0.0
        %v2747 = vand.u32 %v1022, 4294901760
        %2748 = vmatmul.mubr.f32.gmra.mrb[0].mxu0 %v2747
        %v2749 = vpop.f32.mrb[0].mxu0
        %v2750 = vadd.f32 %v2491, %v2749
        %v2751 = vpop.f32.mrb[0].mxu0
        %2752 = vmatprep.mubr.f32.mxu0 0.0
        %v2753 = vand.u32 %v1025, 4294901760
        %2754 = vmatmul.mubr.f32.gmra.mrb[0].mxu0 %v2753
        %v2755 = vpop.f32.mrb[0].mxu0
        %v2756 = vadd.f32 %v2497, %v2755
        %v2757 = vpop.f32.mrb[0].mxu0
        %2758 = vmatprep.mubr.f32.mxu0 0.0
        %v2759 = vand.u32 %v1028, 4294901760
        %2760 = vmatmul.mubr.f32.gmra.mrb[0].mxu0 %v2759
        %v2761 = vpop.f32.mrb[0].mxu0
        %v2762 = vadd.f32 %v2503, %v2761
        %v2763 = vpop.f32.mrb[0].mxu0
        %2764 = vmatprep.mubr.f32.mxu0 0.0
        %v2765 = vand.u32 %v1031, 4294901760
        %2766 = vmatmul.mubr.f32.gmra.mrb[0].mxu0 %v2765
        %v2767 = vpop.f32.mrb[0].mxu0
        %v2768 = vadd.f32 %v2509, %v2767
        %v2769 = vpop.f32.mrb[0].mxu0
        %2770 = vmatprep.mubr.f32.mxu0 0.0
        %v2771 = vand.u32 %v1034, 4294901760
        %2772 = vmatmul.mubr.f32.gmra.mrb[0].mxu0 %v2771
        %v2773 = vpop.f32.mrb[0].mxu0
        %v2774 = vadd.f32 %v2515, %v2773
        %v2775 = vpop.f32.mrb[0].mxu0
        %2776 = vmatprep.mubr.f32.mxu0 0.0
        %v2777 = vand.u32 %v1037, 4294901760
        %2778 = vmatmul.mubr.f32.gmra.mrb[0].mxu0 %v2777
        %v2779 = vpop.f32.mrb[0].mxu0
        %v2780 = vadd.f32 %v2521, %v2779
        %v2781 = vpop.f32.mrb[0].mxu0
        %2782 = vmatprep.mubr.f32.mxu0 0.0
        %v2783 = vand.u32 %v1040, 4294901760
        %2784 = vmatmul.mubr.f32.gmra.mrb[0].mxu0 %v2783
        %v2785 = vpop.f32.mrb[0].mxu0
        %v2786 = vadd.f32 %v2527, %v2785
        %v2787 = vpop.f32.mrb[0].mxu0
        %2788 = vmatprep.mubr.f32.mxu0 0.0
        %v2789 = vand.u32 %v1043, 4294901760
        %2790 = vmatmul.mubr.f32.gmra.mrb[0].mxu0 %v2789
        %v2791 = vpop.f32.mrb[0].mxu0
        %v2792 = vadd.f32 %v2533, %v2791
        %v2793 = vpop.f32.mrb[0].mxu0
        %2794 = vmatprep.mubr.f32.mxu0 0.0
        %v2795 = vand.u32 %v1046, 4294901760
        %2796 = vmatmul.mubr.f32.gmra.mrb[0].mxu0 %v2795
        %v2797 = vpop.f32.mrb[0].mxu0
        %v2798 = vadd.f32 %v2539, %v2797
        %v2799 = vpop.f32.mrb[0].mxu0
        %2800 = vmatprep.mubr.f32.mxu0 0.0
        %v2801 = vand.u32 %v1049, 4294901760
        %2802 = vmatmul.mubr.f32.gmra.mrb[0].mxu0 %v2801
        %v2803 = vpop.f32.mrb[0].mxu0
        %v2804 = vadd.f32 %v2545, %v2803
        %v2805 = vpop.f32.mrb[0].mxu0
        %2806 = vmatprep.mubr.f32.mxu0 0.0
        %v2807 = vand.u32 %v1052, 4294901760
        %2808 = vmatmul.mubr.f32.gmra.mrb[0].mxu0 %v2807
        %v2809 = vpop.f32.mrb[0].mxu0
        %v2810 = vadd.f32 %v2551, %v2809
        %v2811 = vpop.f32.mrb[0].mxu0
        %2812 = vmatprep.mubr.f32.mxu0 0.0
        %v2813 = vand.u32 %v1055, 4294901760
        %2814 = vmatmul.mubr.f32.gmra.mrb[0].mxu0 %v2813
        %v2815 = vpop.f32.mrb[0].mxu0
        %v2816 = vadd.f32 %v2557, %v2815
        %v2817 = vpop.f32.mrb[0].mxu0
        %2818 = vmatprep.mubr.f32.mxu0 0.0
        %v2819 = vand.u32 %v1058, 4294901760
        %2820 = vmatmul.mubr.f32.gmra.mrb[0].mxu0 %v2819
        %v2821 = vpop.f32.mrb[0].mxu0
        %v2822 = vadd.f32 %v2563, %v2821
        %v2823 = vpop.f32.mrb[0].mxu0
        %2824 = vmatprep.mubr.f32.mxu0 0.0
        %v2825 = vand.u32 %v1061, 4294901760
        %2826 = vmatmul.mubr.f32.gmra.mrb[0].mxu0 %v2825
        %v2827 = vpop.f32.mrb[0].mxu0
        %v2828 = vadd.f32 %v2569, %v2827
        %v2829 = vpop.f32.mrb[0].mxu0
        %2830 = vmatprep.mubr.f32.mxu0 0.0
        %v2831 = vand.u32 %v1064, 4294901760
        %2832 = vmatmul.mubr.f32.gmra.mrb[0].mxu0 %v2831
        %v2833 = vpop.f32.mrb[0].mxu0
        %v2834 = vadd.f32 %v2575, %v2833
        %v2835 = vpop.f32.mrb[0].mxu0
        %2836 = vmatprep.mubr.f32.mxu0 0.0
        %v2837 = vand.u32 %v1067, 4294901760
        %2838 = vmatmul.mubr.f32.gmra.mrb[0].mxu0 %v2837
        %v2839 = vpop.f32.mrb[0].mxu0
        %v2840 = vadd.f32 %v2581, %v2839
        %v2841 = vpop.f32.mrb[0].mxu0
        %2842 = vmatprep.mubr.f32.mxu0 0.0
        %v2843 = vand.u32 %v1070, 4294901760
        %2844 = vmatmul.mubr.f32.gmra.mrb[0].mxu0 %v2843
        %v2845 = vpop.f32.mrb[0].mxu0
        %v2846 = vadd.f32 %v2587, %v2845
        %v2847 = vpop.f32.mrb[0].mxu0
        %2848 = vmatprep.mubr.f32.mxu0 0.0
        %v2849 = vand.u32 %v1073, 4294901760
        %2850 = vmatmul.mubr.f32.gmra.mrb[0].mxu0 %v2849
        %v2851 = vpop.f32.mrb[0].mxu0
        %v2852 = vadd.f32 %v2593, %v2851
        %v2853 = vpop.f32.mrb[0].mxu0
        %2854 = vmatprep.mubr.f32.mxu0 0.0
        %v2855 = vand.u32 %v1076, 4294901760
        %2856 = vmatmul.mubr.f32.gmra.mrb[0].mxu0 %v2855
        %v2857 = vpop.f32.mrb[0].mxu0
        %v2858 = vadd.f32 %v2599, %v2857
        %v2859 = vpop.f32.mrb[0].mxu0
        %2860 = vmatprep.mubr.f32.mxu0 0.0
        %v2861 = vand.u32 %v1079, 4294901760
        %2862 = vmatmul.mubr.f32.gmra.mrb[0].mxu0 %v2861
        %v2863 = vpop.f32.mrb[0].mxu0
        %v2864 = vadd.f32 %v2605, %v2863
        %v2865 = vpop.f32.mrb[0].mxu0
        %2866 = vmatprep.mubr.f32.mxu0 0.0
        %v2867 = vand.u32 %v1082, 4294901760
        %2868 = vmatmul.mubr.f32.gmra.mrb[0].mxu0 %v2867
        %v2869 = vpop.f32.mrb[0].mxu0
        %v2870 = vadd.f32 %v2611, %v2869
        %v2871 = vpop.f32.mrb[0].mxu0
        %2872 = vmatprep.mubr.f32.mxu0 0.0
        %v2873 = vand.u32 %v1085, 4294901760
        %2874 = vmatmul.mubr.f32.gmra.mrb[0].mxu0 %v2873
        %v2875 = vpop.f32.mrb[0].mxu0
        %v2876 = vadd.f32 %v2617, %v2875
        %v2877 = vpop.f32.mrb[0].mxu0
        %2878 = vdwg.mxu0
        %2879 = vxpose.xlu0.b32.start [1/16] %v2690, 128
        %2880 = vxpose.xlu0.b32.cont [2/16] %v2696, 128
        %2881 = vxpose.xlu0.b32.cont [3/16] %v2702, 128
        %2882 = vxpose.xlu0.b32.cont [4/16] %v2708, 128
        %2883 = vxpose.xlu0.b32.cont [5/16] %v2714, 128
        %2884 = vxpose.xlu0.b32.cont [6/16] %v2720, 128
        %2885 = vxpose.xlu0.b32.cont [7/16] %v2726, 128
        %2886 = vxpose.xlu0.b32.cont [8/16] %v2732, 128
        %2887 = vxpose.xlu0.b32.cont [9/16] %v2738, 128
        %2888 = vxpose.xlu0.b32.cont [10/16] %v2744, 128
        %2889 = vxpose.xlu0.b32.cont [11/16] %v2750, 128
        %2890 = vxpose.xlu0.b32.cont [12/16] %v2756, 128
        %2891 = vxpose.xlu0.b32.cont [13/16] %v2762, 128
        %2892 = vxpose.xlu0.b32.cont [14/16] %v2768, 128
        %2893 = vxpose.xlu0.b32.cont [15/16] %v2774, 128
        %2894 = vxpose.xlu0.b32.end [16/16] %v2780, 128
        %v2895 = vpop.trf.xlu0
        %v2896 = vpop.trf.xlu0
        %v2897 = vpop.trf.xlu0
        %v2898 = vpop.trf.xlu0
        %v2899 = vpop.trf.xlu0
        %v2900 = vpop.trf.xlu0
        %v2901 = vpop.trf.xlu0
        %v2902 = vpop.trf.xlu0
        %v2903 = vpop.trf.xlu0
        %v2904 = vpop.trf.xlu0
        %v2905 = vpop.trf.xlu0
        %v2906 = vpop.trf.xlu0
        %v2907 = vpop.trf.xlu0
        %v2908 = vpop.trf.xlu0
        %v2909 = vpop.trf.xlu0
        %v2910 = vpop.trf.xlu0
        %2911 = vxpose.xlu0.b32.start [1/16] %v2786, 128
        %2912 = vxpose.xlu0.b32.cont [2/16] %v2792, 128
        %2913 = vxpose.xlu0.b32.cont [3/16] %v2798, 128
        %2914 = vxpose.xlu0.b32.cont [4/16] %v2804, 128
        %2915 = vxpose.xlu0.b32.cont [5/16] %v2810, 128
        %2916 = vxpose.xlu0.b32.cont [6/16] %v2816, 128
        %2917 = vxpose.xlu0.b32.cont [7/16] %v2822, 128
        %2918 = vxpose.xlu0.b32.cont [8/16] %v2828, 128
        %2919 = vxpose.xlu0.b32.cont [9/16] %v2834, 128
        %2920 = vxpose.xlu0.b32.cont [10/16] %v2840, 128
        %2921 = vxpose.xlu0.b32.cont [11/16] %v2846, 128
        %2922 = vxpose.xlu0.b32.cont [12/16] %v2852, 128
        %2923 = vxpose.xlu0.b32.cont [13/16] %v2858, 128
        %2924 = vxpose.xlu0.b32.cont [14/16] %v2864, 128
        %2925 = vxpose.xlu0.b32.cont [15/16] %v2870, 128
        %2926 = vxpose.xlu0.b32.end [16/16] %v2876, 128
        %v2927 = vpop.trf.xlu0
        %v2928 = vpop.trf.xlu0
        %v2929 = vpop.trf.xlu0
        %v2930 = vpop.trf.xlu0
        %v2931 = vpop.trf.xlu0
        %v2932 = vpop.trf.xlu0
        %v2933 = vpop.trf.xlu0
        %v2934 = vpop.trf.xlu0
        %v2935 = vpop.trf.xlu0
        %v2936 = vpop.trf.xlu0
        %v2937 = vpop.trf.xlu0
        %v2938 = vpop.trf.xlu0
        %v2939 = vpop.trf.xlu0
        %v2940 = vpop.trf.xlu0
        %v2941 = vpop.trf.xlu0
        %v2942 = vpop.trf.xlu0
        %2944 = vrot.lane.b32.xlu0 %v2895, 112
        %v2945 = vpop.permute.xlu0 %2944
        %2947 = vrot.lane.b32.xlu0 %v2895, 96
        %v2948 = vpop.permute.xlu0 %2947
        %2950 = vrot.lane.b32.xlu0 %v2895, 80
        %v2951 = vpop.permute.xlu0 %2950
        %2953 = vrot.lane.b32.xlu0 %v2895, 64
        %v2954 = vpop.permute.xlu0 %2953
        %2956 = vrot.lane.b32.xlu0 %v2895, 48
        %v2957 = vpop.permute.xlu0 %2956
        %2959 = vrot.lane.b32.xlu0 %v2895, 32
        %v2960 = vpop.permute.xlu0 %2959
        %2962 = vrot.lane.b32.xlu0 %v2895, 16
        %v2963 = vpop.permute.xlu0 %2962
        %2966 = vrot.lane.b32.xlu0 %v2927, 112
        %v2967 = vpop.permute.xlu0 %2966
        %2969 = vrot.lane.b32.xlu0 %v2927, 96
        %v2970 = vpop.permute.xlu0 %2969
        %2972 = vrot.lane.b32.xlu0 %v2927, 80
        %v2973 = vpop.permute.xlu0 %2972
        %2975 = vrot.lane.b32.xlu0 %v2927, 64
        %v2976 = vpop.permute.xlu0 %2975
        %2978 = vrot.lane.b32.xlu0 %v2927, 48
        %v2979 = vpop.permute.xlu0 %2978
        %2981 = vrot.lane.b32.xlu0 %v2927, 32
        %v2982 = vpop.permute.xlu0 %2981
        %2984 = vrot.lane.b32.xlu0 %v2927, 16
        %v2985 = vpop.permute.xlu0 %2984
        %v2987 = vcombine.low %v2895, %v2948
        %v2989 = vunpack.c.l.s4 1983009808
        %v2990 = vunpack.c.0.s8 %v2989
        %v2991 = vlaneseq
        %v2992 = vshrl.u32 %v2991, 7
        %v2993 = vsub.s32 %v2990, %v2992
        %v2994 = vrot.slane %v2987, %v2993
        %v2995 = vcombine.low %v2945, %v2951
        %v2997 = vunpack.c.l.s4 1983009808
        %v2998 = vunpack.c.0.s8 %v2997
        %v2999 = vlaneseq
        %v3000 = vshrl.u32 %v2999, 7
        %v3001 = vsub.s32 %v2998, %v3000
        %v3002 = vrot.slane %v2995, %v3001
        %v3003 = vcombine.low %v2954, %v2960
        %v3005 = vunpack.c.l.s4 1983009808
        %v3006 = vunpack.c.0.s8 %v3005
        %v3007 = vlaneseq
        %v3008 = vshrl.u32 %v3007, 7
        %v3009 = vsub.s32 %v3006, %v3008
        %v3010 = vrot.slane %v3003, %v3009
        %v3011 = vcombine.low %v2957, %v2963
        %v3013 = vunpack.c.l.s4 1983009808
        %v3014 = vunpack.c.0.s8 %v3013
        %v3015 = vlaneseq
        %v3016 = vshrl.u32 %v3015, 7
        %v3017 = vsub.s32 %v3014, %v3016
        %v3018 = vrot.slane %v3011, %v3017
        %v3019 = vcombine.low %v2994, %v3002
        %v3020 = vcombine.high %v2994, %v3002
        %v3022 = vunpack.c.l.s4 1934713408
        %v3023 = vunpack.c.0.s8 %v3022
        %v3024 = vlaneseq
        %v3025 = vshrl.u32 %v3024, 7
        %v3026 = vsub.s32 %v3023, %v3025
        %v3027 = vrot.slane %v3019, %v3026
        %v3029 = vunpack.c.l.s4 1934713408
        %v3030 = vunpack.c.0.s8 %v3029
        %v3031 = vlaneseq
        %v3032 = vshrl.u32 %v3031, 7
        %v3033 = vsub.s32 %v3030, %v3032
        %v3034 = vrot.slane %v3020, %v3033
        %v3035 = vcombine.low %v3010, %v3018
        %v3036 = vcombine.high %v3010, %v3018
        %v3038 = vunpack.c.l.s4 1934713408
        %v3039 = vunpack.c.0.s8 %v3038
        %v3040 = vlaneseq
        %v3041 = vshrl.u32 %v3040, 7
        %v3042 = vsub.s32 %v3039, %v3041
        %v3043 = vrot.slane %v3035, %v3042
        %v3045 = vunpack.c.l.s4 1934713408
        %v3046 = vunpack.c.0.s8 %v3045
        %v3047 = vlaneseq
        %v3048 = vshrl.u32 %v3047, 7
        %v3049 = vsub.s32 %v3046, %v3048
        %v3050 = vrot.slane %v3036, %v3049
        %v3051 = vcombine.low %v3027, %v3043
        %v3052 = vcombine.high %v3027, %v3043
        %v3053 = vcombine.low %v3034, %v3050
        %v3054 = vcombine.high %v3034, %v3050
        %v3055 = vcombine.low %v2927, %v2970
        %v3057 = vunpack.c.l.s4 1983009808
        %v3058 = vunpack.c.0.s8 %v3057
        %v3059 = vlaneseq
        %v3060 = vshrl.u32 %v3059, 7
        %v3061 = vsub.s32 %v3058, %v3060
        %v3062 = vrot.slane %v3055, %v3061
        %v3063 = vcombine.low %v2967, %v2973
        %v3065 = vunpack.c.l.s4 1983009808
        %v3066 = vunpack.c.0.s8 %v3065
        %v3067 = vlaneseq
        %v3068 = vshrl.u32 %v3067, 7
        %v3069 = vsub.s32 %v3066, %v3068
        %v3070 = vrot.slane %v3063, %v3069
        %v3071 = vcombine.low %v2976, %v2982
        %v3073 = vunpack.c.l.s4 1983009808
        %v3074 = vunpack.c.0.s8 %v3073
        %v3075 = vlaneseq
        %v3076 = vshrl.u32 %v3075, 7
        %v3077 = vsub.s32 %v3074, %v3076
        %v3078 = vrot.slane %v3071, %v3077
        %v3079 = vcombine.low %v2979, %v2985
        %v3081 = vunpack.c.l.s4 1983009808
        %v3082 = vunpack.c.0.s8 %v3081
        %v3083 = vlaneseq
        %v3084 = vshrl.u32 %v3083, 7
        %v3085 = vsub.s32 %v3082, %v3084
        %v3086 = vrot.slane %v3079, %v3085
        %v3087 = vcombine.low %v3062, %v3070
        %v3088 = vcombine.high %v3062, %v3070
        %v3090 = vunpack.c.l.s4 1934713408
        %v3091 = vunpack.c.0.s8 %v3090
        %v3092 = vlaneseq
        %v3093 = vshrl.u32 %v3092, 7
        %v3094 = vsub.s32 %v3091, %v3093
        %v3095 = vrot.slane %v3087, %v3094
        %v3097 = vunpack.c.l.s4 1934713408
        %v3098 = vunpack.c.0.s8 %v3097
        %v3099 = vlaneseq
        %v3100 = vshrl.u32 %v3099, 7
        %v3101 = vsub.s32 %v3098, %v3100
        %v3102 = vrot.slane %v3088, %v3101
        %v3103 = vcombine.low %v3078, %v3086
        %v3104 = vcombine.high %v3078, %v3086
        %v3106 = vunpack.c.l.s4 1934713408
        %v3107 = vunpack.c.0.s8 %v3106
        %v3108 = vlaneseq
        %v3109 = vshrl.u32 %v3108, 7
        %v3110 = vsub.s32 %v3107, %v3109
        %v3111 = vrot.slane %v3103, %v3110
        %v3113 = vunpack.c.l.s4 1934713408
        %v3114 = vunpack.c.0.s8 %v3113
        %v3115 = vlaneseq
        %v3116 = vshrl.u32 %v3115, 7
        %v3117 = vsub.s32 %v3114, %v3116
        %v3118 = vrot.slane %v3104, %v3117
        %v3119 = vcombine.low %v3095, %v3111
        %v3120 = vcombine.high %v3095, %v3111
        %v3121 = vcombine.low %v3102, %v3118
        %v3122 = vcombine.high %v3102, %v3118
        %3123 = vst.msk [vmem:[%s234] sm:$0xff] %vm271, %v3051
        %3124 = vst.msk [vmem:[%s234 + $0x8] sm:$0xff] %vm271, %v3119
        %3125 = vst.msk [vmem:[%s234 + $0x10] sm:$0xff] %vm271, %v3052
        %3126 = vst.msk [vmem:[%s234 + $0x18] sm:$0xff] %vm271, %v3120
        %3127 = vst.msk [vmem:[%s234 + $0x20] sm:$0xff] %vm271, %v3053
        %3128 = vst.msk [vmem:[%s234 + $0x28] sm:$0xff] %vm271, %v3121
        %3129 = vst.msk [vmem:[%s234 + $0x30] sm:$0xff] %vm271, %v3054
        %3130 = vst.msk [vmem:[%s234 + $0x38] sm:$0xff] %vm271, %v3122
        %s3131 = sand.u32 %s134, 1
        %s3132 = scalar_lea.sflag [#allocation4], %s3131
        %s3133 = sand.u32 %s134, 1
        %s3134 = smul.addr %s3133, 64
        %s3135 = scalar_lea.vmem [#allocation5], %s3134
        // Predicated region
        $region41: #{tpu_custom_call.1} parent=35 // pred_check
          %p3136 = pneg %p144
        $region42: #{tpu_custom_call.1} parent=35 // pred_check_branch
          %3138 = sbr.rel (%p3136) target = $region44
        $region43: #{tpu_custom_call.1} parent=35 // pred_region
          %s3139 = smul.u32 2, %s26
          %s3141 = ssub.s32 1024, 1024
          %3142 = vsyncadd %s3132, %s3141
          %s3143 = smul.addr %s25, 8
          %s3144 = sadd.s32 %s3139, %s3143
          %s3145 = smul.addr %s3144, 128
          %s3146 = scalar_lea.hbm %s4, %s3145
          %s3147 = sshll.u32 %s3135, 4
          %s3148 = int_to_ptr.vmem [resolvable:$true] %s3147
          %3153 = dma.vmem_to_hbm [thread:$0]  %s3148, 1024, %s3146, %s3132, 128, 128, 8
        $region44: #{tpu_custom_call.1} parent=35 // pred_fallthru
          _
      $region36: #{tpu_custom_call.1} parent=5 // pred_fallthru
        _
      %p3154 = scmp.le.s32.totalorder 2, %s16
      // Predicated region
      $region45: #{tpu_custom_call.1} parent=5 // pred_check
        %p3155 = pneg %p3154
      $region46: #{tpu_custom_call.1} parent=5 // pred_check_branch
        %3157 = sbr.rel (%p3155) target = $region48
      $region47: #{tpu_custom_call.1} parent=5 // pred_region
        %s3158 = ssub.s32 %s16, 2
        // Predicated region
        $region49: #{tpu_custom_call.1} parent=47 // pred_check
          %p3159 = pneg %p150
        $region50: #{tpu_custom_call.1} parent=47 // pred_check_branch
          %3161 = sbr.rel (%p3159) target = $region52
        $region51: #{tpu_custom_call.1} parent=47 // pred_region
          %s3162 = sand.u32 %s135, 1
          %s3163 = scalar_lea.sflag [#allocation4], %s3162
          %s3164 = sand.u32 %s135, 1
          %s3165 = smul.addr %s3164, 64
          %s3166 = scalar_lea.vmem [#allocation5], %s3165
          %3167 = dma.done %s3163, 1024
        $region52: #{tpu_custom_call.1} parent=47 // pred_fallthru
          _
      $region48: #{tpu_custom_call.1} parent=5 // pred_fallthru
        _
    $region6: #{tpu_custom_call.1} parent=1 // loop_footer
      %s20 = sadd.s32 1, %s16
    $region7: #{tpu_custom_call.1} parent=1 // loop_footer_branch
      %15 = sbr.rel target = $region3
    $region8: #{tpu_custom_call.1} parent=1 // loop_exit
      _
    %3168 = vsyncpa [#allocation3], 1
    %s3169 = scalar_lea.sflag [#allocation3], 1
    %3170 = vsyncpa %s3169, 1
    %3171 = vsyncpa [#allocation4], 1
    %s3172 = scalar_lea.sflag [#allocation4], 1
    %3173 = vsyncpa %s3172, 1

</llo_original>
